<compile_context>
chip_gen: v7x
topology: tpu7x:2x2x1
jax: 0.10.0
libtpu: 0.0.40
codegen_flags: <defaults>
</compile_context>

<pallas_src>
import functools
import math

import jax
import jax.numpy as jnp
from jax.experimental import pallas as pl
from jax.experimental.pallas import tpu as pltpu


# ----------------------------------------------------------------------------
# Shared math helpers
# ----------------------------------------------------------------------------
def _layernorm(x, gamma, beta, eps=1e-5):
    mu = jnp.mean(x, axis=-1, keepdims=True)
    var = jnp.mean((x - mu) ** 2, axis=-1, keepdims=True)
    return (x - mu) * jax.lax.rsqrt(var + eps) * gamma + beta


# ----------------------------------------------------------------------------
# Fused transformer kernel: one (batch-block, layer) grid step = one full layer
# (PreNorm->Attention->residual, PreNorm->FF->residual) for B_block elements.
# ----------------------------------------------------------------------------
def transformer_layer_kernel(*refs, b_block, seq, heads, dim_head, scale,
                             add_map, compute_dtype):
    if add_map:
        (x_ref, map_ref, ag_ref, ab_ref, wqkv_ref, wo_ref, bo_ref,
         fg_ref, fb_ref, w1_ref, b1_ref, w2_ref, b2_ref,
         o_ref, state_ref) = refs
    else:
        (x_ref, ag_ref, ab_ref, wqkv_ref, wo_ref, bo_ref,
         fg_ref, fb_ref, w1_ref, b1_ref, w2_ref, b2_ref,
         o_ref, state_ref) = refs
        map_ref = None

    layer = pl.program_id(1)
    n_layers = pl.num_programs(1)
    inner = heads * dim_head
    dim = x_ref.shape[-1]
    rows = b_block * seq

    # Layer 0: load this batch block's residual stream into the VMEM state.
    @pl.when(layer == 0)
    def _():
        state_ref[...] = x_ref[...].reshape(rows, dim).astype(jnp.float32)

    x = state_ref[...]                                          # (rows, D) f32

    # ---------------- attention block: PreNorm -> Attention -> residual -----
    xn = _layernorm(x, ag_ref[0], ab_ref[0])
    qkv = jnp.dot(xn.astype(compute_dtype), wqkv_ref[0],
                  preferred_element_type=jnp.float32)           # (rows, 3*inner) f32
    # Fold the softmax scale into q before the bf16 cast (cheaper than N*N mul).
    q = (qkv[:, 0 * inner:1 * inner] * scale).astype(compute_dtype)
    k = qkv[:, 1 * inner:2 * inner].astype(compute_dtype)
    v = qkv[:, 2 * inner:3 * inner].astype(compute_dtype)

    proj_blocks = []
    for b in range(b_block):                                    # static unroll
        rsl = slice(b * seq, (b + 1) * seq)                     # sublane slice
        qb, kb, vb = q[rsl], k[rsl], v[rsl]                     # (N, inner) bf16
        proj_b = jnp.zeros((seq, dim), jnp.float32)
        for h in range(heads):                                  # static unroll
            hsl = slice(h * dim_head, (h + 1) * dim_head)
            dots = jnp.einsum('nd,md->nm', qb[:, hsl], kb[:, hsl],
                              preferred_element_type=jnp.float32)   # (N, N) f32
            dots = dots - jnp.max(dots, axis=-1, keepdims=True)
            p = jnp.exp(dots)
            attn = p * pl.reciprocal(jnp.sum(p, axis=-1, keepdims=True),
                                     approx=True)
            if add_map:
                attn = map_ref[b, h] * attn                     # post-softmax reweight
            head_out = jnp.dot(attn.astype(compute_dtype), vb[:, hsl],
                               preferred_element_type=jnp.float32)  # (N, dh)
            # Accumulate output projection per head -> no lane concat of heads.
            proj_b = proj_b + jnp.dot(head_out.astype(compute_dtype),
                                      wo_ref[0, hsl, :],
                                      preferred_element_type=jnp.float32)
        proj_blocks.append(proj_b)
    proj = proj_blocks[0] if b_block == 1 else jnp.concatenate(proj_blocks, axis=0)
    x = x + proj + bo_ref[0]                                    # residual add + bias

    # ---------------- feed-forward block: PreNorm -> MLP -> residual --------
    xn = _layernorm(x, fg_ref[0], fb_ref[0])
    h1 = jnp.dot(xn.astype(compute_dtype), w1_ref[0],
                 preferred_element_type=jnp.float32) + b1_ref[0]
    h1 = jnp.maximum(h1, 0.0)                                   # ReLU
    y = jnp.dot(h1.astype(compute_dtype), w2_ref[0],
                preferred_element_type=jnp.float32) + b2_ref[0]
    x = x + y                                                   # residual add

    state_ref[...] = x                                          # carry to next layer

    # Output store only at the last layer (dead stores for earlier layers).
    @pl.when(layer == n_layers - 1)
    def _():
        o_ref[...] = x.reshape(b_block, seq, dim).astype(o_ref.dtype)


# ----------------------------------------------------------------------------
# Wrapper: single pallas_call for the whole stack
# ----------------------------------------------------------------------------
def _pick_b_block(batch, seq):
    """Fold batch so matmul rows approach 256; keep >=2 parallel steps for v7x
    (2 TensorCores) once each step already fills >=128 MXU rows."""
    bb = min(batch, max(1, 256 // max(seq, 1)))
    while bb > 1 and batch % bb:
        bb -= 1
    if batch // bb < 2 and bb > 1 and (bb // 2) * seq >= 128:
        bb //= 2
        while bb > 1 and batch % bb:
            bb -= 1
    return bb


def transformer_forward(x, map_attn, add_map, params, *, heads, dim_head,
                        b_block=None):
    B, N, D = x.shape
    depth = params["w_qkv"].shape[0]
    scale = float(dim_head) ** (-0.5)
    if b_block is None:
        b_block = _pick_b_block(B, N)
    assert B % b_block == 0
    num_bb = B // b_block

    kernel = functools.partial(
        transformer_layer_kernel, b_block=b_block, seq=N, heads=heads,
        dim_head=dim_head, scale=scale, add_map=add_map,
        compute_dtype=params["w_qkv"].dtype)

    def wspec(trailing):
        nd = len(trailing)
        # Only the active layer's weights are resident / double-buffered.
        return pl.BlockSpec((1,) + trailing, lambda b, l: (l,) + (0,) * nd)

    in_specs = [pl.BlockSpec((b_block, N, D), lambda b, l: (b, 0, 0))]   # x
    args = [x]
    if add_map:
        in_specs.append(pl.BlockSpec((b_block, heads, N, N),
                                     lambda b, l: (b, 0, 0, 0)))
        args.append(map_attn)

    weight_keys = ("a_ln_g", "a_ln_b", "w_qkv", "w_out", "b_out",
                   "f_ln_g", "f_ln_b", "w1", "b1", "w2", "b2")
    for kname in weight_keys:
        arr = params[kname]
        in_specs.append(wspec(arr.shape[1:]))
        args.append(arr)

    return pl.pallas_call(
        kernel,
        out_shape=jax.ShapeDtypeStruct((B, N, D), x.dtype),
        grid=(num_bb, depth),
        in_specs=in_specs,
        out_specs=pl.BlockSpec((b_block, N, D), lambda b, l: (b, 0, 0)),
        scratch_shapes=[pltpu.VMEM((b_block * N, D), jnp.float32)],  # residual stream
        compiler_params=pltpu.CompilerParams(
            dimension_semantics=("parallel", "arbitrary")),   # batch ||, layers seq
    )(*args)


# ----------------------------------------------------------------------------
# Parameter init (PyTorch-like shapes; weights stacked over depth, bf16 matmuls)
# ----------------------------------------------------------------------------
def init_params(key, depth, dim, heads, dim_head, mlp_dim,
                compute_dtype=jnp.bfloat16):
    inner = heads * dim_head

    def unif(k, shape, fan_in):
        bound = 1.0 / math.sqrt(fan_in)
        return jax.random.uniform(k, shape, jnp.float32, -bound, bound)

    ks = jax.random.split(key, 7)
    return {
        "a_ln_g": jnp.ones((depth, 1, dim), jnp.float32),
        "a_ln_b": jnp.zeros((depth, 1, dim), jnp.float32),
        "w_qkv": unif(ks[0], (depth, dim, 3 * inner), dim).astype(compute_dtype),
        "w_out": unif(ks[1], (depth, inner, dim), inner).astype(compute_dtype),
        "b_out": unif(ks[2], (depth, 1, dim), inner),
        "f_ln_g": jnp.ones((depth, 1, dim), jnp.float32),
        "f_ln_b": jnp.zeros((depth, 1, dim), jnp.float32),
        "w1": unif(ks[3], (depth, dim, mlp_dim), dim).astype(compute_dtype),
        "b1": unif(ks[4], (depth, 1, mlp_dim), dim),
        "w2": unif(ks[5], (depth, mlp_dim, dim), mlp_dim).astype(compute_dtype),
        "b2": unif(ks[6], (depth, 1, dim), mlp_dim),
    }


# ----------------------------------------------------------------------------
# Pure-JAX reference (PyTorch-faithful op order; bf16 matmul inputs, f32 acc)
# ----------------------------------------------------------------------------
def reference_forward(x, map_attn, add_map, params, *, heads, dim_head):
    scale = float(dim_head) ** (-0.5)
    depth = params["w_qkv"].shape[0]
    inner = heads * dim_head
    cd = params["w_qkv"].dtype
    B, N, D = x.shape
    for l in range(depth):
        xn = _layernorm(x, params["a_ln_g"][l], params["a_ln_b"][l])
        qkv = jnp.dot(xn.astype(cd), params["w_qkv"][l],
                      preferred_element_type=jnp.float32)
        q, k, v = jnp.split(qkv, 3, axis=-1)
        rs = lambda t: t.reshape(B, N, heads, dim_head).transpose(0, 2, 1, 3)
        q, k, v = rs(q), rs(k), rs(v)
        dots = jnp.einsum('bhnd,bhmd->bhnm', q.astype(cd), k.astype(cd),
                          preferred_element_type=jnp.float32) * scale
        attn = jax.nn.softmax(dots, axis=-1)
        if add_map:
            attn = map_attn * attn
        out = jnp.einsum('bhnm,bhmd->bhnd', attn.astype(cd), v.astype(cd),
                         preferred_element_type=jnp.float32)
        out = out.transpose(0, 2, 1, 3).reshape(B, N, inner)
        x = jnp.dot(out.astype(cd), params["w_out"][l],
                    preferred_element_type=jnp.float32) + params["b_out"][l] + x

        xn = _layernorm(x, params["f_ln_g"][l], params["f_ln_b"][l])
        h = jnp.maximum(jnp.dot(xn.astype(cd), params["w1"][l],
                                preferred_element_type=jnp.float32)
                        + params["b1"][l], 0.0)
        x = jnp.dot(h.astype(cd), params["w2"][l],
                    preferred_element_type=jnp.float32) + params["b2"][l] + x
    return x


# ----------------------------------------------------------------------------
if __name__ == "__main__":
    B, N, D = 2, 16, 128
    heads, dim_head = 4, 32          # inner_dim = 128 (lane-aligned)
    mlp_dim = 256
    depth = 2

    key = jax.random.PRNGKey(0)
    kx, kmap, kp = jax.random.split(key, 3)
    x = jax.random.normal(kx, (B, N, D), jnp.float32)
    map_attn = jax.random.uniform(kmap, (B, heads, N, N), jnp.float32)
    params = init_params(kp, depth, D, heads, dim_head, mlp_dim)

    # add_Map = True path (map_attn is DMA'd and multiplied post-softmax)
    out = transformer_forward(x, map_attn, True, params,
                              heads=heads, dim_head=dim_head)
    out = jax.block_until_ready(out)
    ref = reference_forward(x, map_attn, True, params,
                            heads=heads, dim_head=dim_head)
    assert out.shape == (B, N, D)
    assert jnp.allclose(out, ref, atol=1e-2, rtol=1e-2), \
        float(jnp.max(jnp.abs(out - ref)))

    # add_Map = False path (map_attn never passed to / fetched by the kernel)
    out2 = jax.block_until_ready(
        transformer_forward(x, None, False, params,
                            heads=heads, dim_head=dim_head))
    ref2 = reference_forward(x, None, False, params,
                             heads=heads, dim_head=dim_head)
    assert jnp.allclose(out2, ref2, atol=1e-2, rtol=1e-2), \
        float(jnp.max(jnp.abs(out2 - ref2)))

    print("KERNEL_OK")
</pallas_src>

<mosaic_0001>
module attributes {stable_mosaic.version = 11 : i64} {
  func.func @transformer_layer_kernel(%arg0: i32, %arg1: i32, %arg2: memref<2x16x128xf32, #tpu.memory_space<vmem>>, %arg3: memref<2x4x16x16xf32, #tpu.memory_space<vmem>>, %arg4: memref<1x1x128xf32, #tpu.memory_space<vmem>>, %arg5: memref<1x1x128xf32, #tpu.memory_space<vmem>>, %arg6: memref<1x128x384xbf16, #tpu.memory_space<vmem>>, %arg7: memref<1x128x128xbf16, #tpu.memory_space<vmem>>, %arg8: memref<1x1x128xf32, #tpu.memory_space<vmem>>, %arg9: memref<1x1x128xf32, #tpu.memory_space<vmem>>, %arg10: memref<1x1x128xf32, #tpu.memory_space<vmem>>, %arg11: memref<1x128x256xbf16, #tpu.memory_space<vmem>>, %arg12: memref<1x1x256xf32, #tpu.memory_space<vmem>>, %arg13: memref<1x256x128xbf16, #tpu.memory_space<vmem>>, %arg14: memref<1x1x128xf32, #tpu.memory_space<vmem>>, %arg15: memref<2x16x128xf32, #tpu.memory_space<vmem>>, %arg16: memref<32x128xf32, #tpu.memory_space<vmem>>) attributes {dimension_semantics = [#tpu.dimension_semantics<parallel>, #tpu.dimension_semantics<arbitrary>], iteration_bounds = array<i64: 1, 2>, scalar_prefetch = 0 : i64, scratch_operands = 1 : i64, tpu.core_type = #tpu.core_type<tc>, window_params = [{transform_indices = @transform_0, window_bounds = array<i64: 2, 16, 128>}, {transform_indices = @transform_1, window_bounds = array<i64: 2, 4, 16, 16>}, {transform_indices = @transform_2, window_bounds = array<i64: 1, 1, 128>}, {transform_indices = @transform_3, window_bounds = array<i64: 1, 1, 128>}, {transform_indices = @transform_4, window_bounds = array<i64: 1, 128, 384>}, {transform_indices = @transform_5, window_bounds = array<i64: 1, 128, 128>}, {transform_indices = @transform_6, window_bounds = array<i64: 1, 1, 128>}, {transform_indices = @transform_7, window_bounds = array<i64: 1, 1, 128>}, {transform_indices = @transform_8, window_bounds = array<i64: 1, 1, 128>}, {transform_indices = @transform_9, window_bounds = array<i64: 1, 128, 256>}, {transform_indices = @transform_10, window_bounds = array<i64: 1, 1, 256>}, {transform_indices = @transform_11, window_bounds = array<i64: 1, 256, 128>}, {transform_indices = @transform_12, window_bounds = array<i64: 1, 1, 128>}, {transform_indices = @transform_13, window_bounds = array<i64: 2, 16, 128>}]} {
    %c0_i32 = arith.constant 0 : i32
    %0 = arith.cmpi eq, %arg1, %c0_i32 : i32
    %1 = arith.extui %0 : i1 to i32
    %c0_i32_0 = arith.constant 0 : i32
    %2 = arith.cmpi ne, %1, %c0_i32_0 : i32
    scf.if %2 {
      %c0_141 = arith.constant 0 : index
      %c0_142 = arith.constant 0 : index
      %c0_143 = arith.constant 0 : index
      %297 = vector.load %arg2[%c0_141, %c0_142, %c0_143] : memref<2x16x128xf32, #tpu.memory_space<vmem>>, vector<2x16x128xf32>
      %298 = vector.shape_cast %297 : vector<2x16x128xf32> to vector<32x128xf32>
      %c0_144 = arith.constant 0 : index
      %c0_145 = arith.constant 0 : index
      %299 = vector.load %arg16[%c0_144, %c0_145] : memref<32x128xf32, #tpu.memory_space<vmem>>, vector<32x128xf32>
      tpu.vector_store %arg16[%c0_144, %c0_145], %298 {strides = array<i32>} : memref<32x128xf32, #tpu.memory_space<vmem>>, vector<32x128xf32>,
    } else {
    }
    %c0 = arith.constant 0 : index
    %c0_1 = arith.constant 0 : index
    %3 = vector.load %arg16[%c0, %c0_1] : memref<32x128xf32, #tpu.memory_space<vmem>>, vector<32x128xf32>
    %c0_2 = arith.constant 0 : index
    %c0_3 = arith.constant 0 : index
    %c0_4 = arith.constant 0 : index
    %4 = vector.load %arg4[%c0_2, %c0_3, %c0_4] : memref<1x1x128xf32, #tpu.memory_space<vmem>>, vector<1x1x128xf32>
    %5 = vector.shape_cast %4 : vector<1x1x128xf32> to vector<1x128xf32>
    %c0_5 = arith.constant 0 : index
    %c0_6 = arith.constant 0 : index
    %c0_7 = arith.constant 0 : index
    %6 = vector.load %arg5[%c0_5, %c0_6, %c0_7] : memref<1x1x128xf32, #tpu.memory_space<vmem>>, vector<1x1x128xf32>
    %7 = vector.shape_cast %6 : vector<1x1x128xf32> to vector<1x128xf32>
    %cst = arith.constant dense<0.000000e+00> : vector<32xf32>
    %8 = vector.multi_reduction <add>, %3, %cst [1] : vector<32x128xf32> to vector<32xf32>
    %9 = vector.shape_cast %8 : vector<32xf32> to vector<32x1xf32>
    %cst_8 = arith.constant 1.280000e+02 : f32
    %10 = vector.broadcast %cst_8 : f32 to vector<32x1xf32>
    %11 = arith.divf %9, %10 : vector<32x1xf32>
    %12 = vector.broadcast %11 : vector<32x1xf32> to vector<32x128xf32>
    %13 = arith.subf %3, %12 : vector<32x128xf32>
    %14 = arith.mulf %13, %13 : vector<32x128xf32>
    %cst_9 = arith.constant dense<0.000000e+00> : vector<32xf32>
    %15 = vector.multi_reduction <add>, %14, %cst_9 [1] : vector<32x128xf32> to vector<32xf32>
    %16 = vector.shape_cast %15 : vector<32xf32> to vector<32x1xf32>
    %cst_10 = arith.constant 1.280000e+02 : f32
    %17 = vector.broadcast %cst_10 : f32 to vector<32x1xf32>
    %18 = arith.divf %16, %17 : vector<32x1xf32>
    %19 = vector.broadcast %11 : vector<32x1xf32> to vector<32x128xf32>
    %20 = arith.subf %3, %19 : vector<32x128xf32>
    %cst_11 = arith.constant 9.99999974E-6 : f32
    %21 = vector.broadcast %cst_11 : f32 to vector<32x1xf32>
    %22 = arith.addf %18, %21 : vector<32x1xf32>
    %23 = math.rsqrt %22 : vector<32x1xf32>
    %24 = vector.broadcast %23 : vector<32x1xf32> to vector<32x128xf32>
    %25 = arith.mulf %20, %24 : vector<32x128xf32>
    %26 = vector.broadcast %5 : vector<1x128xf32> to vector<32x128xf32>
    %27 = arith.mulf %25, %26 : vector<32x128xf32>
    %28 = vector.broadcast %7 : vector<1x128xf32> to vector<32x128xf32>
    %29 = arith.addf %27, %28 : vector<32x128xf32>
    %30 = arith.truncf %29 : vector<32x128xf32> to vector<32x128xbf16>
    %c0_12 = arith.constant 0 : index
    %c0_13 = arith.constant 0 : index
    %c0_14 = arith.constant 0 : index
    %31 = vector.load %arg6[%c0_12, %c0_13, %c0_14] : memref<1x128x384xbf16, #tpu.memory_space<vmem>>, vector<1x128x384xbf16>
    %32 = vector.shape_cast %31 : vector<1x128x384xbf16> to vector<128x384xbf16>
    %cst_15 = arith.constant dense<0.000000e+00> : vector<32x384xf32>
    %33 = tpu.matmul %30, %32, %cst_15 {dimension_numbers = #tpu.dot_dimension_numbers<[1], [0], [0], [1], [0, 0, 1, 1], [], []>} : vector<32x128xbf16>, vector<128x384xbf16>, vector<32x384xf32> -> vector<32x384xf32>
    %34 = vector.extract_strided_slice %33 {offsets = [0, 0], sizes = [32, 128], strides = [1, 1]} : vector<32x384xf32> to vector<32x128xf32>
    %cst_16 = arith.constant 0.176776692 : f32
    %35 = vector.broadcast %cst_16 : f32 to vector<32x128xf32>
    %36 = arith.mulf %34, %35 : vector<32x128xf32>
    %37 = arith.truncf %36 : vector<32x128xf32> to vector<32x128xbf16>
    %38 = vector.extract_strided_slice %33 {offsets = [0, 128], sizes = [32, 128], strides = [1, 1]} : vector<32x384xf32> to vector<32x128xf32>
    %39 = arith.truncf %38 : vector<32x128xf32> to vector<32x128xbf16>
    %40 = vector.extract_strided_slice %33 {offsets = [0, 256], sizes = [32, 128], strides = [1, 1]} : vector<32x384xf32> to vector<32x128xf32>
    %41 = arith.truncf %40 : vector<32x128xf32> to vector<32x128xbf16>
    %42 = vector.extract_strided_slice %37 {offsets = [0, 0], sizes = [16, 128], strides = [1, 1]} : vector<32x128xbf16> to vector<16x128xbf16>
    %43 = vector.extract_strided_slice %39 {offsets = [0, 0], sizes = [16, 128], strides = [1, 1]} : vector<32x128xbf16> to vector<16x128xbf16>
    %44 = vector.extract_strided_slice %41 {offsets = [0, 0], sizes = [16, 128], strides = [1, 1]} : vector<32x128xbf16> to vector<16x128xbf16>
    %cst_17 = arith.constant 0.000000e+00 : f32
    %45 = vector.broadcast %cst_17 : f32 to vector<16x128xf32>
    %46 = vector.extract_strided_slice %42 {offsets = [0, 0], sizes = [16, 32], strides = [1, 1]} : vector<16x128xbf16> to vector<16x32xbf16>
    %47 = vector.extract_strided_slice %43 {offsets = [0, 0], sizes = [16, 32], strides = [1, 1]} : vector<16x128xbf16> to vector<16x32xbf16>
    "tpu.trace_start"() <{level = 10 : i32, message = "nd,md->nm"}> : () -> ()
    %cst_18 = arith.constant dense<0.000000e+00> : vector<16x16xf32>
    %48 = tpu.matmul %46, %47, %cst_18 {dimension_numbers = #tpu.dot_dimension_numbers<[1], [1], [0], [0], [0, 0, 1, 0], [], []>} : vector<16x32xbf16>, vector<16x32xbf16>, vector<16x16xf32> -> vector<16x16xf32>
    "tpu.trace_stop"() : () -> ()
    %cst_19 = arith.constant dense<0xFF800000> : vector<16xf32>
    %49 = vector.multi_reduction <maximumf>, %48, %cst_19 [1] : vector<16x16xf32> to vector<16xf32>
    %50 = vector.shape_cast %49 : vector<16xf32> to vector<16x1xf32>
    %51 = vector.broadcast %50 : vector<16x1xf32> to vector<16x16xf32>
    %52 = arith.subf %48, %51 : vector<16x16xf32>
    %53 = math.exp %52 : vector<16x16xf32>
    %cst_20 = arith.constant dense<0.000000e+00> : vector<16xf32>
    %54 = vector.multi_reduction <add>, %53, %cst_20 [1] : vector<16x16xf32> to vector<16xf32>
    %55 = vector.shape_cast %54 : vector<16xf32> to vector<16x1xf32>
    %56 = tpu.reciprocal %55 {approx = true} : vector<16x1xf32> -> vector<16x1xf32>
    %57 = vector.broadcast %56 : vector<16x1xf32> to vector<16x16xf32>
    %58 = arith.mulf %53, %57 : vector<16x16xf32>
    %c0_21 = arith.constant 0 : index
    %c0_22 = arith.constant 0 : index
    %c0_23 = arith.constant 0 : index
    %c0_24 = arith.constant 0 : index
    %59 = vector.load %arg3[%c0_21, %c0_22, %c0_23, %c0_24] : memref<2x4x16x16xf32, #tpu.memory_space<vmem>>, vector<1x1x16x16xf32>
    %60 = vector.shape_cast %59 : vector<1x1x16x16xf32> to vector<16x16xf32>
    %61 = arith.mulf %60, %58 : vector<16x16xf32>
    %62 = arith.truncf %61 : vector<16x16xf32> to vector<16x16xbf16>
    %63 = vector.extract_strided_slice %44 {offsets = [0, 0], sizes = [16, 32], strides = [1, 1]} : vector<16x128xbf16> to vector<16x32xbf16>
    %cst_25 = arith.constant dense<0.000000e+00> : vector<16x32xf32>
    %64 = tpu.matmul %62, %63, %cst_25 {dimension_numbers = #tpu.dot_dimension_numbers<[1], [0], [0], [1], [0, 0, 1, 1], [], []>} : vector<16x16xbf16>, vector<16x32xbf16>, vector<16x32xf32> -> vector<16x32xf32>
    %65 = arith.truncf %64 : vector<16x32xf32> to vector<16x32xbf16>
    %c0_26 = arith.constant 0 : index
    %c0_27 = arith.constant 0 : index
    %c0_28 = arith.constant 0 : index
    %66 = vector.load %arg7[%c0_26, %c0_27, %c0_28] : memref<1x128x128xbf16, #tpu.memory_space<vmem>>, vector<1x32x128xbf16>
    %67 = vector.shape_cast %66 : vector<1x32x128xbf16> to vector<32x128xbf16>
    %cst_29 = arith.constant dense<0.000000e+00> : vector<16x128xf32>
    %68 = tpu.matmul %65, %67, %cst_29 {dimension_numbers = #tpu.dot_dimension_numbers<[1], [0], [0], [1], [0, 0, 1, 1], [], []>} : vector<16x32xbf16>, vector<32x128xbf16>, vector<16x128xf32> -> vector<16x128xf32>
    %69 = arith.addf %45, %68 : vector<16x128xf32>
    %70 = vector.extract_strided_slice %42 {offsets = [0, 32], sizes = [16, 32], strides = [1, 1]} : vector<16x128xbf16> to vector<16x32xbf16>
    %71 = vector.extract_strided_slice %43 {offsets = [0, 32], sizes = [16, 32], strides = [1, 1]} : vector<16x128xbf16> to vector<16x32xbf16>
    "tpu.trace_start"() <{level = 10 : i32, message = "nd,md->nm"}> : () -> ()
    %cst_30 = arith.constant dense<0.000000e+00> : vector<16x16xf32>
    %72 = tpu.matmul %70, %71, %cst_30 {dimension_numbers = #tpu.dot_dimension_numbers<[1], [1], [0], [0], [0, 0, 1, 0], [], []>} : vector<16x32xbf16>, vector<16x32xbf16>, vector<16x16xf32> -> vector<16x16xf32>
    "tpu.trace_stop"() : () -> ()
    %cst_31 = arith.constant dense<0xFF800000> : vector<16xf32>
    %73 = vector.multi_reduction <maximumf>, %72, %cst_31 [1] : vector<16x16xf32> to vector<16xf32>
    %74 = vector.shape_cast %73 : vector<16xf32> to vector<16x1xf32>
    %75 = vector.broadcast %74 : vector<16x1xf32> to vector<16x16xf32>
    %76 = arith.subf %72, %75 : vector<16x16xf32>
    %77 = math.exp %76 : vector<16x16xf32>
    %cst_32 = arith.constant dense<0.000000e+00> : vector<16xf32>
    %78 = vector.multi_reduction <add>, %77, %cst_32 [1] : vector<16x16xf32> to vector<16xf32>
    %79 = vector.shape_cast %78 : vector<16xf32> to vector<16x1xf32>
    %80 = tpu.reciprocal %79 {approx = true} : vector<16x1xf32> -> vector<16x1xf32>
    %81 = vector.broadcast %80 : vector<16x1xf32> to vector<16x16xf32>
    %82 = arith.mulf %77, %81 : vector<16x16xf32>
    %c0_33 = arith.constant 0 : index
    %c1 = arith.constant 1 : index
    %c0_34 = arith.constant 0 : index
    %c0_35 = arith.constant 0 : index
    %83 = vector.load %arg3[%c0_33, %c1, %c0_34, %c0_35] : memref<2x4x16x16xf32, #tpu.memory_space<vmem>>, vector<1x1x16x16xf32>
    %84 = vector.shape_cast %83 : vector<1x1x16x16xf32> to vector<16x16xf32>
    %85 = arith.mulf %84, %82 : vector<16x16xf32>
    %86 = arith.truncf %85 : vector<16x16xf32> to vector<16x16xbf16>
    %87 = vector.extract_strided_slice %44 {offsets = [0, 32], sizes = [16, 32], strides = [1, 1]} : vector<16x128xbf16> to vector<16x32xbf16>
    %cst_36 = arith.constant dense<0.000000e+00> : vector<16x32xf32>
    %88 = tpu.matmul %86, %87, %cst_36 {dimension_numbers = #tpu.dot_dimension_numbers<[1], [0], [0], [1], [0, 0, 1, 1], [], []>} : vector<16x16xbf16>, vector<16x32xbf16>, vector<16x32xf32> -> vector<16x32xf32>
    %89 = arith.truncf %88 : vector<16x32xf32> to vector<16x32xbf16>
    %c0_37 = arith.constant 0 : index
    %c32 = arith.constant 32 : index
    %c0_38 = arith.constant 0 : index
    %90 = vector.load %arg7[%c0_37, %c32, %c0_38] : memref<1x128x128xbf16, #tpu.memory_space<vmem>>, vector<1x32x128xbf16>
    %91 = vector.shape_cast %90 : vector<1x32x128xbf16> to vector<32x128xbf16>
    %cst_39 = arith.constant dense<0.000000e+00> : vector<16x128xf32>
    %92 = tpu.matmul %89, %91, %cst_39 {dimension_numbers = #tpu.dot_dimension_numbers<[1], [0], [0], [1], [0, 0, 1, 1], [], []>} : vector<16x32xbf16>, vector<32x128xbf16>, vector<16x128xf32> -> vector<16x128xf32>
    %93 = arith.addf %69, %92 : vector<16x128xf32>
    %94 = vector.extract_strided_slice %42 {offsets = [0, 64], sizes = [16, 32], strides = [1, 1]} : vector<16x128xbf16> to vector<16x32xbf16>
    %95 = vector.extract_strided_slice %43 {offsets = [0, 64], sizes = [16, 32], strides = [1, 1]} : vector<16x128xbf16> to vector<16x32xbf16>
    "tpu.trace_start"() <{level = 10 : i32, message = "nd,md->nm"}> : () -> ()
    %cst_40 = arith.constant dense<0.000000e+00> : vector<16x16xf32>
    %96 = tpu.matmul %94, %95, %cst_40 {dimension_numbers = #tpu.dot_dimension_numbers<[1], [1], [0], [0], [0, 0, 1, 0], [], []>} : vector<16x32xbf16>, vector<16x32xbf16>, vector<16x16xf32> -> vector<16x16xf32>
    "tpu.trace_stop"() : () -> ()
    %cst_41 = arith.constant dense<0xFF800000> : vector<16xf32>
    %97 = vector.multi_reduction <maximumf>, %96, %cst_41 [1] : vector<16x16xf32> to vector<16xf32>
    %98 = vector.shape_cast %97 : vector<16xf32> to vector<16x1xf32>
    %99 = vector.broadcast %98 : vector<16x1xf32> to vector<16x16xf32>
    %100 = arith.subf %96, %99 : vector<16x16xf32>
    %101 = math.exp %100 : vector<16x16xf32>
    %cst_42 = arith.constant dense<0.000000e+00> : vector<16xf32>
    %102 = vector.multi_reduction <add>, %101, %cst_42 [1] : vector<16x16xf32> to vector<16xf32>
    %103 = vector.shape_cast %102 : vector<16xf32> to vector<16x1xf32>
    %104 = tpu.reciprocal %103 {approx = true} : vector<16x1xf32> -> vector<16x1xf32>
    %105 = vector.broadcast %104 : vector<16x1xf32> to vector<16x16xf32>
    %106 = arith.mulf %101, %105 : vector<16x16xf32>
    %c0_43 = arith.constant 0 : index
    %c2 = arith.constant 2 : index
    %c0_44 = arith.constant 0 : index
    %c0_45 = arith.constant 0 : index
    %107 = vector.load %arg3[%c0_43, %c2, %c0_44, %c0_45] : memref<2x4x16x16xf32, #tpu.memory_space<vmem>>, vector<1x1x16x16xf32>
    %108 = vector.shape_cast %107 : vector<1x1x16x16xf32> to vector<16x16xf32>
    %109 = arith.mulf %108, %106 : vector<16x16xf32>
    %110 = arith.truncf %109 : vector<16x16xf32> to vector<16x16xbf16>
    %111 = vector.extract_strided_slice %44 {offsets = [0, 64], sizes = [16, 32], strides = [1, 1]} : vector<16x128xbf16> to vector<16x32xbf16>
    %cst_46 = arith.constant dense<0.000000e+00> : vector<16x32xf32>
    %112 = tpu.matmul %110, %111, %cst_46 {dimension_numbers = #tpu.dot_dimension_numbers<[1], [0], [0], [1], [0, 0, 1, 1], [], []>} : vector<16x16xbf16>, vector<16x32xbf16>, vector<16x32xf32> -> vector<16x32xf32>
    %113 = arith.truncf %112 : vector<16x32xf32> to vector<16x32xbf16>
    %c0_47 = arith.constant 0 : index
    %c64 = arith.constant 64 : index
    %c0_48 = arith.constant 0 : index
    %114 = vector.load %arg7[%c0_47, %c64, %c0_48] : memref<1x128x128xbf16, #tpu.memory_space<vmem>>, vector<1x32x128xbf16>
    %115 = vector.shape_cast %114 : vector<1x32x128xbf16> to vector<32x128xbf16>
    %cst_49 = arith.constant dense<0.000000e+00> : vector<16x128xf32>
    %116 = tpu.matmul %113, %115, %cst_49 {dimension_numbers = #tpu.dot_dimension_numbers<[1], [0], [0], [1], [0, 0, 1, 1], [], []>} : vector<16x32xbf16>, vector<32x128xbf16>, vector<16x128xf32> -> vector<16x128xf32>
    %117 = arith.addf %93, %116 : vector<16x128xf32>
    %118 = vector.extract_strided_slice %42 {offsets = [0, 96], sizes = [16, 32], strides = [1, 1]} : vector<16x128xbf16> to vector<16x32xbf16>
    %119 = vector.extract_strided_slice %43 {offsets = [0, 96], sizes = [16, 32], strides = [1, 1]} : vector<16x128xbf16> to vector<16x32xbf16>
    "tpu.trace_start"() <{level = 10 : i32, message = "nd,md->nm"}> : () -> ()
    %cst_50 = arith.constant dense<0.000000e+00> : vector<16x16xf32>
    %120 = tpu.matmul %118, %119, %cst_50 {dimension_numbers = #tpu.dot_dimension_numbers<[1], [1], [0], [0], [0, 0, 1, 0], [], []>} : vector<16x32xbf16>, vector<16x32xbf16>, vector<16x16xf32> -> vector<16x16xf32>
    "tpu.trace_stop"() : () -> ()
    %cst_51 = arith.constant dense<0xFF800000> : vector<16xf32>
    %121 = vector.multi_reduction <maximumf>, %120, %cst_51 [1] : vector<16x16xf32> to vector<16xf32>
    %122 = vector.shape_cast %121 : vector<16xf32> to vector<16x1xf32>
    %123 = vector.broadcast %122 : vector<16x1xf32> to vector<16x16xf32>
    %124 = arith.subf %120, %123 : vector<16x16xf32>
    %125 = math.exp %124 : vector<16x16xf32>
    %cst_52 = arith.constant dense<0.000000e+00> : vector<16xf32>
    %126 = vector.multi_reduction <add>, %125, %cst_52 [1] : vector<16x16xf32> to vector<16xf32>
    %127 = vector.shape_cast %126 : vector<16xf32> to vector<16x1xf32>
    %128 = tpu.reciprocal %127 {approx = true} : vector<16x1xf32> -> vector<16x1xf32>
    %129 = vector.broadcast %128 : vector<16x1xf32> to vector<16x16xf32>
    %130 = arith.mulf %125, %129 : vector<16x16xf32>
    %c0_53 = arith.constant 0 : index
    %c3 = arith.constant 3 : index
    %c0_54 = arith.constant 0 : index
    %c0_55 = arith.constant 0 : index
    %131 = vector.load %arg3[%c0_53, %c3, %c0_54, %c0_55] : memref<2x4x16x16xf32, #tpu.memory_space<vmem>>, vector<1x1x16x16xf32>
    %132 = vector.shape_cast %131 : vector<1x1x16x16xf32> to vector<16x16xf32>
    %133 = arith.mulf %132, %130 : vector<16x16xf32>
    %134 = arith.truncf %133 : vector<16x16xf32> to vector<16x16xbf16>
    %135 = vector.extract_strided_slice %44 {offsets = [0, 96], sizes = [16, 32], strides = [1, 1]} : vector<16x128xbf16> to vector<16x32xbf16>
    %cst_56 = arith.constant dense<0.000000e+00> : vector<16x32xf32>
    %136 = tpu.matmul %134, %135, %cst_56 {dimension_numbers = #tpu.dot_dimension_numbers<[1], [0], [0], [1], [0, 0, 1, 1], [], []>} : vector<16x16xbf16>, vector<16x32xbf16>, vector<16x32xf32> -> vector<16x32xf32>
    %137 = arith.truncf %136 : vector<16x32xf32> to vector<16x32xbf16>
    %c0_57 = arith.constant 0 : index
    %c96 = arith.constant 96 : index
    %c0_58 = arith.constant 0 : index
    %138 = vector.load %arg7[%c0_57, %c96, %c0_58] : memref<1x128x128xbf16, #tpu.memory_space<vmem>>, vector<1x32x128xbf16>
    %139 = vector.shape_cast %138 : vector<1x32x128xbf16> to vector<32x128xbf16>
    %cst_59 = arith.constant dense<0.000000e+00> : vector<16x128xf32>
    %140 = tpu.matmul %137, %139, %cst_59 {dimension_numbers = #tpu.dot_dimension_numbers<[1], [0], [0], [1], [0, 0, 1, 1], [], []>} : vector<16x32xbf16>, vector<32x128xbf16>, vector<16x128xf32> -> vector<16x128xf32>
    %141 = arith.addf %117, %140 : vector<16x128xf32>
    %142 = vector.extract_strided_slice %37 {offsets = [16, 0], sizes = [16, 128], strides = [1, 1]} : vector<32x128xbf16> to vector<16x128xbf16>
    %143 = vector.extract_strided_slice %39 {offsets = [16, 0], sizes = [16, 128], strides = [1, 1]} : vector<32x128xbf16> to vector<16x128xbf16>
    %144 = vector.extract_strided_slice %41 {offsets = [16, 0], sizes = [16, 128], strides = [1, 1]} : vector<32x128xbf16> to vector<16x128xbf16>
    %cst_60 = arith.constant 0.000000e+00 : f32
    %145 = vector.broadcast %cst_60 : f32 to vector<16x128xf32>
    %146 = vector.extract_strided_slice %142 {offsets = [0, 0], sizes = [16, 32], strides = [1, 1]} : vector<16x128xbf16> to vector<16x32xbf16>
    %147 = vector.extract_strided_slice %143 {offsets = [0, 0], sizes = [16, 32], strides = [1, 1]} : vector<16x128xbf16> to vector<16x32xbf16>
    "tpu.trace_start"() <{level = 10 : i32, message = "nd,md->nm"}> : () -> ()
    %cst_61 = arith.constant dense<0.000000e+00> : vector<16x16xf32>
    %148 = tpu.matmul %146, %147, %cst_61 {dimension_numbers = #tpu.dot_dimension_numbers<[1], [1], [0], [0], [0, 0, 1, 0], [], []>} : vector<16x32xbf16>, vector<16x32xbf16>, vector<16x16xf32> -> vector<16x16xf32>
    "tpu.trace_stop"() : () -> ()
    %cst_62 = arith.constant dense<0xFF800000> : vector<16xf32>
    %149 = vector.multi_reduction <maximumf>, %148, %cst_62 [1] : vector<16x16xf32> to vector<16xf32>
    %150 = vector.shape_cast %149 : vector<16xf32> to vector<16x1xf32>
    %151 = vector.broadcast %150 : vector<16x1xf32> to vector<16x16xf32>
    %152 = arith.subf %148, %151 : vector<16x16xf32>
    %153 = math.exp %152 : vector<16x16xf32>
    %cst_63 = arith.constant dense<0.000000e+00> : vector<16xf32>
    %154 = vector.multi_reduction <add>, %153, %cst_63 [1] : vector<16x16xf32> to vector<16xf32>
    %155 = vector.shape_cast %154 : vector<16xf32> to vector<16x1xf32>
    %156 = tpu.reciprocal %155 {approx = true} : vector<16x1xf32> -> vector<16x1xf32>
    %157 = vector.broadcast %156 : vector<16x1xf32> to vector<16x16xf32>
    %158 = arith.mulf %153, %157 : vector<16x16xf32>
    %c1_64 = arith.constant 1 : index
    %c0_65 = arith.constant 0 : index
    %c0_66 = arith.constant 0 : index
    %c0_67 = arith.constant 0 : index
    %159 = vector.load %arg3[%c1_64, %c0_65, %c0_66, %c0_67] : memref<2x4x16x16xf32, #tpu.memory_space<vmem>>, vector<1x1x16x16xf32>
    %160 = vector.shape_cast %159 : vector<1x1x16x16xf32> to vector<16x16xf32>
    %161 = arith.mulf %160, %158 : vector<16x16xf32>
    %162 = arith.truncf %161 : vector<16x16xf32> to vector<16x16xbf16>
    %163 = vector.extract_strided_slice %144 {offsets = [0, 0], sizes = [16, 32], strides = [1, 1]} : vector<16x128xbf16> to vector<16x32xbf16>
    %cst_68 = arith.constant dense<0.000000e+00> : vector<16x32xf32>
    %164 = tpu.matmul %162, %163, %cst_68 {dimension_numbers = #tpu.dot_dimension_numbers<[1], [0], [0], [1], [0, 0, 1, 1], [], []>} : vector<16x16xbf16>, vector<16x32xbf16>, vector<16x32xf32> -> vector<16x32xf32>
    %165 = arith.truncf %164 : vector<16x32xf32> to vector<16x32xbf16>
    %c0_69 = arith.constant 0 : index
    %c0_70 = arith.constant 0 : index
    %c0_71 = arith.constant 0 : index
    %166 = vector.load %arg7[%c0_69, %c0_70, %c0_71] : memref<1x128x128xbf16, #tpu.memory_space<vmem>>, vector<1x32x128xbf16>
    %167 = vector.shape_cast %166 : vector<1x32x128xbf16> to vector<32x128xbf16>
    %cst_72 = arith.constant dense<0.000000e+00> : vector<16x128xf32>
    %168 = tpu.matmul %165, %167, %cst_72 {dimension_numbers = #tpu.dot_dimension_numbers<[1], [0], [0], [1], [0, 0, 1, 1], [], []>} : vector<16x32xbf16>, vector<32x128xbf16>, vector<16x128xf32> -> vector<16x128xf32>
    %169 = arith.addf %145, %168 : vector<16x128xf32>
    %170 = vector.extract_strided_slice %142 {offsets = [0, 32], sizes = [16, 32], strides = [1, 1]} : vector<16x128xbf16> to vector<16x32xbf16>
    %171 = vector.extract_strided_slice %143 {offsets = [0, 32], sizes = [16, 32], strides = [1, 1]} : vector<16x128xbf16> to vector<16x32xbf16>
    "tpu.trace_start"() <{level = 10 : i32, message = "nd,md->nm"}> : () -> ()
    %cst_73 = arith.constant dense<0.000000e+00> : vector<16x16xf32>
    %172 = tpu.matmul %170, %171, %cst_73 {dimension_numbers = #tpu.dot_dimension_numbers<[1], [1], [0], [0], [0, 0, 1, 0], [], []>} : vector<16x32xbf16>, vector<16x32xbf16>, vector<16x16xf32> -> vector<16x16xf32>
    "tpu.trace_stop"() : () -> ()
    %cst_74 = arith.constant dense<0xFF800000> : vector<16xf32>
    %173 = vector.multi_reduction <maximumf>, %172, %cst_74 [1] : vector<16x16xf32> to vector<16xf32>
    %174 = vector.shape_cast %173 : vector<16xf32> to vector<16x1xf32>
    %175 = vector.broadcast %174 : vector<16x1xf32> to vector<16x16xf32>
    %176 = arith.subf %172, %175 : vector<16x16xf32>
    %177 = math.exp %176 : vector<16x16xf32>
    %cst_75 = arith.constant dense<0.000000e+00> : vector<16xf32>
    %178 = vector.multi_reduction <add>, %177, %cst_75 [1] : vector<16x16xf32> to vector<16xf32>
    %179 = vector.shape_cast %178 : vector<16xf32> to vector<16x1xf32>
    %180 = tpu.reciprocal %179 {approx = true} : vector<16x1xf32> -> vector<16x1xf32>
    %181 = vector.broadcast %180 : vector<16x1xf32> to vector<16x16xf32>
    %182 = arith.mulf %177, %181 : vector<16x16xf32>
    %c1_76 = arith.constant 1 : index
    %c1_77 = arith.constant 1 : index
    %c0_78 = arith.constant 0 : index
    %c0_79 = arith.constant 0 : index
    %183 = vector.load %arg3[%c1_76, %c1_77, %c0_78, %c0_79] : memref<2x4x16x16xf32, #tpu.memory_space<vmem>>, vector<1x1x16x16xf32>
    %184 = vector.shape_cast %183 : vector<1x1x16x16xf32> to vector<16x16xf32>
    %185 = arith.mulf %184, %182 : vector<16x16xf32>
    %186 = arith.truncf %185 : vector<16x16xf32> to vector<16x16xbf16>
    %187 = vector.extract_strided_slice %144 {offsets = [0, 32], sizes = [16, 32], strides = [1, 1]} : vector<16x128xbf16> to vector<16x32xbf16>
    %cst_80 = arith.constant dense<0.000000e+00> : vector<16x32xf32>
    %188 = tpu.matmul %186, %187, %cst_80 {dimension_numbers = #tpu.dot_dimension_numbers<[1], [0], [0], [1], [0, 0, 1, 1], [], []>} : vector<16x16xbf16>, vector<16x32xbf16>, vector<16x32xf32> -> vector<16x32xf32>
    %189 = arith.truncf %188 : vector<16x32xf32> to vector<16x32xbf16>
    %c0_81 = arith.constant 0 : index
    %c32_82 = arith.constant 32 : index
    %c0_83 = arith.constant 0 : index
    %190 = vector.load %arg7[%c0_81, %c32_82, %c0_83] : memref<1x128x128xbf16, #tpu.memory_space<vmem>>, vector<1x32x128xbf16>
    %191 = vector.shape_cast %190 : vector<1x32x128xbf16> to vector<32x128xbf16>
    %cst_84 = arith.constant dense<0.000000e+00> : vector<16x128xf32>
    %192 = tpu.matmul %189, %191, %cst_84 {dimension_numbers = #tpu.dot_dimension_numbers<[1], [0], [0], [1], [0, 0, 1, 1], [], []>} : vector<16x32xbf16>, vector<32x128xbf16>, vector<16x128xf32> -> vector<16x128xf32>
    %193 = arith.addf %169, %192 : vector<16x128xf32>
    %194 = vector.extract_strided_slice %142 {offsets = [0, 64], sizes = [16, 32], strides = [1, 1]} : vector<16x128xbf16> to vector<16x32xbf16>
    %195 = vector.extract_strided_slice %143 {offsets = [0, 64], sizes = [16, 32], strides = [1, 1]} : vector<16x128xbf16> to vector<16x32xbf16>
    "tpu.trace_start"() <{level = 10 : i32, message = "nd,md->nm"}> : () -> ()
    %cst_85 = arith.constant dense<0.000000e+00> : vector<16x16xf32>
    %196 = tpu.matmul %194, %195, %cst_85 {dimension_numbers = #tpu.dot_dimension_numbers<[1], [1], [0], [0], [0, 0, 1, 0], [], []>} : vector<16x32xbf16>, vector<16x32xbf16>, vector<16x16xf32> -> vector<16x16xf32>
    "tpu.trace_stop"() : () -> ()
    %cst_86 = arith.constant dense<0xFF800000> : vector<16xf32>
    %197 = vector.multi_reduction <maximumf>, %196, %cst_86 [1] : vector<16x16xf32> to vector<16xf32>
    %198 = vector.shape_cast %197 : vector<16xf32> to vector<16x1xf32>
    %199 = vector.broadcast %198 : vector<16x1xf32> to vector<16x16xf32>
    %200 = arith.subf %196, %199 : vector<16x16xf32>
    %201 = math.exp %200 : vector<16x16xf32>
    %cst_87 = arith.constant dense<0.000000e+00> : vector<16xf32>
    %202 = vector.multi_reduction <add>, %201, %cst_87 [1] : vector<16x16xf32> to vector<16xf32>
    %203 = vector.shape_cast %202 : vector<16xf32> to vector<16x1xf32>
    %204 = tpu.reciprocal %203 {approx = true} : vector<16x1xf32> -> vector<16x1xf32>
    %205 = vector.broadcast %204 : vector<16x1xf32> to vector<16x16xf32>
    %206 = arith.mulf %201, %205 : vector<16x16xf32>
    %c1_88 = arith.constant 1 : index
    %c2_89 = arith.constant 2 : index
    %c0_90 = arith.constant 0 : index
    %c0_91 = arith.constant 0 : index
    %207 = vector.load %arg3[%c1_88, %c2_89, %c0_90, %c0_91] : memref<2x4x16x16xf32, #tpu.memory_space<vmem>>, vector<1x1x16x16xf32>
    %208 = vector.shape_cast %207 : vector<1x1x16x16xf32> to vector<16x16xf32>
    %209 = arith.mulf %208, %206 : vector<16x16xf32>
    %210 = arith.truncf %209 : vector<16x16xf32> to vector<16x16xbf16>
    %211 = vector.extract_strided_slice %144 {offsets = [0, 64], sizes = [16, 32], strides = [1, 1]} : vector<16x128xbf16> to vector<16x32xbf16>
    %cst_92 = arith.constant dense<0.000000e+00> : vector<16x32xf32>
    %212 = tpu.matmul %210, %211, %cst_92 {dimension_numbers = #tpu.dot_dimension_numbers<[1], [0], [0], [1], [0, 0, 1, 1], [], []>} : vector<16x16xbf16>, vector<16x32xbf16>, vector<16x32xf32> -> vector<16x32xf32>
    %213 = arith.truncf %212 : vector<16x32xf32> to vector<16x32xbf16>
    %c0_93 = arith.constant 0 : index
    %c64_94 = arith.constant 64 : index
    %c0_95 = arith.constant 0 : index
    %214 = vector.load %arg7[%c0_93, %c64_94, %c0_95] : memref<1x128x128xbf16, #tpu.memory_space<vmem>>, vector<1x32x128xbf16>
    %215 = vector.shape_cast %214 : vector<1x32x128xbf16> to vector<32x128xbf16>
    %cst_96 = arith.constant dense<0.000000e+00> : vector<16x128xf32>
    %216 = tpu.matmul %213, %215, %cst_96 {dimension_numbers = #tpu.dot_dimension_numbers<[1], [0], [0], [1], [0, 0, 1, 1], [], []>} : vector<16x32xbf16>, vector<32x128xbf16>, vector<16x128xf32> -> vector<16x128xf32>
    %217 = arith.addf %193, %216 : vector<16x128xf32>
    %218 = vector.extract_strided_slice %142 {offsets = [0, 96], sizes = [16, 32], strides = [1, 1]} : vector<16x128xbf16> to vector<16x32xbf16>
    %219 = vector.extract_strided_slice %143 {offsets = [0, 96], sizes = [16, 32], strides = [1, 1]} : vector<16x128xbf16> to vector<16x32xbf16>
    "tpu.trace_start"() <{level = 10 : i32, message = "nd,md->nm"}> : () -> ()
    %cst_97 = arith.constant dense<0.000000e+00> : vector<16x16xf32>
    %220 = tpu.matmul %218, %219, %cst_97 {dimension_numbers = #tpu.dot_dimension_numbers<[1], [1], [0], [0], [0, 0, 1, 0], [], []>} : vector<16x32xbf16>, vector<16x32xbf16>, vector<16x16xf32> -> vector<16x16xf32>
    "tpu.trace_stop"() : () -> ()
    %cst_98 = arith.constant dense<0xFF800000> : vector<16xf32>
    %221 = vector.multi_reduction <maximumf>, %220, %cst_98 [1] : vector<16x16xf32> to vector<16xf32>
    %222 = vector.shape_cast %221 : vector<16xf32> to vector<16x1xf32>
    %223 = vector.broadcast %222 : vector<16x1xf32> to vector<16x16xf32>
    %224 = arith.subf %220, %223 : vector<16x16xf32>
    %225 = math.exp %224 : vector<16x16xf32>
    %cst_99 = arith.constant dense<0.000000e+00> : vector<16xf32>
    %226 = vector.multi_reduction <add>, %225, %cst_99 [1] : vector<16x16xf32> to vector<16xf32>
    %227 = vector.shape_cast %226 : vector<16xf32> to vector<16x1xf32>
    %228 = tpu.reciprocal %227 {approx = true} : vector<16x1xf32> -> vector<16x1xf32>
    %229 = vector.broadcast %228 : vector<16x1xf32> to vector<16x16xf32>
    %230 = arith.mulf %225, %229 : vector<16x16xf32>
    %c1_100 = arith.constant 1 : index
    %c3_101 = arith.constant 3 : index
    %c0_102 = arith.constant 0 : index
    %c0_103 = arith.constant 0 : index
    %231 = vector.load %arg3[%c1_100, %c3_101, %c0_102, %c0_103] : memref<2x4x16x16xf32, #tpu.memory_space<vmem>>, vector<1x1x16x16xf32>
    %232 = vector.shape_cast %231 : vector<1x1x16x16xf32> to vector<16x16xf32>
    %233 = arith.mulf %232, %230 : vector<16x16xf32>
    %234 = arith.truncf %233 : vector<16x16xf32> to vector<16x16xbf16>
    %235 = vector.extract_strided_slice %144 {offsets = [0, 96], sizes = [16, 32], strides = [1, 1]} : vector<16x128xbf16> to vector<16x32xbf16>
    %cst_104 = arith.constant dense<0.000000e+00> : vector<16x32xf32>
    %236 = tpu.matmul %234, %235, %cst_104 {dimension_numbers = #tpu.dot_dimension_numbers<[1], [0], [0], [1], [0, 0, 1, 1], [], []>} : vector<16x16xbf16>, vector<16x32xbf16>, vector<16x32xf32> -> vector<16x32xf32>
    %237 = arith.truncf %236 : vector<16x32xf32> to vector<16x32xbf16>
    %c0_105 = arith.constant 0 : index
    %c96_106 = arith.constant 96 : index
    %c0_107 = arith.constant 0 : index
    %238 = vector.load %arg7[%c0_105, %c96_106, %c0_107] : memref<1x128x128xbf16, #tpu.memory_space<vmem>>, vector<1x32x128xbf16>
    %239 = vector.shape_cast %238 : vector<1x32x128xbf16> to vector<32x128xbf16>
    %cst_108 = arith.constant dense<0.000000e+00> : vector<16x128xf32>
    %240 = tpu.matmul %237, %239, %cst_108 {dimension_numbers = #tpu.dot_dimension_numbers<[1], [0], [0], [1], [0, 0, 1, 1], [], []>} : vector<16x32xbf16>, vector<32x128xbf16>, vector<16x128xf32> -> vector<16x128xf32>
    %241 = arith.addf %217, %240 : vector<16x128xf32>
    %242 = tpu.concatenate %141, %241 in 0 : vector<16x128xf32>, vector<16x128xf32> -> vector<32x128xf32>
    %243 = arith.addf %3, %242 : vector<32x128xf32>
    %c0_109 = arith.constant 0 : index
    %c0_110 = arith.constant 0 : index
    %c0_111 = arith.constant 0 : index
    %244 = vector.load %arg8[%c0_109, %c0_110, %c0_111] : memref<1x1x128xf32, #tpu.memory_space<vmem>>, vector<1x1x128xf32>
    %245 = vector.shape_cast %244 : vector<1x1x128xf32> to vector<1x128xf32>
    %246 = vector.broadcast %245 : vector<1x128xf32> to vector<32x128xf32>
    %247 = arith.addf %243, %246 : vector<32x128xf32>
    %c0_112 = arith.constant 0 : index
    %c0_113 = arith.constant 0 : index
    %c0_114 = arith.constant 0 : index
    %248 = vector.load %arg9[%c0_112, %c0_113, %c0_114] : memref<1x1x128xf32, #tpu.memory_space<vmem>>, vector<1x1x128xf32>
    %249 = vector.shape_cast %248 : vector<1x1x128xf32> to vector<1x128xf32>
    %c0_115 = arith.constant 0 : index
    %c0_116 = arith.constant 0 : index
    %c0_117 = arith.constant 0 : index
    %250 = vector.load %arg10[%c0_115, %c0_116, %c0_117] : memref<1x1x128xf32, #tpu.memory_space<vmem>>, vector<1x1x128xf32>
    %251 = vector.shape_cast %250 : vector<1x1x128xf32> to vector<1x128xf32>
    %cst_118 = arith.constant dense<0.000000e+00> : vector<32xf32>
    %252 = vector.multi_reduction <add>, %247, %cst_118 [1] : vector<32x128xf32> to vector<32xf32>
    %253 = vector.shape_cast %252 : vector<32xf32> to vector<32x1xf32>
    %cst_119 = arith.constant 1.280000e+02 : f32
    %254 = vector.broadcast %cst_119 : f32 to vector<32x1xf32>
    %255 = arith.divf %253, %254 : vector<32x1xf32>
    %256 = vector.broadcast %255 : vector<32x1xf32> to vector<32x128xf32>
    %257 = arith.subf %247, %256 : vector<32x128xf32>
    %258 = arith.mulf %257, %257 : vector<32x128xf32>
    %cst_120 = arith.constant dense<0.000000e+00> : vector<32xf32>
    %259 = vector.multi_reduction <add>, %258, %cst_120 [1] : vector<32x128xf32> to vector<32xf32>
    %260 = vector.shape_cast %259 : vector<32xf32> to vector<32x1xf32>
    %cst_121 = arith.constant 1.280000e+02 : f32
    %261 = vector.broadcast %cst_121 : f32 to vector<32x1xf32>
    %262 = arith.divf %260, %261 : vector<32x1xf32>
    %263 = vector.broadcast %255 : vector<32x1xf32> to vector<32x128xf32>
    %264 = arith.subf %247, %263 : vector<32x128xf32>
    %cst_122 = arith.constant 9.99999974E-6 : f32
    %265 = vector.broadcast %cst_122 : f32 to vector<32x1xf32>
    %266 = arith.addf %262, %265 : vector<32x1xf32>
    %267 = math.rsqrt %266 : vector<32x1xf32>
    %268 = vector.broadcast %267 : vector<32x1xf32> to vector<32x128xf32>
    %269 = arith.mulf %264, %268 : vector<32x128xf32>
    %270 = vector.broadcast %249 : vector<1x128xf32> to vector<32x128xf32>
    %271 = arith.mulf %269, %270 : vector<32x128xf32>
    %272 = vector.broadcast %251 : vector<1x128xf32> to vector<32x128xf32>
    %273 = arith.addf %271, %272 : vector<32x128xf32>
    %274 = arith.truncf %273 : vector<32x128xf32> to vector<32x128xbf16>
    %c0_123 = arith.constant 0 : index
    %c0_124 = arith.constant 0 : index
    %c0_125 = arith.constant 0 : index
    %275 = vector.load %arg11[%c0_123, %c0_124, %c0_125] : memref<1x128x256xbf16, #tpu.memory_space<vmem>>, vector<1x128x256xbf16>
    %276 = vector.shape_cast %275 : vector<1x128x256xbf16> to vector<128x256xbf16>
    %cst_126 = arith.constant dense<0.000000e+00> : vector<32x256xf32>
    %277 = tpu.matmul %274, %276, %cst_126 {dimension_numbers = #tpu.dot_dimension_numbers<[1], [0], [0], [1], [0, 0, 1, 1], [], []>} : vector<32x128xbf16>, vector<128x256xbf16>, vector<32x256xf32> -> vector<32x256xf32>
    %c0_127 = arith.constant 0 : index
    %c0_128 = arith.constant 0 : index
    %c0_129 = arith.constant 0 : index
    %278 = vector.load %arg12[%c0_127, %c0_128, %c0_129] : memref<1x1x256xf32, #tpu.memory_space<vmem>>, vector<1x1x256xf32>
    %279 = vector.shape_cast %278 : vector<1x1x256xf32> to vector<1x256xf32>
    %280 = vector.broadcast %279 : vector<1x256xf32> to vector<32x256xf32>
    %281 = arith.addf %277, %280 : vector<32x256xf32>
    %cst_130 = arith.constant 0.000000e+00 : f32
    %282 = vector.broadcast %cst_130 : f32 to vector<32x256xf32>
    %283 = arith.maximumf %281, %282 : vector<32x256xf32>
    %284 = arith.truncf %283 : vector<32x256xf32> to vector<32x256xbf16>
    %c0_131 = arith.constant 0 : index
    %c0_132 = arith.constant 0 : index
    %c0_133 = arith.constant 0 : index
    %285 = vector.load %arg13[%c0_131, %c0_132, %c0_133] : memref<1x256x128xbf16, #tpu.memory_space<vmem>>, vector<1x256x128xbf16>
    %286 = vector.shape_cast %285 : vector<1x256x128xbf16> to vector<256x128xbf16>
    %cst_134 = arith.constant dense<0.000000e+00> : vector<32x128xf32>
    %287 = tpu.matmul %284, %286, %cst_134 {dimension_numbers = #tpu.dot_dimension_numbers<[1], [0], [0], [1], [0, 0, 1, 1], [], []>} : vector<32x256xbf16>, vector<256x128xbf16>, vector<32x128xf32> -> vector<32x128xf32>
    %c0_135 = arith.constant 0 : index
    %c0_136 = arith.constant 0 : index
    %c0_137 = arith.constant 0 : index
    %288 = vector.load %arg14[%c0_135, %c0_136, %c0_137] : memref<1x1x128xf32, #tpu.memory_space<vmem>>, vector<1x1x128xf32>
    %289 = vector.shape_cast %288 : vector<1x1x128xf32> to vector<1x128xf32>
    %290 = vector.broadcast %289 : vector<1x128xf32> to vector<32x128xf32>
    %291 = arith.addf %287, %290 : vector<32x128xf32>
    %292 = arith.addf %247, %291 : vector<32x128xf32>
    %c0_138 = arith.constant 0 : index
    %c0_139 = arith.constant 0 : index
    %293 = vector.load %arg16[%c0_138, %c0_139] : memref<32x128xf32, #tpu.memory_space<vmem>>, vector<32x128xf32>
    tpu.vector_store %arg16[%c0_138, %c0_139], %292 {strides = array<i32>} : memref<32x128xf32, #tpu.memory_space<vmem>>, vector<32x128xf32>,
    %c1_i32 = arith.constant 1 : i32
    %294 = arith.cmpi eq, %arg1, %c1_i32 : i32
    %295 = arith.extui %294 : i1 to i32
    %c0_i32_140 = arith.constant 0 : i32
    %296 = arith.cmpi ne, %295, %c0_i32_140 : i32
    scf.if %296 {
      %297 = vector.shape_cast %292 : vector<32x128xf32> to vector<2x16x128xf32>
      %c0_141 = arith.constant 0 : index
      %c0_142 = arith.constant 0 : index
      %c0_143 = arith.constant 0 : index
      %298 = vector.load %arg15[%c0_141, %c0_142, %c0_143] : memref<2x16x128xf32, #tpu.memory_space<vmem>>, vector<2x16x128xf32>
      tpu.vector_store %arg15[%c0_141, %c0_142, %c0_143], %297 {strides = array<i32>} : memref<2x16x128xf32, #tpu.memory_space<vmem>>, vector<2x16x128xf32>,
    } else {
    }
    return
  }
  func.func @transform_0(%arg0: i32, %arg1: i32) -> (i32, i32, i32) {
    %c0_i32 = arith.constant 0 : i32
    %c0_i32_0 = arith.constant 0 : i32
    %c0_i32_1 = arith.constant 0 : i32
    return %arg0, %c0_i32, %c0_i32_0 : i32, i32, i32
  }
  func.func @transform_1(%arg0: i32, %arg1: i32) -> (i32, i32, i32, i32) {
    %c0_i32 = arith.constant 0 : i32
    %c0_i32_0 = arith.constant 0 : i32
    %c0_i32_1 = arith.constant 0 : i32
    %c0_i32_2 = arith.constant 0 : i32
    return %arg0, %c0_i32, %c0_i32_0, %c0_i32_1 : i32, i32, i32, i32
  }
  func.func @transform_2(%arg0: i32, %arg1: i32) -> (i32, i32, i32) {
    %c0_i32 = arith.constant 0 : i32
    %c0_i32_0 = arith.constant 0 : i32
    %c0_i32_1 = arith.constant 0 : i32
    return %arg1, %c0_i32, %c0_i32_0 : i32, i32, i32
  }
  func.func @transform_3(%arg0: i32, %arg1: i32) -> (i32, i32, i32) {
    %c0_i32 = arith.constant 0 : i32
    %c0_i32_0 = arith.constant 0 : i32
    %c0_i32_1 = arith.constant 0 : i32
    return %arg1, %c0_i32, %c0_i32_0 : i32, i32, i32
  }
  func.func @transform_4(%arg0: i32, %arg1: i32) -> (i32, i32, i32) {
    %c0_i32 = arith.constant 0 : i32
    %c0_i32_0 = arith.constant 0 : i32
    %c0_i32_1 = arith.constant 0 : i32
    return %arg1, %c0_i32, %c0_i32_0 : i32, i32, i32
  }
  func.func @transform_5(%arg0: i32, %arg1: i32) -> (i32, i32, i32) {
    %c0_i32 = arith.constant 0 : i32
    %c0_i32_0 = arith.constant 0 : i32
    %c0_i32_1 = arith.constant 0 : i32
    return %arg1, %c0_i32, %c0_i32_0 : i32, i32, i32
  }
  func.func @transform_6(%arg0: i32, %arg1: i32) -> (i32, i32, i32) {
    %c0_i32 = arith.constant 0 : i32
    %c0_i32_0 = arith.constant 0 : i32
    %c0_i32_1 = arith.constant 0 : i32
    return %arg1, %c0_i32, %c0_i32_0 : i32, i32, i32
  }
  func.func @transform_7(%arg0: i32, %arg1: i32) -> (i32, i32, i32) {
    %c0_i32 = arith.constant 0 : i32
    %c0_i32_0 = arith.constant 0 : i32
    %c0_i32_1 = arith.constant 0 : i32
    return %arg1, %c0_i32, %c0_i32_0 : i32, i32, i32
  }
  func.func @transform_8(%arg0: i32, %arg1: i32) -> (i32, i32, i32) {
    %c0_i32 = arith.constant 0 : i32
    %c0_i32_0 = arith.constant 0 : i32
    %c0_i32_1 = arith.constant 0 : i32
    return %arg1, %c0_i32, %c0_i32_0 : i32, i32, i32
  }
  func.func @transform_9(%arg0: i32, %arg1: i32) -> (i32, i32, i32) {
    %c0_i32 = arith.constant 0 : i32
    %c0_i32_0 = arith.constant 0 : i32
    %c0_i32_1 = arith.constant 0 : i32
    return %arg1, %c0_i32, %c0_i32_0 : i32, i32, i32
  }
  func.func @transform_10(%arg0: i32, %arg1: i32) -> (i32, i32, i32) {
    %c0_i32 = arith.constant 0 : i32
    %c0_i32_0 = arith.constant 0 : i32
    %c0_i32_1 = arith.constant 0 : i32
    return %arg1, %c0_i32, %c0_i32_0 : i32, i32, i32
  }
  func.func @transform_11(%arg0: i32, %arg1: i32) -> (i32, i32, i32) {
    %c0_i32 = arith.constant 0 : i32
    %c0_i32_0 = arith.constant 0 : i32
    %c0_i32_1 = arith.constant 0 : i32
    return %arg1, %c0_i32, %c0_i32_0 : i32, i32, i32
  }
  func.func @transform_12(%arg0: i32, %arg1: i32) -> (i32, i32, i32) {
    %c0_i32 = arith.constant 0 : i32
    %c0_i32_0 = arith.constant 0 : i32
    %c0_i32_1 = arith.constant 0 : i32
    return %arg1, %c0_i32, %c0_i32_0 : i32, i32, i32
  }
  func.func @transform_13(%arg0: i32, %arg1: i32) -> (i32, i32, i32) {
    %c0_i32 = arith.constant 0 : i32
    %c0_i32_0 = arith.constant 0 : i32
    %c0_i32_1 = arith.constant 0 : i32
    return %arg0, %c0_i32, %c0_i32_0 : i32, i32, i32
  }
}

</mosaic_0001>

<llo_original>
// kernel: tpu_custom_call.1
$region0: #{tpu_custom_call.1}
  #allocation0 [shape = 'u32[]', space=smem, size = 0x4, offset = 0x4, fixed_abs, tag = 'smem constant byte address 0x4 - core index']
  #allocation1 [shape = 'u32[144,128]{1,0:T(1,128)}', space=vmem, size = 0x12000, scoped, tag = 'internal scratch']
  #allocation2 [shape = 'f32[32,128]{1,0:T(8,128)}', space=vmem, size = 0x4000, scoped, tag = 'scratch operand']
  %s0 = inlined_call_operand.hbm [shape: f32[2,16,128], index: 0, kind: input, shape index: {}]
  %s1 = inlined_call_operand.hbm [shape: f32[2,4,16,16], index: 1, kind: input, shape index: {}]
  %s2 = inlined_call_operand.vmem [shape: f32[2,1,128], index: 2, kind: input, shape index: {}]
  %s3 = inlined_call_operand.vmem [shape: f32[2,1,128], index: 3, kind: input, shape index: {}]
  %s4 = inlined_call_operand.hbm [shape: bf16[2,128,384], index: 4, kind: input, shape index: {}]
  %s5 = inlined_call_operand.hbm [shape: bf16[2,128,128], index: 5, kind: input, shape index: {}]
  %s6 = inlined_call_operand.vmem [shape: f32[2,1,128], index: 6, kind: input, shape index: {}]
  %s7 = inlined_call_operand.vmem [shape: f32[2,1,128], index: 7, kind: input, shape index: {}]
  %s8 = inlined_call_operand.vmem [shape: f32[2,1,128], index: 8, kind: input, shape index: {}]
  %s9 = inlined_call_operand.hbm [shape: bf16[2,128,256], index: 9, kind: input, shape index: {}]
  %s10 = inlined_call_operand.vmem [shape: f32[2,1,256], index: 10, kind: input, shape index: {}]
  %s11 = inlined_call_operand.hbm [shape: bf16[2,256,128], index: 11, kind: input, shape index: {}]
  %s12 = inlined_call_operand.vmem [shape: f32[2,1,128], index: 12, kind: input, shape index: {}]
  %s13 = inlined_call_operand.hbm [shape: f32[2,16,128], index: 13, kind: output, shape index: {}]
  %s14 = sld [smem:[#allocation0]]
  $region117: #{tpu_custom_call.1} parent=0
    _
  %s16 = ssub.s32 1, %s14
  %s17 = scalar_select 0, %s16, %s14
  $region1: #{tpu_custom_call.1} parent=0
    #allocation3 [shape = 'u8[16384]{0}', space=vmem, size = 0x4000, scoped, tag = 'input window, operand 0, single buffered']
    #allocation4 [shape = 's32[2]{0}', space=sflag, size = 0x8, scoped, tag = 'scoped memory for tpu_custom_call.1']
    #allocation5 [shape = 's32[2]{0}', space=sflag, size = 0x8, scoped, tag = 'scoped memory for tpu_custom_call.1']
    #allocation6 [shape = 'u8[65536]{0}', space=vmem, size = 0x10000, scoped, tag = 'input window, operand 1, single buffered']
    #allocation7 [shape = 's32[1]{0}', space=sflag, size = 0x4, scoped, tag = 'scoped memory for tpu_custom_call.1']
    #allocation8 [shape = 'u8[196608]{0}', space=vmem, size = 0x30000, scoped, tag = 'input window, operand 4']
    #allocation9 [shape = 'u8[65536]{0}', space=vmem, size = 0x10000, scoped, tag = 'input window, operand 5']
    #allocation10 [shape = 'u8[131072]{0}', space=vmem, size = 0x20000, scoped, tag = 'input window, operand 9']
    #allocation11 [shape = 'u8[131072]{0}', space=vmem, size = 0x20000, scoped, tag = 'input window, operand 11']
    #allocation12 [shape = 'u8[16384]{0}', space=vmem, size = 0x4000, scoped, tag = 'output window, operand 0, single buffered']
    %18 = vsyncpa [#allocation4], 0
    %19 = vsyncpa [#allocation7], 0
    %20 = vsyncpa [#allocation5], 0
    loop: start=0, step=1, limit=4
    $region2: #{tpu_custom_call.1} parent=1 // loop_pre_header
      _
    $region3: #{tpu_custom_call.1} parent=1 // loop_header
      %s22 = sphi 0, %s26
      %p23 = scmp.ge.s32.totalorder %s22, 4
      %s29 = sphi 0, %s41
      %s30 = sphi 0, %s37
      %s31 = sphi 0, %s29
      %s32 = sphi 0, %s30
      %s33 = sphi 0, %s31
      %s34 = sphi 0, %s32
      %s44 = sphi 0, %s46
      %s47 = sphi 0, %s44
      %s48 = sphi 0, %s47
      %s64 = sphi 0, %s48
      %s70 = sphi 0, %s72
      %s73 = sphi 0, %s70
      %s74 = sphi 0, %s73
      %s90 = sphi 0, %s74
      %s96 = sphi 0, %s98
      %s99 = sphi 0, %s96
      %s100 = sphi 0, %s99
      %s116 = sphi 0, %s100
      %s122 = sphi 0, %s124
      %s125 = sphi 0, %s122
      %s126 = sphi 0, %s125
      %s142 = sphi 0, %s126
      %s148 = sphi 0, %s150
      %s151 = sphi 0, %s148
      %s152 = sphi 0, %s151
      %s168 = sphi 0, %s152
      %s174 = sphi 0, %s176
      %s177 = sphi 0, %s174
      %s178 = sphi 0, %s177
      %s194 = sphi 0, %s178
      %s200 = sphi 0, %s202
      %s203 = sphi 0, %s200
      %s204 = sphi 0, %s203
      %s220 = sphi 0, %s204
      %s226 = sphi 0, %s228
      %s229 = sphi 0, %s226
      %s230 = sphi 0, %s229
      %s246 = sphi 0, %s230
      %s252 = sphi 0, %s254
      %s255 = sphi 0, %s252
      %s256 = sphi 0, %s255
      %s272 = sphi 0, %s256
      %s278 = sphi 0, %s280
      %s281 = sphi 0, %s278
      %s282 = sphi 0, %s281
      %s298 = sphi 0, %s282
      %s304 = sphi 0, %s306
      %s307 = sphi 0, %s304
      %s308 = sphi 0, %s307
      %s324 = sphi 0, %s308
      %s330 = sphi 0, %s332
      %s333 = sphi 0, %s330
      %s334 = sphi 0, %s333
      %s350 = sphi 0, %s334
      %s356 = sphi 0, %s358
      %s359 = sphi 0, %s356
      %s360 = sphi 0, %s359
      %s376 = sphi 0, %s360
      %s382 = sphi 0, %s384
      %s385 = sphi 0, %s382
      %s386 = sphi 0, %s385
      %s402 = sphi 0, %s386
    $region4: #{tpu_custom_call.1} parent=1 // loop_header_branch
      %25 = sbr.rel (%p23) target = $region8
    $region5: #{tpu_custom_call.1} parent=1 // loop_body
      %s27 = ssub.s32 %s22, 1
      %s28 = ssub.s32 %s22, 2
      %s35 = sadd.s32 1, %s30
      %p36 = scmp.ge.s32.totalorder %s35, 2
      %s37 = scalar_select %p36, 0, %s35
      %s38 = sadd.s32 1, %s29
      %s39 = scalar_select %p36, %s38, %s29
      %p40 = scmp.ge.s32.totalorder %s39, 1
      %s41 = scalar_select %p40, 0, %s39
      %s42 = ssub.s32 %s29, %s41
      %p43 = scmp.eq.s32.totalorder %s42, 0
      %s45 = sadd.s32 %s44, 1
      %s46 = scalar_select %p43, %s44, %s45
      %p49 = pneg %p43
      %p50 = scmp.eq.s32.totalorder %s22, 1
      %p51 = por %p49, %p50
      %p52 = scmp.ne.s32.totalorder %s44, %s47
      %p53 = scmp.eq.s32.totalorder %s22, 0
      %p54 = por %p52, %p53
      %p55 = scmp.ne.s32.totalorder %s44, %s47
      %p56 = scmp.eq.s32.totalorder %s27, 1
      %p57 = por %p55, %p56
      %p58 = scmp.ne.s32.totalorder %s47, %s48
      %p59 = scmp.eq.s32.totalorder %s27, 0
      %p60 = por %p58, %p59
      %p61 = scmp.ne.s32.totalorder %s47, %s48
      %p62 = scmp.eq.s32.totalorder %s28, 1
      %p63 = por %p61, %p62
      %p65 = scmp.ne.s32.totalorder %s48, %s64
      %p66 = scmp.eq.s32.totalorder %s28, 0
      %p67 = por %p65, %p66
      %s68 = ssub.s32 %s29, %s41
      %p69 = scmp.eq.s32.totalorder %s68, 0
      %s71 = sadd.s32 %s70, 1
      %s72 = scalar_select %p69, %s70, %s71
      %p75 = pneg %p69
      %p76 = scmp.eq.s32.totalorder %s22, 1
      %p77 = por %p75, %p76
      %p78 = scmp.ne.s32.totalorder %s70, %s73
      %p79 = scmp.eq.s32.totalorder %s22, 0
      %p80 = por %p78, %p79
      %p81 = scmp.ne.s32.totalorder %s70, %s73
      %p82 = scmp.eq.s32.totalorder %s27, 1
      %p83 = por %p81, %p82
      %p84 = scmp.ne.s32.totalorder %s73, %s74
      %p85 = scmp.eq.s32.totalorder %s27, 0
      %p86 = por %p84, %p85
      %p87 = scmp.ne.s32.totalorder %s73, %s74
      %p88 = scmp.eq.s32.totalorder %s28, 1
      %p89 = por %p87, %p88
      %p91 = scmp.ne.s32.totalorder %s74, %s90
      %p92 = scmp.eq.s32.totalorder %s28, 0
      %p93 = por %p91, %p92
      %s94 = ssub.s32 %s30, %s37
      %p95 = scmp.eq.s32.totalorder %s94, 0
      %s97 = sadd.s32 %s96, 1
      %s98 = scalar_select %p95, %s96, %s97
      %p101 = pneg %p95
      %p102 = scmp.eq.s32.totalorder %s22, 1
      %p103 = por %p101, %p102
      %p104 = scmp.ne.s32.totalorder %s96, %s99
      %p105 = scmp.eq.s32.totalorder %s22, 0
      %p106 = por %p104, %p105
      %p107 = scmp.ne.s32.totalorder %s96, %s99
      %p108 = scmp.eq.s32.totalorder %s27, 1
      %p109 = por %p107, %p108
      %p110 = scmp.ne.s32.totalorder %s99, %s100
      %p111 = scmp.eq.s32.totalorder %s27, 0
      %p112 = por %p110, %p111
      %p113 = scmp.ne.s32.totalorder %s99, %s100
      %p114 = scmp.eq.s32.totalorder %s28, 1
      %p115 = por %p113, %p114
      %p117 = scmp.ne.s32.totalorder %s100, %s116
      %p118 = scmp.eq.s32.totalorder %s28, 0
      %p119 = por %p117, %p118
      %s120 = ssub.s32 %s30, %s37
      %p121 = scmp.eq.s32.totalorder %s120, 0
      %s123 = sadd.s32 %s122, 1
      %s124 = scalar_select %p121, %s122, %s123
      %p127 = pneg %p121
      %p128 = scmp.eq.s32.totalorder %s22, 1
      %p129 = por %p127, %p128
      %p130 = scmp.ne.s32.totalorder %s122, %s125
      %p131 = scmp.eq.s32.totalorder %s22, 0
      %p132 = por %p130, %p131
      %p133 = scmp.ne.s32.totalorder %s122, %s125
      %p134 = scmp.eq.s32.totalorder %s27, 1
      %p135 = por %p133, %p134
      %p136 = scmp.ne.s32.totalorder %s125, %s126
      %p137 = scmp.eq.s32.totalorder %s27, 0
      %p138 = por %p136, %p137
      %p139 = scmp.ne.s32.totalorder %s125, %s126
      %p140 = scmp.eq.s32.totalorder %s28, 1
      %p141 = por %p139, %p140
      %p143 = scmp.ne.s32.totalorder %s126, %s142
      %p144 = scmp.eq.s32.totalorder %s28, 0
      %p145 = por %p143, %p144
      %s146 = ssub.s32 %s30, %s37
      %p147 = scmp.eq.s32.totalorder %s146, 0
      %s149 = sadd.s32 %s148, 1
      %s150 = scalar_select %p147, %s148, %s149
      %p153 = pneg %p147
      %p154 = scmp.eq.s32.totalorder %s22, 1
      %p155 = por %p153, %p154
      %p156 = scmp.ne.s32.totalorder %s148, %s151
      %p157 = scmp.eq.s32.totalorder %s22, 0
      %p158 = por %p156, %p157
      %p159 = scmp.ne.s32.totalorder %s148, %s151
      %p160 = scmp.eq.s32.totalorder %s27, 1
      %p161 = por %p159, %p160
      %p162 = scmp.ne.s32.totalorder %s151, %s152
      %p163 = scmp.eq.s32.totalorder %s27, 0
      %p164 = por %p162, %p163
      %p165 = scmp.ne.s32.totalorder %s151, %s152
      %p166 = scmp.eq.s32.totalorder %s28, 1
      %p167 = por %p165, %p166
      %p169 = scmp.ne.s32.totalorder %s152, %s168
      %p170 = scmp.eq.s32.totalorder %s28, 0
      %p171 = por %p169, %p170
      %s172 = ssub.s32 %s30, %s37
      %p173 = scmp.eq.s32.totalorder %s172, 0
      %s175 = sadd.s32 %s174, 1
      %s176 = scalar_select %p173, %s174, %s175
      %p179 = pneg %p173
      %p180 = scmp.eq.s32.totalorder %s22, 1
      %p181 = por %p179, %p180
      %p182 = scmp.ne.s32.totalorder %s174, %s177
      %p183 = scmp.eq.s32.totalorder %s22, 0
      %p184 = por %p182, %p183
      %p185 = scmp.ne.s32.totalorder %s174, %s177
      %p186 = scmp.eq.s32.totalorder %s27, 1
      %p187 = por %p185, %p186
      %p188 = scmp.ne.s32.totalorder %s177, %s178
      %p189 = scmp.eq.s32.totalorder %s27, 0
      %p190 = por %p188, %p189
      %p191 = scmp.ne.s32.totalorder %s177, %s178
      %p192 = scmp.eq.s32.totalorder %s28, 1
      %p193 = por %p191, %p192
      %p195 = scmp.ne.s32.totalorder %s178, %s194
      %p196 = scmp.eq.s32.totalorder %s28, 0
      %p197 = por %p195, %p196
      %s198 = ssub.s32 %s30, %s37
      %p199 = scmp.eq.s32.totalorder %s198, 0
      %s201 = sadd.s32 %s200, 1
      %s202 = scalar_select %p199, %s200, %s201
      %p205 = pneg %p199
      %p206 = scmp.eq.s32.totalorder %s22, 1
      %p207 = por %p205, %p206
      %p208 = scmp.ne.s32.totalorder %s200, %s203
      %p209 = scmp.eq.s32.totalorder %s22, 0
      %p210 = por %p208, %p209
      %p211 = scmp.ne.s32.totalorder %s200, %s203
      %p212 = scmp.eq.s32.totalorder %s27, 1
      %p213 = por %p211, %p212
      %p214 = scmp.ne.s32.totalorder %s203, %s204
      %p215 = scmp.eq.s32.totalorder %s27, 0
      %p216 = por %p214, %p215
      %p217 = scmp.ne.s32.totalorder %s203, %s204
      %p218 = scmp.eq.s32.totalorder %s28, 1
      %p219 = por %p217, %p218
      %p221 = scmp.ne.s32.totalorder %s204, %s220
      %p222 = scmp.eq.s32.totalorder %s28, 0
      %p223 = por %p221, %p222
      %s224 = ssub.s32 %s30, %s37
      %p225 = scmp.eq.s32.totalorder %s224, 0
      %s227 = sadd.s32 %s226, 1
      %s228 = scalar_select %p225, %s226, %s227
      %p231 = pneg %p225
      %p232 = scmp.eq.s32.totalorder %s22, 1
      %p233 = por %p231, %p232
      %p234 = scmp.ne.s32.totalorder %s226, %s229
      %p235 = scmp.eq.s32.totalorder %s22, 0
      %p236 = por %p234, %p235
      %p237 = scmp.ne.s32.totalorder %s226, %s229
      %p238 = scmp.eq.s32.totalorder %s27, 1
      %p239 = por %p237, %p238
      %p240 = scmp.ne.s32.totalorder %s229, %s230
      %p241 = scmp.eq.s32.totalorder %s27, 0
      %p242 = por %p240, %p241
      %p243 = scmp.ne.s32.totalorder %s229, %s230
      %p244 = scmp.eq.s32.totalorder %s28, 1
      %p245 = por %p243, %p244
      %p247 = scmp.ne.s32.totalorder %s230, %s246
      %p248 = scmp.eq.s32.totalorder %s28, 0
      %p249 = por %p247, %p248
      %s250 = ssub.s32 %s30, %s37
      %p251 = scmp.eq.s32.totalorder %s250, 0
      %s253 = sadd.s32 %s252, 1
      %s254 = scalar_select %p251, %s252, %s253
      %p257 = pneg %p251
      %p258 = scmp.eq.s32.totalorder %s22, 1
      %p259 = por %p257, %p258
      %p260 = scmp.ne.s32.totalorder %s252, %s255
      %p261 = scmp.eq.s32.totalorder %s22, 0
      %p262 = por %p260, %p261
      %p263 = scmp.ne.s32.totalorder %s252, %s255
      %p264 = scmp.eq.s32.totalorder %s27, 1
      %p265 = por %p263, %p264
      %p266 = scmp.ne.s32.totalorder %s255, %s256
      %p267 = scmp.eq.s32.totalorder %s27, 0
      %p268 = por %p266, %p267
      %p269 = scmp.ne.s32.totalorder %s255, %s256
      %p270 = scmp.eq.s32.totalorder %s28, 1
      %p271 = por %p269, %p270
      %p273 = scmp.ne.s32.totalorder %s256, %s272
      %p274 = scmp.eq.s32.totalorder %s28, 0
      %p275 = por %p273, %p274
      %s276 = ssub.s32 %s30, %s37
      %p277 = scmp.eq.s32.totalorder %s276, 0
      %s279 = sadd.s32 %s278, 1
      %s280 = scalar_select %p277, %s278, %s279
      %p283 = pneg %p277
      %p284 = scmp.eq.s32.totalorder %s22, 1
      %p285 = por %p283, %p284
      %p286 = scmp.ne.s32.totalorder %s278, %s281
      %p287 = scmp.eq.s32.totalorder %s22, 0
      %p288 = por %p286, %p287
      %p289 = scmp.ne.s32.totalorder %s278, %s281
      %p290 = scmp.eq.s32.totalorder %s27, 1
      %p291 = por %p289, %p290
      %p292 = scmp.ne.s32.totalorder %s281, %s282
      %p293 = scmp.eq.s32.totalorder %s27, 0
      %p294 = por %p292, %p293
      %p295 = scmp.ne.s32.totalorder %s281, %s282
      %p296 = scmp.eq.s32.totalorder %s28, 1
      %p297 = por %p295, %p296
      %p299 = scmp.ne.s32.totalorder %s282, %s298
      %p300 = scmp.eq.s32.totalorder %s28, 0
      %p301 = por %p299, %p300
      %s302 = ssub.s32 %s30, %s37
      %p303 = scmp.eq.s32.totalorder %s302, 0
      %s305 = sadd.s32 %s304, 1
      %s306 = scalar_select %p303, %s304, %s305
      %p309 = pneg %p303
      %p310 = scmp.eq.s32.totalorder %s22, 1
      %p311 = por %p309, %p310
      %p312 = scmp.ne.s32.totalorder %s304, %s307
      %p313 = scmp.eq.s32.totalorder %s22, 0
      %p314 = por %p312, %p313
      %p315 = scmp.ne.s32.totalorder %s304, %s307
      %p316 = scmp.eq.s32.totalorder %s27, 1
      %p317 = por %p315, %p316
      %p318 = scmp.ne.s32.totalorder %s307, %s308
      %p319 = scmp.eq.s32.totalorder %s27, 0
      %p320 = por %p318, %p319
      %p321 = scmp.ne.s32.totalorder %s307, %s308
      %p322 = scmp.eq.s32.totalorder %s28, 1
      %p323 = por %p321, %p322
      %p325 = scmp.ne.s32.totalorder %s308, %s324
      %p326 = scmp.eq.s32.totalorder %s28, 0
      %p327 = por %p325, %p326
      %s328 = ssub.s32 %s30, %s37
      %p329 = scmp.eq.s32.totalorder %s328, 0
      %s331 = sadd.s32 %s330, 1
      %s332 = scalar_select %p329, %s330, %s331
      %p335 = pneg %p329
      %p336 = scmp.eq.s32.totalorder %s22, 1
      %p337 = por %p335, %p336
      %p338 = scmp.ne.s32.totalorder %s330, %s333
      %p339 = scmp.eq.s32.totalorder %s22, 0
      %p340 = por %p338, %p339
      %p341 = scmp.ne.s32.totalorder %s330, %s333
      %p342 = scmp.eq.s32.totalorder %s27, 1
      %p343 = por %p341, %p342
      %p344 = scmp.ne.s32.totalorder %s333, %s334
      %p345 = scmp.eq.s32.totalorder %s27, 0
      %p346 = por %p344, %p345
      %p347 = scmp.ne.s32.totalorder %s333, %s334
      %p348 = scmp.eq.s32.totalorder %s28, 1
      %p349 = por %p347, %p348
      %p351 = scmp.ne.s32.totalorder %s334, %s350
      %p352 = scmp.eq.s32.totalorder %s28, 0
      %p353 = por %p351, %p352
      %s354 = ssub.s32 %s30, %s37
      %p355 = scmp.eq.s32.totalorder %s354, 0
      %s357 = sadd.s32 %s356, 1
      %s358 = scalar_select %p355, %s356, %s357
      %p361 = pneg %p355
      %p362 = scmp.eq.s32.totalorder %s22, 1
      %p363 = por %p361, %p362
      %p364 = scmp.ne.s32.totalorder %s356, %s359
      %p365 = scmp.eq.s32.totalorder %s22, 0
      %p366 = por %p364, %p365
      %p367 = scmp.ne.s32.totalorder %s356, %s359
      %p368 = scmp.eq.s32.totalorder %s27, 1
      %p369 = por %p367, %p368
      %p370 = scmp.ne.s32.totalorder %s359, %s360
      %p371 = scmp.eq.s32.totalorder %s27, 0
      %p372 = por %p370, %p371
      %p373 = scmp.ne.s32.totalorder %s359, %s360
      %p374 = scmp.eq.s32.totalorder %s28, 1
      %p375 = por %p373, %p374
      %p377 = scmp.ne.s32.totalorder %s360, %s376
      %p378 = scmp.eq.s32.totalorder %s28, 0
      %p379 = por %p377, %p378
      %s380 = ssub.s32 %s29, %s41
      %p381 = scmp.eq.s32.totalorder %s380, 0
      %s383 = sadd.s32 %s382, 1
      %s384 = scalar_select %p381, %s382, %s383
      %p387 = pneg %p381
      %p388 = scmp.eq.s32.totalorder %s22, 1
      %p389 = por %p387, %p388
      %p390 = scmp.ne.s32.totalorder %s382, %s385
      %p391 = scmp.eq.s32.totalorder %s22, 0
      %p392 = por %p390, %p391
      %p393 = scmp.ne.s32.totalorder %s382, %s385
      %p394 = scmp.eq.s32.totalorder %s27, 1
      %p395 = por %p393, %p394
      %p396 = scmp.ne.s32.totalorder %s385, %s386
      %p397 = scmp.eq.s32.totalorder %s27, 0
      %p398 = por %p396, %p397
      %p399 = scmp.ne.s32.totalorder %s385, %s386
      %p400 = scmp.eq.s32.totalorder %s28, 1
      %p401 = por %p399, %p400
      %p403 = scmp.ne.s32.totalorder %s386, %s402
      %p404 = scmp.eq.s32.totalorder %s28, 0
      %p405 = por %p403, %p404
      %p406 = scmp.le.s32.totalorder 1, %s22
      %p407 = scmp.lt.s32.totalorder %s22, 3
      %p408 = pnand %p406, %p407
      %p409 = pneg %p408
      // Predicated region
      $region9: #{tpu_custom_call.1} parent=5 // pred_check
        _
      $region10: #{tpu_custom_call.1} parent=5 // pred_check_branch
        %411 = sbr.rel (%p408) target = $region12
      $region11: #{tpu_custom_call.1} parent=5 // pred_region
        %s412 = ssub.s32 %s22, 1
        // Predicated region
        $region13: #{tpu_custom_call.1} parent=11 // pred_check
          %p413 = pneg %p60
        $region14: #{tpu_custom_call.1} parent=11 // pred_check_branch
          %415 = sbr.rel (%p413) target = $region16
        $region15: #{tpu_custom_call.1} parent=11 // pred_region
          %s416 = smul.u32 2, %s31
          %s418 = ssub.s32 512, 512
          %419 = vsyncadd [#allocation4], %s418
          %s420 = smul.addr %s416, 2
          %s421 = smul.addr %s420, 128
          %s422 = scalar_lea.hbm %s0, %s421
          %s423 = sshll.u32 [#allocation3], 4
          %s424 = int_to_ptr.vmem [resolvable:$true] %s423
          %429 = dma.hbm_to_vmem [thread:$0]  %s422, 512, %s424, [#allocation4], 128, 128, 8
        $region16: #{tpu_custom_call.1} parent=11 // pred_fallthru
          _
        // Predicated region
        $region17: #{tpu_custom_call.1} parent=11 // pred_check
          %p430 = pneg %p86
        $region18: #{tpu_custom_call.1} parent=11 // pred_check_branch
          %432 = sbr.rel (%p430) target = $region20
        $region19: #{tpu_custom_call.1} parent=11 // pred_region
          %s433 = smul.u32 2, %s31
          %s435 = ssub.s32 2048, 2048
          %436 = vsyncadd [#allocation7], %s435
          %s437 = smul.addr %s433, 8
          %s438 = smul.addr %s437, 128
          %s439 = scalar_lea.hbm %s1, %s438
          %s440 = sshll.u32 [#allocation6], 4
          %s441 = int_to_ptr.vmem [resolvable:$true] %s440
          %446 = dma.hbm_to_vmem [thread:$0]  %s439, 2048, %s441, [#allocation7], 128, 128, 8
        $region20: #{tpu_custom_call.1} parent=11 // pred_fallthru
          _
      $region12: #{tpu_custom_call.1} parent=5 // pred_fallthru
        _
      %p447 = scmp.lt.s32.totalorder %s22, 2
      // Predicated region
      $region21: #{tpu_custom_call.1} parent=5 // pred_check
        %p448 = pneg %p447
      $region22: #{tpu_custom_call.1} parent=5 // pred_check_branch
        %450 = sbr.rel (%p448) target = $region24
      $region23: #{tpu_custom_call.1} parent=5 // pred_region
        // Predicated region
        $region25: #{tpu_custom_call.1} parent=23 // pred_check
          %p451 = pneg %p106
        $region26: #{tpu_custom_call.1} parent=23 // pred_check_branch
          %453 = sbr.rel (%p451) target = $region28
        $region27: #{tpu_custom_call.1} parent=23 // pred_region
          %p454 = scmp.lt.s32.totalorder %s30, 1
          %s455 = scalar_select %p454, %s30, 1
          %s456 = scalar_lea.vmem %s2, %s455
        $region28: #{tpu_custom_call.1} parent=23 // pred_fallthru
          _
        // Predicated region
        $region29: #{tpu_custom_call.1} parent=23 // pred_check
          %p457 = pneg %p132
        $region30: #{tpu_custom_call.1} parent=23 // pred_check_branch
          %459 = sbr.rel (%p457) target = $region32
        $region31: #{tpu_custom_call.1} parent=23 // pred_region
          %p460 = scmp.lt.s32.totalorder %s30, 1
          %s461 = scalar_select %p460, %s30, 1
          %s462 = scalar_lea.vmem %s3, %s461
        $region32: #{tpu_custom_call.1} parent=23 // pred_fallthru
          _
        // Predicated region
        $region33: #{tpu_custom_call.1} parent=23 // pred_check
          %p463 = pneg %p158
        $region34: #{tpu_custom_call.1} parent=23 // pred_check_branch
          %465 = sbr.rel (%p463) target = $region36
        $region35: #{tpu_custom_call.1} parent=23 // pred_region
          %s466 = sand.u32 %s22, 1
          %s467 = scalar_lea.sflag [#allocation4], %s466
          %s468 = sand.u32 %s148, 1
          %s469 = smul.addr %s468, 192
          %s470 = scalar_lea.vmem [#allocation8], %s469
          %s472 = ssub.s32 3072, 3072
          %473 = vsyncadd %s467, %s472
          %s474 = smul.addr %s30, 48
          %s475 = smul.addr %s474, 64
          %s476 = scalar_lea.hbm %s4, %s475
          %s477 = sshll.u32 %s470, 4
          %s478 = int_to_ptr.vmem [resolvable:$true] %s477
          %483 = dma.hbm_to_vmem [thread:$0]  %s476, 3072, %s478, %s467, 192, 192, 12
        $region36: #{tpu_custom_call.1} parent=23 // pred_fallthru
          _
        // Predicated region
        $region37: #{tpu_custom_call.1} parent=23 // pred_check
          %p484 = pneg %p184
        $region38: #{tpu_custom_call.1} parent=23 // pred_check_branch
          %486 = sbr.rel (%p484) target = $region40
        $region39: #{tpu_custom_call.1} parent=23 // pred_region
          %s487 = sand.u32 %s22, 1
          %s488 = scalar_lea.sflag [#allocation4], %s487
          %s489 = sand.u32 %s174, 1
          %s490 = smul.addr %s489, 64
          %s491 = scalar_lea.vmem [#allocation9], %s490
          %s493 = ssub.s32 1024, 1024
          %494 = vsyncadd %s488, %s493
          %s495 = smul.addr %s30, 16
          %s496 = smul.addr %s495, 64
          %s497 = scalar_lea.hbm %s5, %s496
          %s498 = sshll.u32 %s491, 4
          %s499 = int_to_ptr.vmem [resolvable:$true] %s498
          %504 = dma.hbm_to_vmem [thread:$0]  %s497, 1024, %s499, %s488, 64, 64, 4
        $region40: #{tpu_custom_call.1} parent=23 // pred_fallthru
          _
        // Predicated region
        $region41: #{tpu_custom_call.1} parent=23 // pred_check
          %p505 = pneg %p210
        $region42: #{tpu_custom_call.1} parent=23 // pred_check_branch
          %507 = sbr.rel (%p505) target = $region44
        $region43: #{tpu_custom_call.1} parent=23 // pred_region
          %p508 = scmp.lt.s32.totalorder %s30, 1
          %s509 = scalar_select %p508, %s30, 1
          %s510 = scalar_lea.vmem %s6, %s509
        $region44: #{tpu_custom_call.1} parent=23 // pred_fallthru
          _
        // Predicated region
        $region45: #{tpu_custom_call.1} parent=23 // pred_check
          %p511 = pneg %p236
        $region46: #{tpu_custom_call.1} parent=23 // pred_check_branch
          %513 = sbr.rel (%p511) target = $region48
        $region47: #{tpu_custom_call.1} parent=23 // pred_region
          %p514 = scmp.lt.s32.totalorder %s30, 1
          %s515 = scalar_select %p514, %s30, 1
          %s516 = scalar_lea.vmem %s7, %s515
        $region48: #{tpu_custom_call.1} parent=23 // pred_fallthru
          _
        // Predicated region
        $region49: #{tpu_custom_call.1} parent=23 // pred_check
          %p517 = pneg %p262
        $region50: #{tpu_custom_call.1} parent=23 // pred_check_branch
          %519 = sbr.rel (%p517) target = $region52
        $region51: #{tpu_custom_call.1} parent=23 // pred_region
          %p520 = scmp.lt.s32.totalorder %s30, 1
          %s521 = scalar_select %p520, %s30, 1
          %s522 = scalar_lea.vmem %s8, %s521
        $region52: #{tpu_custom_call.1} parent=23 // pred_fallthru
          _
        // Predicated region
        $region53: #{tpu_custom_call.1} parent=23 // pred_check
          %p523 = pneg %p288
        $region54: #{tpu_custom_call.1} parent=23 // pred_check_branch
          %525 = sbr.rel (%p523) target = $region56
        $region55: #{tpu_custom_call.1} parent=23 // pred_region
          %s526 = sand.u32 %s22, 1
          %s527 = scalar_lea.sflag [#allocation4], %s526
          %s528 = sand.u32 %s278, 1
          %s529 = smul.addr %s528, 128
          %s530 = scalar_lea.vmem [#allocation10], %s529
          %s532 = ssub.s32 2048, 2048
          %533 = vsyncadd %s527, %s532
          %s534 = smul.addr %s30, 32
          %s535 = smul.addr %s534, 64
          %s536 = scalar_lea.hbm %s9, %s535
          %s537 = sshll.u32 %s530, 4
          %s538 = int_to_ptr.vmem [resolvable:$true] %s537
          %543 = dma.hbm_to_vmem [thread:$0]  %s536, 2048, %s538, %s527, 128, 128, 8
        $region56: #{tpu_custom_call.1} parent=23 // pred_fallthru
          _
        // Predicated region
        $region57: #{tpu_custom_call.1} parent=23 // pred_check
          %p544 = pneg %p314
        $region58: #{tpu_custom_call.1} parent=23 // pred_check_branch
          %546 = sbr.rel (%p544) target = $region60
        $region59: #{tpu_custom_call.1} parent=23 // pred_region
          %p547 = scmp.lt.s32.totalorder %s30, 1
          %s548 = scalar_select %p547, %s30, 1
          %s549 = smul.addr %s548, 2
          %s550 = scalar_lea.vmem %s10, %s549
        $region60: #{tpu_custom_call.1} parent=23 // pred_fallthru
          _
        // Predicated region
        $region61: #{tpu_custom_call.1} parent=23 // pred_check
          %p551 = pneg %p340
        $region62: #{tpu_custom_call.1} parent=23 // pred_check_branch
          %553 = sbr.rel (%p551) target = $region64
        $region63: #{tpu_custom_call.1} parent=23 // pred_region
          %s554 = sand.u32 %s22, 1
          %s555 = scalar_lea.sflag [#allocation4], %s554
          %s556 = sand.u32 %s330, 1
          %s557 = smul.addr %s556, 128
          %s558 = scalar_lea.vmem [#allocation11], %s557
          %s560 = ssub.s32 2048, 2048
          %561 = vsyncadd %s555, %s560
          %s562 = smul.addr %s30, 32
          %s563 = smul.addr %s562, 64
          %s564 = scalar_lea.hbm %s11, %s563
          %s565 = sshll.u32 %s558, 4
          %s566 = int_to_ptr.vmem [resolvable:$true] %s565
          %571 = dma.hbm_to_vmem [thread:$0]  %s564, 2048, %s566, %s555, 64, 64, 4
        $region64: #{tpu_custom_call.1} parent=23 // pred_fallthru
          _
        // Predicated region
        $region65: #{tpu_custom_call.1} parent=23 // pred_check
          %p572 = pneg %p366
        $region66: #{tpu_custom_call.1} parent=23 // pred_check_branch
          %574 = sbr.rel (%p572) target = $region68
        $region67: #{tpu_custom_call.1} parent=23 // pred_region
          %p575 = scmp.lt.s32.totalorder %s30, 1
          %s576 = scalar_select %p575, %s30, 1
          %s577 = scalar_lea.vmem %s12, %s576
        $region68: #{tpu_custom_call.1} parent=23 // pred_fallthru
          _
      $region24: #{tpu_custom_call.1} parent=5 // pred_fallthru
        _
      %p578 = scmp.le.s32.totalorder 1, %s22
      %p579 = scmp.lt.s32.totalorder %s22, 3
      %p580 = pnand %p578, %p579
      %p581 = pneg %p580
      // Predicated region
      $region69: #{tpu_custom_call.1} parent=5 // pred_check
        _
      $region70: #{tpu_custom_call.1} parent=5 // pred_check_branch
        %583 = sbr.rel (%p580) target = $region72
      $region71: #{tpu_custom_call.1} parent=5 // pred_region
        %s584 = ssub.s32 %s22, 1
        // Predicated region
        $region73: #{tpu_custom_call.1} parent=71 // pred_check
          %p585 = pneg %p60
        $region74: #{tpu_custom_call.1} parent=71 // pred_check_branch
          %587 = sbr.rel (%p585) target = $region76
        $region75: #{tpu_custom_call.1} parent=71 // pred_region
          %588 = dma.done [#allocation4], 512
        $region76: #{tpu_custom_call.1} parent=71 // pred_fallthru
          _
        // Predicated region
        $region77: #{tpu_custom_call.1} parent=71 // pred_check
          %p589 = pneg %p86
        $region78: #{tpu_custom_call.1} parent=71 // pred_check_branch
          %591 = sbr.rel (%p589) target = $region80
        $region79: #{tpu_custom_call.1} parent=71 // pred_region
          %592 = dma.done [#allocation7], 2048
        $region80: #{tpu_custom_call.1} parent=71 // pred_fallthru
          _
        %s593 = sand.u32 %s27, 1
        %s594 = scalar_lea.sflag [#allocation4], %s593
        %s595 = sand.u32 %s151, 1
        %s596 = smul.addr %s595, 192
        %s597 = scalar_lea.vmem [#allocation8], %s596
        // Predicated region
        $region81: #{tpu_custom_call.1} parent=71 // pred_check
          %p598 = pneg %p164
        $region82: #{tpu_custom_call.1} parent=71 // pred_check_branch
          %600 = sbr.rel (%p598) target = $region84
        $region83: #{tpu_custom_call.1} parent=71 // pred_region
          %601 = dma.done %s594, 3072
        $region84: #{tpu_custom_call.1} parent=71 // pred_fallthru
          _
        %s602 = sand.u32 %s27, 1
        %s603 = scalar_lea.sflag [#allocation4], %s602
        %s604 = sand.u32 %s177, 1
        %s605 = smul.addr %s604, 64
        %s606 = scalar_lea.vmem [#allocation9], %s605
        // Predicated region
        $region85: #{tpu_custom_call.1} parent=71 // pred_check
          %p607 = pneg %p190
        $region86: #{tpu_custom_call.1} parent=71 // pred_check_branch
          %609 = sbr.rel (%p607) target = $region88
        $region87: #{tpu_custom_call.1} parent=71 // pred_region
          %610 = dma.done %s603, 1024
        $region88: #{tpu_custom_call.1} parent=71 // pred_fallthru
          _
        %s611 = sand.u32 %s27, 1
        %s612 = scalar_lea.sflag [#allocation4], %s611
        %s613 = sand.u32 %s281, 1
        %s614 = smul.addr %s613, 128
        %s615 = scalar_lea.vmem [#allocation10], %s614
        // Predicated region
        $region89: #{tpu_custom_call.1} parent=71 // pred_check
          %p616 = pneg %p294
        $region90: #{tpu_custom_call.1} parent=71 // pred_check_branch
          %618 = sbr.rel (%p616) target = $region92
        $region91: #{tpu_custom_call.1} parent=71 // pred_region
          %619 = dma.done %s612, 2048
        $region92: #{tpu_custom_call.1} parent=71 // pred_fallthru
          _
        %s620 = sand.u32 %s27, 1
        %s621 = scalar_lea.sflag [#allocation4], %s620
        %s622 = sand.u32 %s333, 1
        %s623 = smul.addr %s622, 128
        %s624 = scalar_lea.vmem [#allocation11], %s623
        // Predicated region
        $region93: #{tpu_custom_call.1} parent=71 // pred_check
          %p625 = pneg %p346
        $region94: #{tpu_custom_call.1} parent=71 // pred_check_branch
          %627 = sbr.rel (%p625) target = $region96
        $region95: #{tpu_custom_call.1} parent=71 // pred_region
          %628 = dma.done %s621, 2048
        $region96: #{tpu_custom_call.1} parent=71 // pred_fallthru
          _
        %p629 = pneg %p60
        %p630 = pneg %p57
        %p631 = pneg %p86
        %p632 = pneg %p83
        %p633 = scmp.lt.s32.totalorder %s32, 1
        %s634 = scalar_select %p633, %s32, 1
        %s635 = scalar_lea.vmem %s2, %s634
        %p636 = pneg %p112
        %p637 = pneg %p109
        %p638 = scmp.lt.s32.totalorder %s32, 1
        %s639 = scalar_select %p638, %s32, 1
        %s640 = scalar_lea.vmem %s3, %s639
        %p641 = pneg %p138
        %p642 = pneg %p135
        %s643 = sand.u32 %s27, 1
        %s644 = scalar_lea.sflag [#allocation4], %s643
        %s645 = sand.u32 %s151, 1
        %s646 = smul.addr %s645, 192
        %s647 = scalar_lea.vmem [#allocation8], %s646
        %p648 = pneg %p164
        %p649 = pneg %p161
        %s650 = sand.u32 %s27, 1
        %s651 = scalar_lea.sflag [#allocation4], %s650
        %s652 = sand.u32 %s177, 1
        %s653 = smul.addr %s652, 64
        %s654 = scalar_lea.vmem [#allocation9], %s653
        %p655 = pneg %p190
        %p656 = pneg %p187
        %p657 = scmp.lt.s32.totalorder %s32, 1
        %s658 = scalar_select %p657, %s32, 1
        %s659 = scalar_lea.vmem %s6, %s658
        %p660 = pneg %p216
        %p661 = pneg %p213
        %p662 = scmp.lt.s32.totalorder %s32, 1
        %s663 = scalar_select %p662, %s32, 1
        %s664 = scalar_lea.vmem %s7, %s663
        %p665 = pneg %p242
        %p666 = pneg %p239
        %p667 = scmp.lt.s32.totalorder %s32, 1
        %s668 = scalar_select %p667, %s32, 1
        %s669 = scalar_lea.vmem %s8, %s668
        %p670 = pneg %p268
        %p671 = pneg %p265
        %s672 = sand.u32 %s27, 1
        %s673 = scalar_lea.sflag [#allocation4], %s672
        %s674 = sand.u32 %s281, 1
        %s675 = smul.addr %s674, 128
        %s676 = scalar_lea.vmem [#allocation10], %s675
        %p677 = pneg %p294
        %p678 = pneg %p291
        %p679 = scmp.lt.s32.totalorder %s32, 1
        %s680 = scalar_select %p679, %s32, 1
        %s681 = smul.addr %s680, 2
        %s682 = scalar_lea.vmem %s10, %s681
        %p683 = pneg %p320
        %p684 = pneg %p317
        %s685 = sand.u32 %s27, 1
        %s686 = scalar_lea.sflag [#allocation4], %s685
        %s687 = sand.u32 %s333, 1
        %s688 = smul.addr %s687, 128
        %s689 = scalar_lea.vmem [#allocation11], %s688
        %p690 = pneg %p346
        %p691 = pneg %p343
        %p692 = scmp.lt.s32.totalorder %s32, 1
        %s693 = scalar_select %p692, %s32, 1
        %s694 = scalar_lea.vmem %s12, %s693
        %p695 = pneg %p372
        %p696 = pneg %p369
        %p697 = pneg %p398
        %p698 = pneg %p395
        %s699 = smul.u32 2, %s31
        %s700 = smul.u32 2, %s31
        %p701 = scmp.lt.s32.totalorder %s32, 1
        %s702 = scalar_select %p701, %s32, 1
        %s703 = scalar_lea.vmem %s2, %s702
        %p704 = scmp.lt.s32.totalorder %s32, 1
        %s705 = scalar_select %p704, %s32, 1
        %s706 = scalar_lea.vmem %s3, %s705
        %p707 = scmp.lt.s32.totalorder %s32, 1
        %s708 = scalar_select %p707, %s32, 1
        %s709 = scalar_lea.vmem %s6, %s708
        %p710 = scmp.lt.s32.totalorder %s32, 1
        %s711 = scalar_select %p710, %s32, 1
        %s712 = scalar_lea.vmem %s7, %s711
        %p713 = scmp.lt.s32.totalorder %s32, 1
        %s714 = scalar_select %p713, %s32, 1
        %s715 = scalar_lea.vmem %s8, %s714
        %p716 = scmp.lt.s32.totalorder %s32, 1
        %s717 = scalar_select %p716, %s32, 1
        %s718 = smul.addr %s717, 2
        %s719 = scalar_lea.vmem %s10, %s718
        %p720 = scmp.lt.s32.totalorder %s32, 1
        %s721 = scalar_select %p720, %s32, 1
        %s722 = scalar_lea.vmem %s12, %s721
        %s723 = smul.u32 2, %s31
        %p725 = scmp.eq.s32.totalorder %s32, 0
        // Predicated region
        $region97: #{tpu_custom_call.1} parent=71 // pred_check
          %p726 = pneg %p725
        $region98: #{tpu_custom_call.1} parent=71 // pred_check_branch
          %728 = sbr.rel (%p726) target = $region100
        $region99: #{tpu_custom_call.1} parent=71 // pred_region
          %v729 = vld [vmem:[#allocation3] sm:$0xff]
          %v730 = vld [vmem:[#allocation3 + $0x8] sm:$0xff]
          %v731 = vld [vmem:[#allocation3 + $0x10] sm:$0xff]
          %v732 = vld [vmem:[#allocation3 + $0x18] sm:$0xff]
          %733 = vst [vmem:[#allocation2] sm:$0xff] %v729
          %734 = vst [vmem:[#allocation2 + $0x8] sm:$0xff] %v730
          %735 = vst [vmem:[#allocation2 + $0x10] sm:$0xff] %v731
          %736 = vst [vmem:[#allocation2 + $0x18] sm:$0xff] %v732
        $region100: #{tpu_custom_call.1} parent=71 // pred_fallthru
          _
        %v737 = vld [vmem:[#allocation2] sm:$0xff]
        %v738 = vld [vmem:[#allocation2 + $0x8] sm:$0xff]
        %v739 = vld [vmem:[#allocation2 + $0x10] sm:$0xff]
        %v740 = vld [vmem:[#allocation2 + $0x18] sm:$0xff]
        %v741 = vld [vmem:[%s703] sm:$0x1]
        %v742 = vld [vmem:[%s706] sm:$0x1]
        %743 = vadd.xlane.f32.xlu0 %v737
        %v744 = vpop.xlane.xlu0 %743
        %745 = vadd.xlane.f32.xlu0 %v738
        %v746 = vpop.xlane.xlu0 %745
        %747 = vadd.xlane.f32.xlu0 %v739
        %v748 = vpop.xlane.xlu0 %747
        %749 = vadd.xlane.f32.xlu0 %v740
        %v750 = vpop.xlane.xlu0 %749
        %v751 = vrcp.pop 128.0
        %v752 = vmul.f32 %v744, %v751
        %v753 = vmul.f32 %v746, %v751
        %v754 = vmul.f32 %v748, %v751
        %v755 = vmul.f32 %v750, %v751
        %v756 = vsub.f32 %v737, %v752
        %v757 = vsub.f32 %v738, %v753
        %v758 = vsub.f32 %v739, %v754
        %v759 = vsub.f32 %v740, %v755
        %v760 = vmul.f32 %v756, %v756
        %v761 = vmul.f32 %v757, %v757
        %v762 = vmul.f32 %v758, %v758
        %v763 = vmul.f32 %v759, %v759
        %764 = vadd.xlane.f32.xlu0 %v760
        %v765 = vpop.xlane.xlu0 %764
        %766 = vadd.xlane.f32.xlu0 %v761
        %v767 = vpop.xlane.xlu0 %766
        %768 = vadd.xlane.f32.xlu0 %v762
        %v769 = vpop.xlane.xlu0 %768
        %770 = vadd.xlane.f32.xlu0 %v763
        %v771 = vpop.xlane.xlu0 %770
        %v772 = vmul.f32 %v765, %v751
        %v773 = vmul.f32 %v767, %v751
        %v774 = vmul.f32 %v769, %v751
        %v775 = vmul.f32 %v771, %v751
        %v776 = vadd.f32 %v772, 1e-05
        %v777 = vadd.f32 %v773, 1e-05
        %v778 = vadd.f32 %v774, 1e-05
        %v779 = vadd.f32 %v775, 1e-05
        %v780 = vrsqrt.pop %v776
        %v781 = vrsqrt.pop %v777
        %v782 = vrsqrt.pop %v778
        %v783 = vrsqrt.pop %v779
        %v784 = vmul.f32 %v756, %v780
        %v785 = vmul.f32 %v757, %v781
        %v786 = vmul.f32 %v758, %v782
        %v787 = vmul.f32 %v759, %v783
        %v789 = vlaneseq
        %v790 = vshrl.u32 %v789, 7
        %v791 = vsub.s32 0, %v790
        %v792 = vrot.slane %v741, %v791
        %v794 = vmul.f32 %v784, %v792
        %v795 = vmul.f32 %v785, %v792
        %v796 = vmul.f32 %v786, %v792
        %v797 = vmul.f32 %v787, %v792
        %v799 = vlaneseq
        %v800 = vshrl.u32 %v799, 7
        %v801 = vsub.s32 0, %v800
        %v802 = vrot.slane %v742, %v801
        %v804 = vadd.f32 %v794, %v802
        %v805 = vadd.f32 %v795, %v802
        %v806 = vadd.f32 %v796, %v802
        %v807 = vadd.f32 %v797, %v802
        %v808 = vpack.c.bf16 %v805, %v804
        %v809 = vpack.c.bf16 %v807, %v806
        %v810 = vld [vmem:[%s597] sm:$0xff]
        %v811 = vld [vmem:[%s597 + $0x8] sm:$0xf]
        %v812 = vld [vmem:[%s597 + $0xc] sm:$0xff]
        %v813 = vld [vmem:[%s597 + $0x14] sm:$0xf]
        %v814 = vld [vmem:[%s597 + $0x18] sm:$0xff]
        %v815 = vld [vmem:[%s597 + $0x20] sm:$0xf]
        %v816 = vld [vmem:[%s597 + $0x24] sm:$0xff]
        %v817 = vld [vmem:[%s597 + $0x2c] sm:$0xf]
        %v818 = vld [vmem:[%s597 + $0x30] sm:$0xff]
        %v819 = vld [vmem:[%s597 + $0x38] sm:$0xf]
        %v820 = vld [vmem:[%s597 + $0x3c] sm:$0xff]
        %v821 = vld [vmem:[%s597 + $0x44] sm:$0xf]
        %v822 = vld [vmem:[%s597 + $0x48] sm:$0xff]
        %v823 = vld [vmem:[%s597 + $0x50] sm:$0xf]
        %v824 = vld [vmem:[%s597 + $0x54] sm:$0xff]
        %v825 = vld [vmem:[%s597 + $0x5c] sm:$0xf]
        %v826 = vld [vmem:[%s597 + $0x60] sm:$0xff]
        %v827 = vld [vmem:[%s597 + $0x68] sm:$0xf]
        %v828 = vld [vmem:[%s597 + $0x6c] sm:$0xff]
        %v829 = vld [vmem:[%s597 + $0x74] sm:$0xf]
        %v830 = vld [vmem:[%s597 + $0x78] sm:$0xff]
        %v831 = vld [vmem:[%s597 + $0x80] sm:$0xf]
        %v832 = vld [vmem:[%s597 + $0x84] sm:$0xff]
        %v833 = vld [vmem:[%s597 + $0x8c] sm:$0xf]
        %v834 = vld [vmem:[%s597 + $0x90] sm:$0xff]
        %v835 = vld [vmem:[%s597 + $0x98] sm:$0xf]
        %v836 = vld [vmem:[%s597 + $0x9c] sm:$0xff]
        %v837 = vld [vmem:[%s597 + $0xa4] sm:$0xf]
        %v838 = vld [vmem:[%s597 + $0xa8] sm:$0xff]
        %v839 = vld [vmem:[%s597 + $0xb0] sm:$0xf]
        %v840 = vld [vmem:[%s597 + $0xb4] sm:$0xff]
        %v841 = vld [vmem:[%s597 + $0xbc] sm:$0xf]
        %v874 = vunpack.c.l.b16 %v810
        %v875 = vunpack.c.h.b16 %v810
        %v876 = vunpack.c.l.b16 %v811
        %v877 = vunpack.c.l.b16 %v812
        %v878 = vunpack.c.h.b16 %v812
        %v879 = vunpack.c.l.b16 %v813
        %v880 = vunpack.c.l.b16 %v814
        %v881 = vunpack.c.h.b16 %v814
        %v882 = vunpack.c.l.b16 %v815
        %v883 = vunpack.c.l.b16 %v816
        %v884 = vunpack.c.h.b16 %v816
        %v885 = vunpack.c.l.b16 %v817
        %v886 = vunpack.c.l.b16 %v818
        %v887 = vunpack.c.h.b16 %v818
        %v888 = vunpack.c.l.b16 %v819
        %v889 = vunpack.c.l.b16 %v820
        %v890 = vunpack.c.h.b16 %v820
        %v891 = vunpack.c.l.b16 %v821
        %v892 = vunpack.c.l.b16 %v822
        %v893 = vunpack.c.h.b16 %v822
        %v894 = vunpack.c.l.b16 %v823
        %v895 = vunpack.c.l.b16 %v824
        %v896 = vunpack.c.h.b16 %v824
        %v897 = vunpack.c.l.b16 %v825
        %v898 = vunpack.c.l.b16 %v826
        %v899 = vunpack.c.h.b16 %v826
        %v900 = vunpack.c.l.b16 %v827
        %v901 = vunpack.c.l.b16 %v828
        %v902 = vunpack.c.h.b16 %v828
        %v903 = vunpack.c.l.b16 %v829
        %v904 = vunpack.c.l.b16 %v830
        %v905 = vunpack.c.h.b16 %v830
        %v906 = vunpack.c.l.b16 %v831
        %v907 = vunpack.c.l.b16 %v832
        %v908 = vunpack.c.h.b16 %v832
        %v909 = vunpack.c.l.b16 %v833
        %v910 = vunpack.c.l.b16 %v834
        %v911 = vunpack.c.h.b16 %v834
        %v912 = vunpack.c.l.b16 %v835
        %v913 = vunpack.c.l.b16 %v836
        %v914 = vunpack.c.h.b16 %v836
        %v915 = vunpack.c.l.b16 %v837
        %v916 = vunpack.c.l.b16 %v838
        %v917 = vunpack.c.h.b16 %v838
        %v918 = vunpack.c.l.b16 %v839
        %v919 = vunpack.c.l.b16 %v840
        %v920 = vunpack.c.h.b16 %v840
        %v921 = vunpack.c.l.b16 %v841
        %v922 = vpack.c.b16 %v877, %v874
        %v923 = vpack.c.b16 %v878, %v875
        %v924 = vpack.c.b16 %v879, %v876
        %v925 = vpack.c.b16 %v883, %v880
        %v926 = vpack.c.b16 %v884, %v881
        %v927 = vpack.c.b16 %v885, %v882
        %v928 = vpack.c.b16 %v889, %v886
        %v929 = vpack.c.b16 %v890, %v887
        %v930 = vpack.c.b16 %v891, %v888
        %v931 = vpack.c.b16 %v895, %v892
        %v932 = vpack.c.b16 %v896, %v893
        %v933 = vpack.c.b16 %v897, %v894
        %v934 = vpack.c.b16 %v901, %v898
        %v935 = vpack.c.b16 %v902, %v899
        %v936 = vpack.c.b16 %v903, %v900
        %v937 = vpack.c.b16 %v907, %v904
        %v938 = vpack.c.b16 %v908, %v905
        %v939 = vpack.c.b16 %v909, %v906
        %v940 = vpack.c.b16 %v913, %v910
        %v941 = vpack.c.b16 %v914, %v911
        %v942 = vpack.c.b16 %v915, %v912
        %v943 = vpack.c.b16 %v919, %v916
        %v944 = vpack.c.b16 %v920, %v917
        %v945 = vpack.c.b16 %v921, %v918
        %970 = vmatprep.subr.bf16.mxu0 %v923
        %971 = vmatpush1.bf16.msra.mxu0 %v922
        %972 = vmatprep.subr.bf16.mxu0 %v926
        %973 = vmatpush1.bf16.msra.mxu0 %v925
        %974 = vmatprep.subr.bf16.mxu0 %v929
        %975 = vmatpush1.bf16.msra.mxu0 %v928
        %976 = vmatprep.subr.bf16.mxu0 %v932
        %977 = vmatpush1.bf16.msra.mxu0 %v931
        %978 = vmatprep.subr.bf16.mxu0 %v935
        %979 = vmatpush1.bf16.msra.mxu0 %v934
        %980 = vmatprep.subr.bf16.mxu0 %v938
        %981 = vmatpush1.bf16.msra.mxu0 %v937
        %982 = vmatprep.subr.bf16.mxu0 %v941
        %983 = vmatpush1.bf16.msra.mxu0 %v940
        %984 = vmatprep.subr.bf16.mxu0 %v944
        %985 = vmatpush1.bf16.msra.mxu0 %v943
        %986 = vmatprep.subr.bf16.mxu0 0
        %987 = vmatpush1.bf16.msra.mxu0 0
        %988 = vmatprep.subr.bf16.mxu0 0
        %989 = vmatpush1.bf16.msra.mxu0 0
        %990 = vmatprep.subr.bf16.mxu0 0
        %991 = vmatpush1.bf16.msra.mxu0 0
        %992 = vmatprep.subr.bf16.mxu0 0
        %993 = vmatpush1.bf16.msra.mxu0 0
        %994 = vmatprep.subr.bf16.mxu0 0
        %995 = vmatpush1.bf16.msra.mxu0 0
        %996 = vmatprep.subr.bf16.mxu0 0
        %997 = vmatpush1.bf16.msra.mxu0 0
        %998 = vmatprep.subr.bf16.mxu0 0
        %999 = vmatpush1.bf16.msra.mxu0 0
        %1000 = vmatprep.subr.bf16.mxu0 0
        %1001 = vmatpush1.bf16.msra.mxu0 0
        %1002 = vmatprep.mubr.bf16.mxu0 0
        %1003 = vmatmul.mubr.bf16.gmra.mrb[0].mxu0 %v808
        %v1004 = vpop.f32.mrb[0].mxu0
        %v1005 = vadd.f32 0.0, %v1004
        %v1006 = vpop.f32.mrb[0].mxu0
        %v1007 = vadd.f32 0.0, %v1006
        %v1008 = vpop.f32.mrb[0].mxu0
        %v1009 = vadd.f32 0.0, %v1008
        %v1010 = vpop.f32.mrb[0].mxu0
        %v1011 = vadd.f32 0.0, %v1010
        %1012 = vmatprep.mubr.bf16.mxu0 0
        %1013 = vmatmul.mubr.bf16.gmra.mrb[0].mxu0 %v809
        %v1014 = vpop.f32.mrb[0].mxu0
        %v1015 = vadd.f32 0.0, %v1014
        %v1016 = vpop.f32.mrb[0].mxu0
        %v1017 = vadd.f32 0.0, %v1016
        %v1018 = vpop.f32.mrb[0].mxu0
        %v1019 = vadd.f32 0.0, %v1018
        %v1020 = vpop.f32.mrb[0].mxu0
        %v1021 = vadd.f32 0.0, %v1020
        %1022 = vdwg.mxu0
        %1023 = vmatprep.subr.bf16.mxu0 0
        %1024 = vmatpush1.bf16.msra.mxu0 %v924
        %1025 = vmatprep.subr.bf16.mxu0 0
        %1026 = vmatpush1.bf16.msra.mxu0 %v927
        %1027 = vmatprep.subr.bf16.mxu0 0
        %1028 = vmatpush1.bf16.msra.mxu0 %v930
        %1029 = vmatprep.subr.bf16.mxu0 0
        %1030 = vmatpush1.bf16.msra.mxu0 %v933
        %1031 = vmatprep.subr.bf16.mxu0 0
        %1032 = vmatpush1.bf16.msra.mxu0 %v936
        %1033 = vmatprep.subr.bf16.mxu0 0
        %1034 = vmatpush1.bf16.msra.mxu0 %v939
        %1035 = vmatprep.subr.bf16.mxu0 0
        %1036 = vmatpush1.bf16.msra.mxu0 %v942
        %1037 = vmatprep.subr.bf16.mxu0 0
        %1038 = vmatpush1.bf16.msra.mxu0 %v945
        %1039 = vmatprep.subr.bf16.mxu0 0
        %1040 = vmatpush1.bf16.msra.mxu0 0
        %1041 = vmatprep.subr.bf16.mxu0 0
        %1042 = vmatpush1.bf16.msra.mxu0 0
        %1043 = vmatprep.subr.bf16.mxu0 0
        %1044 = vmatpush1.bf16.msra.mxu0 0
        %1045 = vmatprep.subr.bf16.mxu0 0
        %1046 = vmatpush1.bf16.msra.mxu0 0
        %1047 = vmatprep.subr.bf16.mxu0 0
        %1048 = vmatpush1.bf16.msra.mxu0 0
        %1049 = vmatprep.subr.bf16.mxu0 0
        %1050 = vmatpush1.bf16.msra.mxu0 0
        %1051 = vmatprep.subr.bf16.mxu0 0
        %1052 = vmatpush1.bf16.msra.mxu0 0
        %1053 = vmatprep.subr.bf16.mxu0 0
        %1054 = vmatpush1.bf16.msra.mxu0 0
        %1055 = vmatprep.mubr.bf16.mxu0 0
        %1056 = vmatmul.mubr.bf16.gmra.mrb[0].mxu0 %v808
        %v1057 = vpop.f32.mrb[0].mxu0
        %v1058 = vadd.f32 0.0, %v1057
        %v1059 = vpop.f32.mrb[0].mxu0
        %v1060 = vpop.f32.mrb[0].mxu0
        %v1061 = vadd.f32 0.0, %v1060
        %v1062 = vpop.f32.mrb[0].mxu0
        %1063 = vmatprep.mubr.bf16.mxu0 0
        %1064 = vmatmul.mubr.bf16.gmra.mrb[0].mxu0 %v809
        %v1065 = vpop.f32.mrb[0].mxu0
        %v1066 = vadd.f32 0.0, %v1065
        %v1067 = vpop.f32.mrb[0].mxu0
        %v1068 = vpop.f32.mrb[0].mxu0
        %v1069 = vadd.f32 0.0, %v1068
        %v1070 = vpop.f32.mrb[0].mxu0
        %1071 = vdwg.mxu0
        %v1072 = vmul.f32 %v1005, 0.17677669
        %v1073 = vmul.f32 %v1009, 0.17677669
        %v1074 = vmul.f32 %v1015, 0.17677669
        %v1075 = vmul.f32 %v1019, 0.17677669
        %v1076 = vpack.c.bf16 %v1073, %v1072
        %v1077 = vpack.c.bf16 %v1075, %v1074
        %v1078 = vpack.c.bf16 %v1011, %v1007
        %v1079 = vpack.c.bf16 %v1021, %v1017
        %v1080 = vpack.c.bf16 %v1061, %v1058
        %v1081 = vpack.c.bf16 %v1069, %v1066
        %vm1082 = vcmask 261120
        %v1084 = vsel %vm1082, %v1076, 0
        %v1087 = vsel %vm1082, %v1078, 0
        %1089 = vmatprep.subr.bf16.mxu0 0
        %1090 = vmatpush1.bf16.xpose.msra.mxu0 %v1087
        %1091 = vmatprep.subr.bf16.mxu0 0
        %1092 = vmatpush1.bf16.xpose.msra.mxu0 0
        %1093 = vmatprep.subr.bf16.mxu0 0
        %1094 = vmatpush1.bf16.xpose.msra.mxu0 0
        %1095 = vmatprep.subr.bf16.mxu0 0
        %1096 = vmatpush1.bf16.xpose.msra.mxu0 0
        %1097 = vmatprep.subr.bf16.mxu0 0
        %1098 = vmatpush1.bf16.xpose.msra.mxu0 0
        %1099 = vmatprep.subr.bf16.mxu0 0
        %1100 = vmatpush1.bf16.xpose.msra.mxu0 0
        %1101 = vmatprep.subr.bf16.mxu0 0
        %1102 = vmatpush1.bf16.xpose.msra.mxu0 0
        %1103 = vmatprep.subr.bf16.mxu0 0
        %1104 = vmatpush1.bf16.xpose.msra.mxu0 0
        %1105 = vmatprep.subr.bf16.mxu0 0
        %1106 = vmatpush1.bf16.xpose.msra.mxu0 0
        %1107 = vmatprep.subr.bf16.mxu0 0
        %1108 = vmatpush1.bf16.xpose.msra.mxu0 0
        %1109 = vmatprep.subr.bf16.mxu0 0
        %1110 = vmatpush1.bf16.xpose.msra.mxu0 0
        %1111 = vmatprep.subr.bf16.mxu0 0
        %1112 = vmatpush1.bf16.xpose.msra.mxu0 0
        %1113 = vmatprep.subr.bf16.mxu0 0
        %1114 = vmatpush1.bf16.xpose.msra.mxu0 0
        %1115 = vmatprep.subr.bf16.mxu0 0
        %1116 = vmatpush1.bf16.xpose.msra.mxu0 0
        %1117 = vmatprep.subr.bf16.mxu0 0
        %1118 = vmatpush1.bf16.xpose.msra.mxu0 0
        %1119 = vmatprep.subr.bf16.mxu0 0
        %1120 = vmatpush1.bf16.xpose.msra.mxu0 0
        %1121 = vmatprep.mubr.bf16.mxu0 0
        %1122 = vmatmul.mubr.bf16.gmra.mrb[0].mxu0 %v1084
        %v1123 = vpop.f32.mrb[0].mxu0
        %v1124 = vadd.f32 0.0, %v1123
        %v1125 = vpop.f32.mrb[0].mxu0
        %v1126 = vpop.f32.mrb[0].mxu0
        %v1127 = vadd.f32 0.0, %v1126
        %v1128 = vpop.f32.mrb[0].mxu0
        %1129 = vdwg.mxu0
        %vm1130 = vcmask 130048
        %v1131 = vsel %vm1130, %v1124, -inf
        %1132 = vmax.xlane.f32.xlu0 %v1131
        %v1133 = vpop.xlane.xlu0 %1132
        %v1134 = vsel %vm1130, %v1127, -inf
        %1135 = vmax.xlane.f32.xlu0 %v1134
        %v1136 = vpop.xlane.xlu0 %1135
        %v1137 = vsub.f32 %v1124, %v1133
        %v1138 = vsub.f32 %v1127, %v1136
        %v1139 = vmul.f32 %v1137, 1.442695
        %v1140 = vpow.pop %v1139
        %v1141 = vmul.f32 %v1138, 1.442695
        %v1142 = vpow.pop %v1141
        %v1143 = vsel %vm1130, %v1140, 0.0
        %1144 = vadd.xlane.f32.xlu0 %v1143
        %v1145 = vpop.xlane.xlu0 %1144
        %v1146 = vsel %vm1130, %v1142, 0.0
        %1147 = vadd.xlane.f32.xlu0 %v1146
        %v1148 = vpop.xlane.xlu0 %1147
        %v1149 = vrcp.pop %v1145
        %v1150 = vrcp.pop %v1148
        %v1151 = vmul.f32 %v1140, %v1149
        %v1152 = vmul.f32 %v1142, %v1150
        %v1153 = vld [vmem:[#allocation6] sm:$0xff]
        %v1154 = vld [vmem:[#allocation6 + $0x8] sm:$0xff]
        %v1155 = vmul.f32 %v1153, %v1151
        %v1156 = vmul.f32 %v1154, %v1152
        %v1157 = vpack.c.bf16 %v1156, %v1155
        %v1159 = vsel %vm1130, %v1157, 0
        %1161 = vmatprep.subr.bf16.mxu0 0
        %1162 = vmatpush1.bf16.msra.mxu0 %v1080
        %1163 = vmatprep.subr.bf16.mxu0 0
        %1164 = vmatpush1.bf16.msra.mxu0 0
        %1165 = vmatprep.subr.bf16.mxu0 0
        %1166 = vmatpush1.bf16.msra.mxu0 0
        %1167 = vmatprep.subr.bf16.mxu0 0
        %1168 = vmatpush1.bf16.msra.mxu0 0
        %1169 = vmatprep.subr.bf16.mxu0 0
        %1170 = vmatpush1.bf16.msra.mxu0 0
        %1171 = vmatprep.subr.bf16.mxu0 0
        %1172 = vmatpush1.bf16.msra.mxu0 0
        %1173 = vmatprep.subr.bf16.mxu0 0
        %1174 = vmatpush1.bf16.msra.mxu0 0
        %1175 = vmatprep.subr.bf16.mxu0 0
        %1176 = vmatpush1.bf16.msra.mxu0 0
        %1177 = vmatprep.subr.bf16.mxu0 0
        %1178 = vmatpush1.bf16.msra.mxu0 0
        %1179 = vmatprep.subr.bf16.mxu0 0
        %1180 = vmatpush1.bf16.msra.mxu0 0
        %1181 = vmatprep.subr.bf16.mxu0 0
        %1182 = vmatpush1.bf16.msra.mxu0 0
        %1183 = vmatprep.subr.bf16.mxu0 0
        %1184 = vmatpush1.bf16.msra.mxu0 0
        %1185 = vmatprep.subr.bf16.mxu0 0
        %1186 = vmatpush1.bf16.msra.mxu0 0
        %1187 = vmatprep.subr.bf16.mxu0 0
        %1188 = vmatpush1.bf16.msra.mxu0 0
        %1189 = vmatprep.subr.bf16.mxu0 0
        %1190 = vmatpush1.bf16.msra.mxu0 0
        %1191 = vmatprep.subr.bf16.mxu0 0
        %1192 = vmatpush1.bf16.msra.mxu0 0
        %1193 = vmatprep.mubr.bf16.mxu0 0
        %1194 = vmatmul.mubr.bf16.gmra.mrb[0].mxu0 %v1159
        %v1195 = vpop.f32.mrb[0].mxu0
        %v1196 = vadd.f32 0.0, %v1195
        %v1197 = vpop.f32.mrb[0].mxu0
        %v1198 = vpop.f32.mrb[0].mxu0
        %v1199 = vadd.f32 0.0, %v1198
        %v1200 = vpop.f32.mrb[0].mxu0
        %1201 = vdwg.mxu0
        %v1202 = vpack.c.bf16 %v1199, %v1196
        %v1203 = vld [vmem:[%s606] sm:$0xf]
        %v1204 = vld [vmem:[%s606 + $0x4] sm:$0xf]
        %v1205 = vld [vmem:[%s606 + $0x8] sm:$0xf]
        %v1206 = vld [vmem:[%s606 + $0xc] sm:$0xf]
        %1208 = vrot.lane.b32.xlu0 %v1076, 96
        %v1209 = vpop.permute.xlu0 %1208
        %1211 = vrot.lane.b32.xlu0 %v1078, 96
        %v1212 = vpop.permute.xlu0 %1211
        %v1214 = vsel %vm1082, %v1209, 0
        %v1217 = vsel %vm1082, %v1212, 0
        %1219 = vmatprep.subr.bf16.mxu0 0
        %1220 = vmatpush1.bf16.xpose.msra.mxu0 %v1217
        %1221 = vmatprep.subr.bf16.mxu0 0
        %1222 = vmatpush1.bf16.xpose.msra.mxu0 0
        %1223 = vmatprep.subr.bf16.mxu0 0
        %1224 = vmatpush1.bf16.xpose.msra.mxu0 0
        %1225 = vmatprep.subr.bf16.mxu0 0
        %1226 = vmatpush1.bf16.xpose.msra.mxu0 0
        %1227 = vmatprep.subr.bf16.mxu0 0
        %1228 = vmatpush1.bf16.xpose.msra.mxu0 0
        %1229 = vmatprep.subr.bf16.mxu0 0
        %1230 = vmatpush1.bf16.xpose.msra.mxu0 0
        %1231 = vmatprep.subr.bf16.mxu0 0
        %1232 = vmatpush1.bf16.xpose.msra.mxu0 0
        %1233 = vmatprep.subr.bf16.mxu0 0
        %1234 = vmatpush1.bf16.xpose.msra.mxu0 0
        %1235 = vmatprep.subr.bf16.mxu0 0
        %1236 = vmatpush1.bf16.xpose.msra.mxu0 0
        %1237 = vmatprep.subr.bf16.mxu0 0
        %1238 = vmatpush1.bf16.xpose.msra.mxu0 0
        %1239 = vmatprep.subr.bf16.mxu0 0
        %1240 = vmatpush1.bf16.xpose.msra.mxu0 0
        %1241 = vmatprep.subr.bf16.mxu0 0
        %1242 = vmatpush1.bf16.xpose.msra.mxu0 0
        %1243 = vmatprep.subr.bf16.mxu0 0
        %1244 = vmatpush1.bf16.xpose.msra.mxu0 0
        %1245 = vmatprep.subr.bf16.mxu0 0
        %1246 = vmatpush1.bf16.xpose.msra.mxu0 0
        %1247 = vmatprep.subr.bf16.mxu0 0
        %1248 = vmatpush1.bf16.xpose.msra.mxu0 0
        %1249 = vmatprep.subr.bf16.mxu0 0
        %1250 = vmatpush1.bf16.xpose.msra.mxu0 0
        %1251 = vmatprep.mubr.bf16.mxu0 0
        %1252 = vmatmul.mubr.bf16.gmra.mrb[0].mxu0 %v1214
        %v1253 = vpop.f32.mrb[0].mxu0
        %v1254 = vadd.f32 0.0, %v1253
        %v1255 = vpop.f32.mrb[0].mxu0
        %v1256 = vpop.f32.mrb[0].mxu0
        %v1257 = vadd.f32 0.0, %v1256
        %v1258 = vpop.f32.mrb[0].mxu0
        %1259 = vdwg.mxu0
        %v1260 = vsel %vm1130, %v1254, -inf
        %1261 = vmax.xlane.f32.xlu0 %v1260
        %v1262 = vpop.xlane.xlu0 %1261
        %v1263 = vsel %vm1130, %v1257, -inf
        %1264 = vmax.xlane.f32.xlu0 %v1263
        %v1265 = vpop.xlane.xlu0 %1264
        %v1266 = vsub.f32 %v1254, %v1262
        %v1267 = vsub.f32 %v1257, %v1265
        %v1268 = vmul.f32 %v1266, 1.442695
        %v1269 = vpow.pop %v1268
        %v1270 = vmul.f32 %v1267, 1.442695
        %v1271 = vpow.pop %v1270
        %v1272 = vsel %vm1130, %v1269, 0.0
        %1273 = vadd.xlane.f32.xlu0 %v1272
        %v1274 = vpop.xlane.xlu0 %1273
        %v1275 = vsel %vm1130, %v1271, 0.0
        %1276 = vadd.xlane.f32.xlu0 %v1275
        %v1277 = vpop.xlane.xlu0 %1276
        %v1278 = vrcp.pop %v1274
        %v1279 = vrcp.pop %v1277
        %v1280 = vmul.f32 %v1269, %v1278
        %v1281 = vmul.f32 %v1271, %v1279
        %s1282 = scalar_lea.vmem [#allocation6], 16
        %v1283 = vld [vmem:[%s1282] sm:$0xff]
        %v1284 = vld [vmem:[%s1282 + $0x8] sm:$0xff]
        %v1285 = vmul.f32 %v1283, %v1280
        %v1286 = vmul.f32 %v1284, %v1281
        %v1287 = vpack.c.bf16 %v1286, %v1285
        %1289 = vrot.lane.b32.xlu0 %v1080, 96
        %v1290 = vpop.permute.xlu0 %1289
        %v1293 = vsel %vm1130, %v1287, 0
        %1295 = vmatprep.subr.bf16.mxu0 0
        %1296 = vmatpush1.bf16.msra.mxu0 %v1290
        %1297 = vmatprep.subr.bf16.mxu0 0
        %1298 = vmatpush1.bf16.msra.mxu0 0
        %1299 = vmatprep.subr.bf16.mxu0 0
        %1300 = vmatpush1.bf16.msra.mxu0 0
        %1301 = vmatprep.subr.bf16.mxu0 0
        %1302 = vmatpush1.bf16.msra.mxu0 0
        %1303 = vmatprep.subr.bf16.mxu0 0
        %1304 = vmatpush1.bf16.msra.mxu0 0
        %1305 = vmatprep.subr.bf16.mxu0 0
        %1306 = vmatpush1.bf16.msra.mxu0 0
        %1307 = vmatprep.subr.bf16.mxu0 0
        %1308 = vmatpush1.bf16.msra.mxu0 0
        %1309 = vmatprep.subr.bf16.mxu0 0
        %1310 = vmatpush1.bf16.msra.mxu0 0
        %1311 = vmatprep.subr.bf16.mxu0 0
        %1312 = vmatpush1.bf16.msra.mxu0 0
        %1313 = vmatprep.subr.bf16.mxu0 0
        %1314 = vmatpush1.bf16.msra.mxu0 0
        %1315 = vmatprep.subr.bf16.mxu0 0
        %1316 = vmatpush1.bf16.msra.mxu0 0
        %1317 = vmatprep.subr.bf16.mxu0 0
        %1318 = vmatpush1.bf16.msra.mxu0 0
        %1319 = vmatprep.subr.bf16.mxu0 0
        %1320 = vmatpush1.bf16.msra.mxu0 0
        %1321 = vmatprep.subr.bf16.mxu0 0
        %1322 = vmatpush1.bf16.msra.mxu0 0
        %1323 = vmatprep.subr.bf16.mxu0 0
        %1324 = vmatpush1.bf16.msra.mxu0 0
        %1325 = vmatprep.subr.bf16.mxu0 0
        %1326 = vmatpush1.bf16.msra.mxu0 0
        %1327 = vmatprep.mubr.bf16.mxu0 0
        %1328 = vmatmul.mubr.bf16.gmra.mrb[0].mxu0 %v1293
        %v1329 = vpop.f32.mrb[0].mxu0
        %v1330 = vadd.f32 0.0, %v1329
        %v1331 = vpop.f32.mrb[0].mxu0
        %v1332 = vpop.f32.mrb[0].mxu0
        %v1333 = vadd.f32 0.0, %v1332
        %v1334 = vpop.f32.mrb[0].mxu0
        %1335 = vdwg.mxu0
        %v1336 = vpack.c.bf16 %v1333, %v1330
        %v1337 = vld [vmem:[%s606 + $0x10] sm:$0xf]
        %v1338 = vld [vmem:[%s606 + $0x14] sm:$0xf]
        %v1339 = vld [vmem:[%s606 + $0x18] sm:$0xf]
        %v1340 = vld [vmem:[%s606 + $0x1c] sm:$0xf]
        %v1345 = vunpack.c.l.b16 %v1337
        %v1346 = vunpack.c.l.b16 %v1338
        %v1347 = vunpack.c.l.b16 %v1339
        %v1348 = vunpack.c.l.b16 %v1340
        %v1349 = vpack.c.b16 %v1346, %v1345
        %v1350 = vpack.c.b16 %v1348, %v1347
        %v1354 = vsel %vm1082, %v1336, 0
        %1356 = vmatprep.subr.bf16.mxu0 0
        %1357 = vmatpush1.bf16.msra.mxu0 %v1349
        %1358 = vmatprep.subr.bf16.mxu0 0
        %1359 = vmatpush1.bf16.msra.mxu0 %v1350
        %1360 = vmatprep.subr.bf16.mxu0 0
        %1361 = vmatpush1.bf16.msra.mxu0 0
        %1362 = vmatprep.subr.bf16.mxu0 0
        %1363 = vmatpush1.bf16.msra.mxu0 0
        %1364 = vmatprep.subr.bf16.mxu0 0
        %1365 = vmatpush1.bf16.msra.mxu0 0
        %1366 = vmatprep.subr.bf16.mxu0 0
        %1367 = vmatpush1.bf16.msra.mxu0 0
        %1368 = vmatprep.subr.bf16.mxu0 0
        %1369 = vmatpush1.bf16.msra.mxu0 0
        %1370 = vmatprep.subr.bf16.mxu0 0
        %1371 = vmatpush1.bf16.msra.mxu0 0
        %1372 = vmatprep.subr.bf16.mxu0 0
        %1373 = vmatpush1.bf16.msra.mxu0 0
        %1374 = vmatprep.subr.bf16.mxu0 0
        %1375 = vmatpush1.bf16.msra.mxu0 0
        %1376 = vmatprep.subr.bf16.mxu0 0
        %1377 = vmatpush1.bf16.msra.mxu0 0
        %1378 = vmatprep.subr.bf16.mxu0 0
        %1379 = vmatpush1.bf16.msra.mxu0 0
        %1380 = vmatprep.subr.bf16.mxu0 0
        %1381 = vmatpush1.bf16.msra.mxu0 0
        %1382 = vmatprep.subr.bf16.mxu0 0
        %1383 = vmatpush1.bf16.msra.mxu0 0
        %1384 = vmatprep.subr.bf16.mxu0 0
        %1385 = vmatpush1.bf16.msra.mxu0 0
        %1386 = vmatprep.subr.bf16.mxu0 0
        %1387 = vmatpush1.bf16.msra.mxu0 0
        %1388 = vmatprep.mubr.bf16.mxu0 0
        %1389 = vmatmul.mubr.bf16.gmra.mrb[0].mxu0 %v1354
        %v1390 = vpop.f32.mrb[0].mxu0
        %v1391 = vadd.f32 0.0, %v1390
        %v1392 = vpop.f32.mrb[0].mxu0
        %v1393 = vpop.f32.mrb[0].mxu0
        %v1394 = vadd.f32 0.0, %v1393
        %v1395 = vpop.f32.mrb[0].mxu0
        %1396 = vdwg.mxu0
        %v1401 = vunpack.c.l.b16 %v1203
        %v1402 = vunpack.c.l.b16 %v1204
        %v1403 = vunpack.c.l.b16 %v1205
        %v1404 = vunpack.c.l.b16 %v1206
        %v1405 = vpack.c.b16 %v1402, %v1401
        %v1406 = vpack.c.b16 %v1404, %v1403
        %v1410 = vsel %vm1082, %v1202, 0
        %1412 = vmatprep.subr.bf16.mxu0 0
        %1413 = vmatpush1.bf16.msra.mxu0 %v1405
        %1414 = vmatprep.subr.bf16.mxu0 0
        %1415 = vmatpush1.bf16.msra.mxu0 %v1406
        %1416 = vmatprep.subr.bf16.mxu0 0
        %1417 = vmatpush1.bf16.msra.mxu0 0
        %1418 = vmatprep.subr.bf16.mxu0 0
        %1419 = vmatpush1.bf16.msra.mxu0 0
        %1420 = vmatprep.subr.bf16.mxu0 0
        %1421 = vmatpush1.bf16.msra.mxu0 0
        %1422 = vmatprep.subr.bf16.mxu0 0
        %1423 = vmatpush1.bf16.msra.mxu0 0
        %1424 = vmatprep.subr.bf16.mxu0 0
        %1425 = vmatpush1.bf16.msra.mxu0 0
        %1426 = vmatprep.subr.bf16.mxu0 0
        %1427 = vmatpush1.bf16.msra.mxu0 0
        %1428 = vmatprep.subr.bf16.mxu0 0
        %1429 = vmatpush1.bf16.msra.mxu0 0
        %1430 = vmatprep.subr.bf16.mxu0 0
        %1431 = vmatpush1.bf16.msra.mxu0 0
        %1432 = vmatprep.subr.bf16.mxu0 0
        %1433 = vmatpush1.bf16.msra.mxu0 0
        %1434 = vmatprep.subr.bf16.mxu0 0
        %1435 = vmatpush1.bf16.msra.mxu0 0
        %1436 = vmatprep.subr.bf16.mxu0 0
        %1437 = vmatpush1.bf16.msra.mxu0 0
        %1438 = vmatprep.subr.bf16.mxu0 0
        %1439 = vmatpush1.bf16.msra.mxu0 0
        %1440 = vmatprep.subr.bf16.mxu0 0
        %1441 = vmatpush1.bf16.msra.mxu0 0
        %1442 = vmatprep.subr.bf16.mxu0 0
        %1443 = vmatpush1.bf16.msra.mxu0 0
        %1444 = vmatprep.mubr.bf16.mxu0 0
        %1445 = vmatmul.mubr.bf16.gmra.mrb[0].mxu0 %v1410
        %v1446 = vpop.f32.mrb[0].mxu0
        %v1447 = vadd.f32 %v1391, %v1446
        %v1448 = vpop.f32.mrb[0].mxu0
        %v1449 = vpop.f32.mrb[0].mxu0
        %v1450 = vadd.f32 %v1394, %v1449
        %v1451 = vpop.f32.mrb[0].mxu0
        %1452 = vdwg.mxu0
        %1453 = vrot.lane.b32.xlu0 %v1076, 64
        %v1454 = vpop.permute.xlu0 %1453
        %1455 = vrot.lane.b32.xlu0 %v1078, 64
        %v1456 = vpop.permute.xlu0 %1455
        %v1458 = vsel %vm1082, %v1454, 0
        %v1461 = vsel %vm1082, %v1456, 0
        %1463 = vmatprep.subr.bf16.mxu0 0
        %1464 = vmatpush1.bf16.xpose.msra.mxu0 %v1461
        %1465 = vmatprep.subr.bf16.mxu0 0
        %1466 = vmatpush1.bf16.xpose.msra.mxu0 0
        %1467 = vmatprep.subr.bf16.mxu0 0
        %1468 = vmatpush1.bf16.xpose.msra.mxu0 0
        %1469 = vmatprep.subr.bf16.mxu0 0
        %1470 = vmatpush1.bf16.xpose.msra.mxu0 0
        %1471 = vmatprep.subr.bf16.mxu0 0
        %1472 = vmatpush1.bf16.xpose.msra.mxu0 0
        %1473 = vmatprep.subr.bf16.mxu0 0
        %1474 = vmatpush1.bf16.xpose.msra.mxu0 0
        %1475 = vmatprep.subr.bf16.mxu0 0
        %1476 = vmatpush1.bf16.xpose.msra.mxu0 0
        %1477 = vmatprep.subr.bf16.mxu0 0
        %1478 = vmatpush1.bf16.xpose.msra.mxu0 0
        %1479 = vmatprep.subr.bf16.mxu0 0
        %1480 = vmatpush1.bf16.xpose.msra.mxu0 0
        %1481 = vmatprep.subr.bf16.mxu0 0
        %1482 = vmatpush1.bf16.xpose.msra.mxu0 0
        %1483 = vmatprep.subr.bf16.mxu0 0
        %1484 = vmatpush1.bf16.xpose.msra.mxu0 0
        %1485 = vmatprep.subr.bf16.mxu0 0
        %1486 = vmatpush1.bf16.xpose.msra.mxu0 0
        %1487 = vmatprep.subr.bf16.mxu0 0
        %1488 = vmatpush1.bf16.xpose.msra.mxu0 0
        %1489 = vmatprep.subr.bf16.mxu0 0
        %1490 = vmatpush1.bf16.xpose.msra.mxu0 0
        %1491 = vmatprep.subr.bf16.mxu0 0
        %1492 = vmatpush1.bf16.xpose.msra.mxu0 0
        %1493 = vmatprep.subr.bf16.mxu0 0
        %1494 = vmatpush1.bf16.xpose.msra.mxu0 0
        %1495 = vmatprep.mubr.bf16.mxu0 0
        %1496 = vmatmul.mubr.bf16.gmra.mrb[0].mxu0 %v1458
        %v1497 = vpop.f32.mrb[0].mxu0
        %v1498 = vadd.f32 0.0, %v1497
        %v1499 = vpop.f32.mrb[0].mxu0
        %v1500 = vpop.f32.mrb[0].mxu0
        %v1501 = vadd.f32 0.0, %v1500
        %v1502 = vpop.f32.mrb[0].mxu0
        %1503 = vdwg.mxu0
        %v1504 = vsel %vm1130, %v1498, -inf
        %1505 = vmax.xlane.f32.xlu0 %v1504
        %v1506 = vpop.xlane.xlu0 %1505
        %v1507 = vsel %vm1130, %v1501, -inf
        %1508 = vmax.xlane.f32.xlu0 %v1507
        %v1509 = vpop.xlane.xlu0 %1508
        %v1510 = vsub.f32 %v1498, %v1506
        %v1511 = vsub.f32 %v1501, %v1509
        %v1512 = vmul.f32 %v1510, 1.442695
        %v1513 = vpow.pop %v1512
        %v1514 = vmul.f32 %v1511, 1.442695
        %v1515 = vpow.pop %v1514
        %v1516 = vsel %vm1130, %v1513, 0.0
        %1517 = vadd.xlane.f32.xlu0 %v1516
        %v1518 = vpop.xlane.xlu0 %1517
        %v1519 = vsel %vm1130, %v1515, 0.0
        %1520 = vadd.xlane.f32.xlu0 %v1519
        %v1521 = vpop.xlane.xlu0 %1520
        %v1522 = vrcp.pop %v1518
        %v1523 = vrcp.pop %v1521
        %v1524 = vmul.f32 %v1513, %v1522
        %v1525 = vmul.f32 %v1515, %v1523
        %s1526 = scalar_lea.vmem [#allocation6], 32
        %v1527 = vld [vmem:[%s1526] sm:$0xff]
        %v1528 = vld [vmem:[%s1526 + $0x8] sm:$0xff]
        %v1529 = vmul.f32 %v1527, %v1524
        %v1530 = vmul.f32 %v1528, %v1525
        %v1531 = vpack.c.bf16 %v1530, %v1529
        %1532 = vrot.lane.b32.xlu0 %v1080, 64
        %v1533 = vpop.permute.xlu0 %1532
        %v1536 = vsel %vm1130, %v1531, 0
        %1538 = vmatprep.subr.bf16.mxu0 0
        %1539 = vmatpush1.bf16.msra.mxu0 %v1533
        %1540 = vmatprep.subr.bf16.mxu0 0
        %1541 = vmatpush1.bf16.msra.mxu0 0
        %1542 = vmatprep.subr.bf16.mxu0 0
        %1543 = vmatpush1.bf16.msra.mxu0 0
        %1544 = vmatprep.subr.bf16.mxu0 0
        %1545 = vmatpush1.bf16.msra.mxu0 0
        %1546 = vmatprep.subr.bf16.mxu0 0
        %1547 = vmatpush1.bf16.msra.mxu0 0
        %1548 = vmatprep.subr.bf16.mxu0 0
        %1549 = vmatpush1.bf16.msra.mxu0 0
        %1550 = vmatprep.subr.bf16.mxu0 0
        %1551 = vmatpush1.bf16.msra.mxu0 0
        %1552 = vmatprep.subr.bf16.mxu0 0
        %1553 = vmatpush1.bf16.msra.mxu0 0
        %1554 = vmatprep.subr.bf16.mxu0 0
        %1555 = vmatpush1.bf16.msra.mxu0 0
        %1556 = vmatprep.subr.bf16.mxu0 0
        %1557 = vmatpush1.bf16.msra.mxu0 0
        %1558 = vmatprep.subr.bf16.mxu0 0
        %1559 = vmatpush1.bf16.msra.mxu0 0
        %1560 = vmatprep.subr.bf16.mxu0 0
        %1561 = vmatpush1.bf16.msra.mxu0 0
        %1562 = vmatprep.subr.bf16.mxu0 0
        %1563 = vmatpush1.bf16.msra.mxu0 0
        %1564 = vmatprep.subr.bf16.mxu0 0
        %1565 = vmatpush1.bf16.msra.mxu0 0
        %1566 = vmatprep.subr.bf16.mxu0 0
        %1567 = vmatpush1.bf16.msra.mxu0 0
        %1568 = vmatprep.subr.bf16.mxu0 0
        %1569 = vmatpush1.bf16.msra.mxu0 0
        %1570 = vmatprep.mubr.bf16.mxu0 0
        %1571 = vmatmul.mubr.bf16.gmra.mrb[0].mxu0 %v1536
        %v1572 = vpop.f32.mrb[0].mxu0
        %v1573 = vadd.f32 0.0, %v1572
        %v1574 = vpop.f32.mrb[0].mxu0
        %v1575 = vpop.f32.mrb[0].mxu0
        %v1576 = vadd.f32 0.0, %v1575
        %v1577 = vpop.f32.mrb[0].mxu0
        %1578 = vdwg.mxu0
        %v1579 = vpack.c.bf16 %v1576, %v1573
        %v1580 = vld [vmem:[%s606 + $0x20] sm:$0xf]
        %v1581 = vld [vmem:[%s606 + $0x24] sm:$0xf]
        %v1582 = vld [vmem:[%s606 + $0x28] sm:$0xf]
        %v1583 = vld [vmem:[%s606 + $0x2c] sm:$0xf]
        %v1588 = vunpack.c.l.b16 %v1580
        %v1589 = vunpack.c.l.b16 %v1581
        %v1590 = vunpack.c.l.b16 %v1582
        %v1591 = vunpack.c.l.b16 %v1583
        %v1592 = vpack.c.b16 %v1589, %v1588
        %v1593 = vpack.c.b16 %v1591, %v1590
        %v1597 = vsel %vm1082, %v1579, 0
        %1599 = vmatprep.subr.bf16.mxu0 0
        %1600 = vmatpush1.bf16.msra.mxu0 %v1592
        %1601 = vmatprep.subr.bf16.mxu0 0
        %1602 = vmatpush1.bf16.msra.mxu0 %v1593
        %1603 = vmatprep.subr.bf16.mxu0 0
        %1604 = vmatpush1.bf16.msra.mxu0 0
        %1605 = vmatprep.subr.bf16.mxu0 0
        %1606 = vmatpush1.bf16.msra.mxu0 0
        %1607 = vmatprep.subr.bf16.mxu0 0
        %1608 = vmatpush1.bf16.msra.mxu0 0
        %1609 = vmatprep.subr.bf16.mxu0 0
        %1610 = vmatpush1.bf16.msra.mxu0 0
        %1611 = vmatprep.subr.bf16.mxu0 0
        %1612 = vmatpush1.bf16.msra.mxu0 0
        %1613 = vmatprep.subr.bf16.mxu0 0
        %1614 = vmatpush1.bf16.msra.mxu0 0
        %1615 = vmatprep.subr.bf16.mxu0 0
        %1616 = vmatpush1.bf16.msra.mxu0 0
        %1617 = vmatprep.subr.bf16.mxu0 0
        %1618 = vmatpush1.bf16.msra.mxu0 0
        %1619 = vmatprep.subr.bf16.mxu0 0
        %1620 = vmatpush1.bf16.msra.mxu0 0
        %1621 = vmatprep.subr.bf16.mxu0 0
        %1622 = vmatpush1.bf16.msra.mxu0 0
        %1623 = vmatprep.subr.bf16.mxu0 0
        %1624 = vmatpush1.bf16.msra.mxu0 0
        %1625 = vmatprep.subr.bf16.mxu0 0
        %1626 = vmatpush1.bf16.msra.mxu0 0
        %1627 = vmatprep.subr.bf16.mxu0 0
        %1628 = vmatpush1.bf16.msra.mxu0 0
        %1629 = vmatprep.subr.bf16.mxu0 0
        %1630 = vmatpush1.bf16.msra.mxu0 0
        %1631 = vmatprep.mubr.bf16.mxu0 0
        %1632 = vmatmul.mubr.bf16.gmra.mrb[0].mxu0 %v1597
        %v1633 = vpop.f32.mrb[0].mxu0
        %v1634 = vadd.f32 0.0, %v1633
        %v1635 = vpop.f32.mrb[0].mxu0
        %v1636 = vpop.f32.mrb[0].mxu0
        %v1637 = vadd.f32 0.0, %v1636
        %v1638 = vpop.f32.mrb[0].mxu0
        %1639 = vdwg.mxu0
        %v1640 = vadd.f32 %v1447, %v1634
        %v1641 = vadd.f32 %v1450, %v1637
        %1642 = vrot.lane.b32.xlu0 %v1076, 32
        %v1643 = vpop.permute.xlu0 %1642
        %1644 = vrot.lane.b32.xlu0 %v1078, 32
        %v1645 = vpop.permute.xlu0 %1644
        %v1647 = vsel %vm1082, %v1643, 0
        %v1650 = vsel %vm1082, %v1645, 0
        %1652 = vmatprep.subr.bf16.mxu0 0
        %1653 = vmatpush1.bf16.xpose.msra.mxu0 %v1650
        %1654 = vmatprep.subr.bf16.mxu0 0
        %1655 = vmatpush1.bf16.xpose.msra.mxu0 0
        %1656 = vmatprep.subr.bf16.mxu0 0
        %1657 = vmatpush1.bf16.xpose.msra.mxu0 0
        %1658 = vmatprep.subr.bf16.mxu0 0
        %1659 = vmatpush1.bf16.xpose.msra.mxu0 0
        %1660 = vmatprep.subr.bf16.mxu0 0
        %1661 = vmatpush1.bf16.xpose.msra.mxu0 0
        %1662 = vmatprep.subr.bf16.mxu0 0
        %1663 = vmatpush1.bf16.xpose.msra.mxu0 0
        %1664 = vmatprep.subr.bf16.mxu0 0
        %1665 = vmatpush1.bf16.xpose.msra.mxu0 0
        %1666 = vmatprep.subr.bf16.mxu0 0
        %1667 = vmatpush1.bf16.xpose.msra.mxu0 0
        %1668 = vmatprep.subr.bf16.mxu0 0
        %1669 = vmatpush1.bf16.xpose.msra.mxu0 0
        %1670 = vmatprep.subr.bf16.mxu0 0
        %1671 = vmatpush1.bf16.xpose.msra.mxu0 0
        %1672 = vmatprep.subr.bf16.mxu0 0
        %1673 = vmatpush1.bf16.xpose.msra.mxu0 0
        %1674 = vmatprep.subr.bf16.mxu0 0
        %1675 = vmatpush1.bf16.xpose.msra.mxu0 0
        %1676 = vmatprep.subr.bf16.mxu0 0
        %1677 = vmatpush1.bf16.xpose.msra.mxu0 0
        %1678 = vmatprep.subr.bf16.mxu0 0
        %1679 = vmatpush1.bf16.xpose.msra.mxu0 0
        %1680 = vmatprep.subr.bf16.mxu0 0
        %1681 = vmatpush1.bf16.xpose.msra.mxu0 0
        %1682 = vmatprep.subr.bf16.mxu0 0
        %1683 = vmatpush1.bf16.xpose.msra.mxu0 0
        %1684 = vmatprep.mubr.bf16.mxu0 0
        %1685 = vmatmul.mubr.bf16.gmra.mrb[0].mxu0 %v1647
        %v1686 = vpop.f32.mrb[0].mxu0
        %v1687 = vadd.f32 0.0, %v1686
        %v1688 = vpop.f32.mrb[0].mxu0
        %v1689 = vpop.f32.mrb[0].mxu0
        %v1690 = vadd.f32 0.0, %v1689
        %v1691 = vpop.f32.mrb[0].mxu0
        %1692 = vdwg.mxu0
        %v1693 = vsel %vm1130, %v1687, -inf
        %1694 = vmax.xlane.f32.xlu0 %v1693
        %v1695 = vpop.xlane.xlu0 %1694
        %v1696 = vsel %vm1130, %v1690, -inf
        %1697 = vmax.xlane.f32.xlu0 %v1696
        %v1698 = vpop.xlane.xlu0 %1697
        %v1699 = vsub.f32 %v1687, %v1695
        %v1700 = vsub.f32 %v1690, %v1698
        %v1701 = vmul.f32 %v1699, 1.442695
        %v1702 = vpow.pop %v1701
        %v1703 = vmul.f32 %v1700, 1.442695
        %v1704 = vpow.pop %v1703
        %v1705 = vsel %vm1130, %v1702, 0.0
        %1706 = vadd.xlane.f32.xlu0 %v1705
        %v1707 = vpop.xlane.xlu0 %1706
        %v1708 = vsel %vm1130, %v1704, 0.0
        %1709 = vadd.xlane.f32.xlu0 %v1708
        %v1710 = vpop.xlane.xlu0 %1709
        %v1711 = vrcp.pop %v1707
        %v1712 = vrcp.pop %v1710
        %v1713 = vmul.f32 %v1702, %v1711
        %v1714 = vmul.f32 %v1704, %v1712
        %s1715 = scalar_lea.vmem [#allocation6], 48
        %v1716 = vld [vmem:[%s1715] sm:$0xff]
        %v1717 = vld [vmem:[%s1715 + $0x8] sm:$0xff]
        %v1718 = vmul.f32 %v1716, %v1713
        %v1719 = vmul.f32 %v1717, %v1714
        %v1720 = vpack.c.bf16 %v1719, %v1718
        %1721 = vrot.lane.b32.xlu0 %v1080, 32
        %v1722 = vpop.permute.xlu0 %1721
        %v1725 = vsel %vm1130, %v1720, 0
        %1727 = vmatprep.subr.bf16.mxu0 0
        %1728 = vmatpush1.bf16.msra.mxu0 %v1722
        %1729 = vmatprep.subr.bf16.mxu0 0
        %1730 = vmatpush1.bf16.msra.mxu0 0
        %1731 = vmatprep.subr.bf16.mxu0 0
        %1732 = vmatpush1.bf16.msra.mxu0 0
        %1733 = vmatprep.subr.bf16.mxu0 0
        %1734 = vmatpush1.bf16.msra.mxu0 0
        %1735 = vmatprep.subr.bf16.mxu0 0
        %1736 = vmatpush1.bf16.msra.mxu0 0
        %1737 = vmatprep.subr.bf16.mxu0 0
        %1738 = vmatpush1.bf16.msra.mxu0 0
        %1739 = vmatprep.subr.bf16.mxu0 0
        %1740 = vmatpush1.bf16.msra.mxu0 0
        %1741 = vmatprep.subr.bf16.mxu0 0
        %1742 = vmatpush1.bf16.msra.mxu0 0
        %1743 = vmatprep.subr.bf16.mxu0 0
        %1744 = vmatpush1.bf16.msra.mxu0 0
        %1745 = vmatprep.subr.bf16.mxu0 0
        %1746 = vmatpush1.bf16.msra.mxu0 0
        %1747 = vmatprep.subr.bf16.mxu0 0
        %1748 = vmatpush1.bf16.msra.mxu0 0
        %1749 = vmatprep.subr.bf16.mxu0 0
        %1750 = vmatpush1.bf16.msra.mxu0 0
        %1751 = vmatprep.subr.bf16.mxu0 0
        %1752 = vmatpush1.bf16.msra.mxu0 0
        %1753 = vmatprep.subr.bf16.mxu0 0
        %1754 = vmatpush1.bf16.msra.mxu0 0
        %1755 = vmatprep.subr.bf16.mxu0 0
        %1756 = vmatpush1.bf16.msra.mxu0 0
        %1757 = vmatprep.subr.bf16.mxu0 0
        %1758 = vmatpush1.bf16.msra.mxu0 0
        %1759 = vmatprep.mubr.bf16.mxu0 0
        %1760 = vmatmul.mubr.bf16.gmra.mrb[0].mxu0 %v1725
        %v1761 = vpop.f32.mrb[0].mxu0
        %v1762 = vadd.f32 0.0, %v1761
        %v1763 = vpop.f32.mrb[0].mxu0
        %v1764 = vpop.f32.mrb[0].mxu0
        %v1765 = vadd.f32 0.0, %v1764
        %v1766 = vpop.f32.mrb[0].mxu0
        %1767 = vdwg.mxu0
        %v1768 = vpack.c.bf16 %v1765, %v1762
        %v1769 = vld [vmem:[%s606 + $0x30] sm:$0xf]
        %v1770 = vld [vmem:[%s606 + $0x34] sm:$0xf]
        %v1771 = vld [vmem:[%s606 + $0x38] sm:$0xf]
        %v1772 = vld [vmem:[%s606 + $0x3c] sm:$0xf]
        %v1777 = vunpack.c.l.b16 %v1769
        %v1778 = vunpack.c.l.b16 %v1770
        %v1779 = vunpack.c.l.b16 %v1771
        %v1780 = vunpack.c.l.b16 %v1772
        %v1781 = vpack.c.b16 %v1778, %v1777
        %v1782 = vpack.c.b16 %v1780, %v1779
        %v1786 = vsel %vm1082, %v1768, 0
        %1788 = vmatprep.subr.bf16.mxu0 0
        %1789 = vmatpush1.bf16.msra.mxu0 %v1781
        %1790 = vmatprep.subr.bf16.mxu0 0
        %1791 = vmatpush1.bf16.msra.mxu0 %v1782
        %1792 = vmatprep.subr.bf16.mxu0 0
        %1793 = vmatpush1.bf16.msra.mxu0 0
        %1794 = vmatprep.subr.bf16.mxu0 0
        %1795 = vmatpush1.bf16.msra.mxu0 0
        %1796 = vmatprep.subr.bf16.mxu0 0
        %1797 = vmatpush1.bf16.msra.mxu0 0
        %1798 = vmatprep.subr.bf16.mxu0 0
        %1799 = vmatpush1.bf16.msra.mxu0 0
        %1800 = vmatprep.subr.bf16.mxu0 0
        %1801 = vmatpush1.bf16.msra.mxu0 0
        %1802 = vmatprep.subr.bf16.mxu0 0
        %1803 = vmatpush1.bf16.msra.mxu0 0
        %1804 = vmatprep.subr.bf16.mxu0 0
        %1805 = vmatpush1.bf16.msra.mxu0 0
        %1806 = vmatprep.subr.bf16.mxu0 0
        %1807 = vmatpush1.bf16.msra.mxu0 0
        %1808 = vmatprep.subr.bf16.mxu0 0
        %1809 = vmatpush1.bf16.msra.mxu0 0
        %1810 = vmatprep.subr.bf16.mxu0 0
        %1811 = vmatpush1.bf16.msra.mxu0 0
        %1812 = vmatprep.subr.bf16.mxu0 0
        %1813 = vmatpush1.bf16.msra.mxu0 0
        %1814 = vmatprep.subr.bf16.mxu0 0
        %1815 = vmatpush1.bf16.msra.mxu0 0
        %1816 = vmatprep.subr.bf16.mxu0 0
        %1817 = vmatpush1.bf16.msra.mxu0 0
        %1818 = vmatprep.subr.bf16.mxu0 0
        %1819 = vmatpush1.bf16.msra.mxu0 0
        %1820 = vmatprep.mubr.bf16.mxu0 0
        %1821 = vmatmul.mubr.bf16.gmra.mrb[0].mxu0 %v1786
        %v1822 = vpop.f32.mrb[0].mxu0
        %v1823 = vadd.f32 0.0, %v1822
        %v1824 = vpop.f32.mrb[0].mxu0
        %v1825 = vpop.f32.mrb[0].mxu0
        %v1826 = vadd.f32 0.0, %v1825
        %v1827 = vpop.f32.mrb[0].mxu0
        %1828 = vdwg.mxu0
        %v1829 = vadd.f32 %v1640, %v1823
        %v1830 = vadd.f32 %v1641, %v1826
        %v1832 = vsel %vm1082, %v1077, 0
        %v1835 = vsel %vm1082, %v1079, 0
        %1837 = vmatprep.subr.bf16.mxu0 0
        %1838 = vmatpush1.bf16.xpose.msra.mxu0 %v1835
        %1839 = vmatprep.subr.bf16.mxu0 0
        %1840 = vmatpush1.bf16.xpose.msra.mxu0 0
        %1841 = vmatprep.subr.bf16.mxu0 0
        %1842 = vmatpush1.bf16.xpose.msra.mxu0 0
        %1843 = vmatprep.subr.bf16.mxu0 0
        %1844 = vmatpush1.bf16.xpose.msra.mxu0 0
        %1845 = vmatprep.subr.bf16.mxu0 0
        %1846 = vmatpush1.bf16.xpose.msra.mxu0 0
        %1847 = vmatprep.subr.bf16.mxu0 0
        %1848 = vmatpush1.bf16.xpose.msra.mxu0 0
        %1849 = vmatprep.subr.bf16.mxu0 0
        %1850 = vmatpush1.bf16.xpose.msra.mxu0 0
        %1851 = vmatprep.subr.bf16.mxu0 0
        %1852 = vmatpush1.bf16.xpose.msra.mxu0 0
        %1853 = vmatprep.subr.bf16.mxu0 0
        %1854 = vmatpush1.bf16.xpose.msra.mxu0 0
        %1855 = vmatprep.subr.bf16.mxu0 0
        %1856 = vmatpush1.bf16.xpose.msra.mxu0 0
        %1857 = vmatprep.subr.bf16.mxu0 0
        %1858 = vmatpush1.bf16.xpose.msra.mxu0 0
        %1859 = vmatprep.subr.bf16.mxu0 0
        %1860 = vmatpush1.bf16.xpose.msra.mxu0 0
        %1861 = vmatprep.subr.bf16.mxu0 0
        %1862 = vmatpush1.bf16.xpose.msra.mxu0 0
        %1863 = vmatprep.subr.bf16.mxu0 0
        %1864 = vmatpush1.bf16.xpose.msra.mxu0 0
        %1865 = vmatprep.subr.bf16.mxu0 0
        %1866 = vmatpush1.bf16.xpose.msra.mxu0 0
        %1867 = vmatprep.subr.bf16.mxu0 0
        %1868 = vmatpush1.bf16.xpose.msra.mxu0 0
        %1869 = vmatprep.mubr.bf16.mxu0 0
        %1870 = vmatmul.mubr.bf16.gmra.mrb[0].mxu0 %v1832
        %v1871 = vpop.f32.mrb[0].mxu0
        %v1872 = vadd.f32 0.0, %v1871
        %v1873 = vpop.f32.mrb[0].mxu0
        %v1874 = vpop.f32.mrb[0].mxu0
        %v1875 = vadd.f32 0.0, %v1874
        %v1876 = vpop.f32.mrb[0].mxu0
        %1877 = vdwg.mxu0
        %v1878 = vsel %vm1130, %v1872, -inf
        %1879 = vmax.xlane.f32.xlu0 %v1878
        %v1880 = vpop.xlane.xlu0 %1879
        %v1881 = vsel %vm1130, %v1875, -inf
        %1882 = vmax.xlane.f32.xlu0 %v1881
        %v1883 = vpop.xlane.xlu0 %1882
        %v1884 = vsub.f32 %v1872, %v1880
        %v1885 = vsub.f32 %v1875, %v1883
        %v1886 = vmul.f32 %v1884, 1.442695
        %v1887 = vpow.pop %v1886
        %v1888 = vmul.f32 %v1885, 1.442695
        %v1889 = vpow.pop %v1888
        %v1890 = vsel %vm1130, %v1887, 0.0
        %1891 = vadd.xlane.f32.xlu0 %v1890
        %v1892 = vpop.xlane.xlu0 %1891
        %v1893 = vsel %vm1130, %v1889, 0.0
        %1894 = vadd.xlane.f32.xlu0 %v1893
        %v1895 = vpop.xlane.xlu0 %1894
        %v1896 = vrcp.pop %v1892
        %v1897 = vrcp.pop %v1895
        %v1898 = vmul.f32 %v1887, %v1896
        %v1899 = vmul.f32 %v1889, %v1897
        %s1900 = scalar_lea.vmem [#allocation6], 64
        %v1901 = vld [vmem:[%s1900] sm:$0xff]
        %v1902 = vld [vmem:[%s1900 + $0x8] sm:$0xff]
        %v1903 = vmul.f32 %v1901, %v1898
        %v1904 = vmul.f32 %v1902, %v1899
        %v1905 = vpack.c.bf16 %v1904, %v1903
        %v1907 = vsel %vm1130, %v1905, 0
        %1909 = vmatprep.subr.bf16.mxu0 0
        %1910 = vmatpush1.bf16.msra.mxu0 %v1081
        %1911 = vmatprep.subr.bf16.mxu0 0
        %1912 = vmatpush1.bf16.msra.mxu0 0
        %1913 = vmatprep.subr.bf16.mxu0 0
        %1914 = vmatpush1.bf16.msra.mxu0 0
        %1915 = vmatprep.subr.bf16.mxu0 0
        %1916 = vmatpush1.bf16.msra.mxu0 0
        %1917 = vmatprep.subr.bf16.mxu0 0
        %1918 = vmatpush1.bf16.msra.mxu0 0
        %1919 = vmatprep.subr.bf16.mxu0 0
        %1920 = vmatpush1.bf16.msra.mxu0 0
        %1921 = vmatprep.subr.bf16.mxu0 0
        %1922 = vmatpush1.bf16.msra.mxu0 0
        %1923 = vmatprep.subr.bf16.mxu0 0
        %1924 = vmatpush1.bf16.msra.mxu0 0
        %1925 = vmatprep.subr.bf16.mxu0 0
        %1926 = vmatpush1.bf16.msra.mxu0 0
        %1927 = vmatprep.subr.bf16.mxu0 0
        %1928 = vmatpush1.bf16.msra.mxu0 0
        %1929 = vmatprep.subr.bf16.mxu0 0
        %1930 = vmatpush1.bf16.msra.mxu0 0
        %1931 = vmatprep.subr.bf16.mxu0 0
        %1932 = vmatpush1.bf16.msra.mxu0 0
        %1933 = vmatprep.subr.bf16.mxu0 0
        %1934 = vmatpush1.bf16.msra.mxu0 0
        %1935 = vmatprep.subr.bf16.mxu0 0
        %1936 = vmatpush1.bf16.msra.mxu0 0
        %1937 = vmatprep.subr.bf16.mxu0 0
        %1938 = vmatpush1.bf16.msra.mxu0 0
        %1939 = vmatprep.subr.bf16.mxu0 0
        %1940 = vmatpush1.bf16.msra.mxu0 0
        %1941 = vmatprep.mubr.bf16.mxu0 0
        %1942 = vmatmul.mubr.bf16.gmra.mrb[0].mxu0 %v1907
        %v1943 = vpop.f32.mrb[0].mxu0
        %v1944 = vadd.f32 0.0, %v1943
        %v1945 = vpop.f32.mrb[0].mxu0
        %v1946 = vpop.f32.mrb[0].mxu0
        %v1947 = vadd.f32 0.0, %v1946
        %v1948 = vpop.f32.mrb[0].mxu0
        %1949 = vdwg.mxu0
        %v1950 = vpack.c.bf16 %v1947, %v1944
        %v1951 = vld [vmem:[%s606] sm:$0xf]
        %v1952 = vld [vmem:[%s606 + $0x4] sm:$0xf]
        %v1953 = vld [vmem:[%s606 + $0x8] sm:$0xf]
        %v1954 = vld [vmem:[%s606 + $0xc] sm:$0xf]
        %1956 = vrot.lane.b32.xlu0 %v1077, 96
        %v1957 = vpop.permute.xlu0 %1956
        %1959 = vrot.lane.b32.xlu0 %v1079, 96
        %v1960 = vpop.permute.xlu0 %1959
        %v1962 = vsel %vm1082, %v1957, 0
        %v1965 = vsel %vm1082, %v1960, 0
        %1967 = vmatprep.subr.bf16.mxu0 0
        %1968 = vmatpush1.bf16.xpose.msra.mxu0 %v1965
        %1969 = vmatprep.subr.bf16.mxu0 0
        %1970 = vmatpush1.bf16.xpose.msra.mxu0 0
        %1971 = vmatprep.subr.bf16.mxu0 0
        %1972 = vmatpush1.bf16.xpose.msra.mxu0 0
        %1973 = vmatprep.subr.bf16.mxu0 0
        %1974 = vmatpush1.bf16.xpose.msra.mxu0 0
        %1975 = vmatprep.subr.bf16.mxu0 0
        %1976 = vmatpush1.bf16.xpose.msra.mxu0 0
        %1977 = vmatprep.subr.bf16.mxu0 0
        %1978 = vmatpush1.bf16.xpose.msra.mxu0 0
        %1979 = vmatprep.subr.bf16.mxu0 0
        %1980 = vmatpush1.bf16.xpose.msra.mxu0 0
        %1981 = vmatprep.subr.bf16.mxu0 0
        %1982 = vmatpush1.bf16.xpose.msra.mxu0 0
        %1983 = vmatprep.subr.bf16.mxu0 0
        %1984 = vmatpush1.bf16.xpose.msra.mxu0 0
        %1985 = vmatprep.subr.bf16.mxu0 0
        %1986 = vmatpush1.bf16.xpose.msra.mxu0 0
        %1987 = vmatprep.subr.bf16.mxu0 0
        %1988 = vmatpush1.bf16.xpose.msra.mxu0 0
        %1989 = vmatprep.subr.bf16.mxu0 0
        %1990 = vmatpush1.bf16.xpose.msra.mxu0 0
        %1991 = vmatprep.subr.bf16.mxu0 0
        %1992 = vmatpush1.bf16.xpose.msra.mxu0 0
        %1993 = vmatprep.subr.bf16.mxu0 0
        %1994 = vmatpush1.bf16.xpose.msra.mxu0 0
        %1995 = vmatprep.subr.bf16.mxu0 0
        %1996 = vmatpush1.bf16.xpose.msra.mxu0 0
        %1997 = vmatprep.subr.bf16.mxu0 0
        %1998 = vmatpush1.bf16.xpose.msra.mxu0 0
        %1999 = vmatprep.mubr.bf16.mxu0 0
        %2000 = vmatmul.mubr.bf16.gmra.mrb[0].mxu0 %v1962
        %v2001 = vpop.f32.mrb[0].mxu0
        %v2002 = vadd.f32 0.0, %v2001
        %v2003 = vpop.f32.mrb[0].mxu0
        %v2004 = vpop.f32.mrb[0].mxu0
        %v2005 = vadd.f32 0.0, %v2004
        %v2006 = vpop.f32.mrb[0].mxu0
        %2007 = vdwg.mxu0
        %v2008 = vsel %vm1130, %v2002, -inf
        %2009 = vmax.xlane.f32.xlu0 %v2008
        %v2010 = vpop.xlane.xlu0 %2009
        %v2011 = vsel %vm1130, %v2005, -inf
        %2012 = vmax.xlane.f32.xlu0 %v2011
        %v2013 = vpop.xlane.xlu0 %2012
        %v2014 = vsub.f32 %v2002, %v2010
        %v2015 = vsub.f32 %v2005, %v2013
        %v2016 = vmul.f32 %v2014, 1.442695
        %v2017 = vpow.pop %v2016
        %v2018 = vmul.f32 %v2015, 1.442695
        %v2019 = vpow.pop %v2018
        %v2020 = vsel %vm1130, %v2017, 0.0
        %2021 = vadd.xlane.f32.xlu0 %v2020
        %v2022 = vpop.xlane.xlu0 %2021
        %v2023 = vsel %vm1130, %v2019, 0.0
        %2024 = vadd.xlane.f32.xlu0 %v2023
        %v2025 = vpop.xlane.xlu0 %2024
        %v2026 = vrcp.pop %v2022
        %v2027 = vrcp.pop %v2025
        %v2028 = vmul.f32 %v2017, %v2026
        %v2029 = vmul.f32 %v2019, %v2027
        %s2030 = scalar_lea.vmem [#allocation6], 80
        %v2031 = vld [vmem:[%s2030] sm:$0xff]
        %v2032 = vld [vmem:[%s2030 + $0x8] sm:$0xff]
        %v2033 = vmul.f32 %v2031, %v2028
        %v2034 = vmul.f32 %v2032, %v2029
        %v2035 = vpack.c.bf16 %v2034, %v2033
        %2037 = vrot.lane.b32.xlu0 %v1081, 96
        %v2038 = vpop.permute.xlu0 %2037
        %v2041 = vsel %vm1130, %v2035, 0
        %2043 = vmatprep.subr.bf16.mxu0 0
        %2044 = vmatpush1.bf16.msra.mxu0 %v2038
        %2045 = vmatprep.subr.bf16.mxu0 0
        %2046 = vmatpush1.bf16.msra.mxu0 0
        %2047 = vmatprep.subr.bf16.mxu0 0
        %2048 = vmatpush1.bf16.msra.mxu0 0
        %2049 = vmatprep.subr.bf16.mxu0 0
        %2050 = vmatpush1.bf16.msra.mxu0 0
        %2051 = vmatprep.subr.bf16.mxu0 0
        %2052 = vmatpush1.bf16.msra.mxu0 0
        %2053 = vmatprep.subr.bf16.mxu0 0
        %2054 = vmatpush1.bf16.msra.mxu0 0
        %2055 = vmatprep.subr.bf16.mxu0 0
        %2056 = vmatpush1.bf16.msra.mxu0 0
        %2057 = vmatprep.subr.bf16.mxu0 0
        %2058 = vmatpush1.bf16.msra.mxu0 0
        %2059 = vmatprep.subr.bf16.mxu0 0
        %2060 = vmatpush1.bf16.msra.mxu0 0
        %2061 = vmatprep.subr.bf16.mxu0 0
        %2062 = vmatpush1.bf16.msra.mxu0 0
        %2063 = vmatprep.subr.bf16.mxu0 0
        %2064 = vmatpush1.bf16.msra.mxu0 0
        %2065 = vmatprep.subr.bf16.mxu0 0
        %2066 = vmatpush1.bf16.msra.mxu0 0
        %2067 = vmatprep.subr.bf16.mxu0 0
        %2068 = vmatpush1.bf16.msra.mxu0 0
        %2069 = vmatprep.subr.bf16.mxu0 0
        %2070 = vmatpush1.bf16.msra.mxu0 0
        %2071 = vmatprep.subr.bf16.mxu0 0
        %2072 = vmatpush1.bf16.msra.mxu0 0
        %2073 = vmatprep.subr.bf16.mxu0 0
        %2074 = vmatpush1.bf16.msra.mxu0 0
        %2075 = vmatprep.mubr.bf16.mxu0 0
        %2076 = vmatmul.mubr.bf16.gmra.mrb[0].mxu0 %v2041
        %v2077 = vpop.f32.mrb[0].mxu0
        %v2078 = vadd.f32 0.0, %v2077
        %v2079 = vpop.f32.mrb[0].mxu0
        %v2080 = vpop.f32.mrb[0].mxu0
        %v2081 = vadd.f32 0.0, %v2080
        %v2082 = vpop.f32.mrb[0].mxu0
        %2083 = vdwg.mxu0
        %v2084 = vpack.c.bf16 %v2081, %v2078
        %v2085 = vld [vmem:[%s606 + $0x10] sm:$0xf]
        %v2086 = vld [vmem:[%s606 + $0x14] sm:$0xf]
        %v2087 = vld [vmem:[%s606 + $0x18] sm:$0xf]
        %v2088 = vld [vmem:[%s606 + $0x1c] sm:$0xf]
        %v2093 = vunpack.c.l.b16 %v2085
        %v2094 = vunpack.c.l.b16 %v2086
        %v2095 = vunpack.c.l.b16 %v2087
        %v2096 = vunpack.c.l.b16 %v2088
        %v2097 = vpack.c.b16 %v2094, %v2093
        %v2098 = vpack.c.b16 %v2096, %v2095
        %v2102 = vsel %vm1082, %v2084, 0
        %2104 = vmatprep.subr.bf16.mxu0 0
        %2105 = vmatpush1.bf16.msra.mxu0 %v2097
        %2106 = vmatprep.subr.bf16.mxu0 0
        %2107 = vmatpush1.bf16.msra.mxu0 %v2098
        %2108 = vmatprep.subr.bf16.mxu0 0
        %2109 = vmatpush1.bf16.msra.mxu0 0
        %2110 = vmatprep.subr.bf16.mxu0 0
        %2111 = vmatpush1.bf16.msra.mxu0 0
        %2112 = vmatprep.subr.bf16.mxu0 0
        %2113 = vmatpush1.bf16.msra.mxu0 0
        %2114 = vmatprep.subr.bf16.mxu0 0
        %2115 = vmatpush1.bf16.msra.mxu0 0
        %2116 = vmatprep.subr.bf16.mxu0 0
        %2117 = vmatpush1.bf16.msra.mxu0 0
        %2118 = vmatprep.subr.bf16.mxu0 0
        %2119 = vmatpush1.bf16.msra.mxu0 0
        %2120 = vmatprep.subr.bf16.mxu0 0
        %2121 = vmatpush1.bf16.msra.mxu0 0
        %2122 = vmatprep.subr.bf16.mxu0 0
        %2123 = vmatpush1.bf16.msra.mxu0 0
        %2124 = vmatprep.subr.bf16.mxu0 0
        %2125 = vmatpush1.bf16.msra.mxu0 0
        %2126 = vmatprep.subr.bf16.mxu0 0
        %2127 = vmatpush1.bf16.msra.mxu0 0
        %2128 = vmatprep.subr.bf16.mxu0 0
        %2129 = vmatpush1.bf16.msra.mxu0 0
        %2130 = vmatprep.subr.bf16.mxu0 0
        %2131 = vmatpush1.bf16.msra.mxu0 0
        %2132 = vmatprep.subr.bf16.mxu0 0
        %2133 = vmatpush1.bf16.msra.mxu0 0
        %2134 = vmatprep.subr.bf16.mxu0 0
        %2135 = vmatpush1.bf16.msra.mxu0 0
        %2136 = vmatprep.mubr.bf16.mxu0 0
        %2137 = vmatmul.mubr.bf16.gmra.mrb[0].mxu0 %v2102
        %v2138 = vpop.f32.mrb[0].mxu0
        %v2139 = vadd.f32 0.0, %v2138
        %v2140 = vpop.f32.mrb[0].mxu0
        %v2141 = vpop.f32.mrb[0].mxu0
        %v2142 = vadd.f32 0.0, %v2141
        %v2143 = vpop.f32.mrb[0].mxu0
        %2144 = vdwg.mxu0
        %v2149 = vunpack.c.l.b16 %v1951
        %v2150 = vunpack.c.l.b16 %v1952
        %v2151 = vunpack.c.l.b16 %v1953
        %v2152 = vunpack.c.l.b16 %v1954
        %v2153 = vpack.c.b16 %v2150, %v2149
        %v2154 = vpack.c.b16 %v2152, %v2151
        %v2158 = vsel %vm1082, %v1950, 0
        %2160 = vmatprep.subr.bf16.mxu0 0
        %2161 = vmatpush1.bf16.msra.mxu0 %v2153
        %2162 = vmatprep.subr.bf16.mxu0 0
        %2163 = vmatpush1.bf16.msra.mxu0 %v2154
        %2164 = vmatprep.subr.bf16.mxu0 0
        %2165 = vmatpush1.bf16.msra.mxu0 0
        %2166 = vmatprep.subr.bf16.mxu0 0
        %2167 = vmatpush1.bf16.msra.mxu0 0
        %2168 = vmatprep.subr.bf16.mxu0 0
        %2169 = vmatpush1.bf16.msra.mxu0 0
        %2170 = vmatprep.subr.bf16.mxu0 0
        %2171 = vmatpush1.bf16.msra.mxu0 0
        %2172 = vmatprep.subr.bf16.mxu0 0
        %2173 = vmatpush1.bf16.msra.mxu0 0
        %2174 = vmatprep.subr.bf16.mxu0 0
        %2175 = vmatpush1.bf16.msra.mxu0 0
        %2176 = vmatprep.subr.bf16.mxu0 0
        %2177 = vmatpush1.bf16.msra.mxu0 0
        %2178 = vmatprep.subr.bf16.mxu0 0
        %2179 = vmatpush1.bf16.msra.mxu0 0
        %2180 = vmatprep.subr.bf16.mxu0 0
        %2181 = vmatpush1.bf16.msra.mxu0 0
        %2182 = vmatprep.subr.bf16.mxu0 0
        %2183 = vmatpush1.bf16.msra.mxu0 0
        %2184 = vmatprep.subr.bf16.mxu0 0
        %2185 = vmatpush1.bf16.msra.mxu0 0
        %2186 = vmatprep.subr.bf16.mxu0 0
        %2187 = vmatpush1.bf16.msra.mxu0 0
        %2188 = vmatprep.subr.bf16.mxu0 0
        %2189 = vmatpush1.bf16.msra.mxu0 0
        %2190 = vmatprep.subr.bf16.mxu0 0
        %2191 = vmatpush1.bf16.msra.mxu0 0
        %2192 = vmatprep.mubr.bf16.mxu0 0
        %2193 = vmatmul.mubr.bf16.gmra.mrb[0].mxu0 %v2158
        %v2194 = vpop.f32.mrb[0].mxu0
        %v2195 = vadd.f32 %v2139, %v2194
        %v2196 = vpop.f32.mrb[0].mxu0
        %v2197 = vpop.f32.mrb[0].mxu0
        %v2198 = vadd.f32 %v2142, %v2197
        %v2199 = vpop.f32.mrb[0].mxu0
        %2200 = vdwg.mxu0
        %2201 = vrot.lane.b32.xlu0 %v1077, 64
        %v2202 = vpop.permute.xlu0 %2201
        %2203 = vrot.lane.b32.xlu0 %v1079, 64
        %v2204 = vpop.permute.xlu0 %2203
        %v2206 = vsel %vm1082, %v2202, 0
        %v2209 = vsel %vm1082, %v2204, 0
        %2211 = vmatprep.subr.bf16.mxu0 0
        %2212 = vmatpush1.bf16.xpose.msra.mxu0 %v2209
        %2213 = vmatprep.subr.bf16.mxu0 0
        %2214 = vmatpush1.bf16.xpose.msra.mxu0 0
        %2215 = vmatprep.subr.bf16.mxu0 0
        %2216 = vmatpush1.bf16.xpose.msra.mxu0 0
        %2217 = vmatprep.subr.bf16.mxu0 0
        %2218 = vmatpush1.bf16.xpose.msra.mxu0 0
        %2219 = vmatprep.subr.bf16.mxu0 0
        %2220 = vmatpush1.bf16.xpose.msra.mxu0 0
        %2221 = vmatprep.subr.bf16.mxu0 0
        %2222 = vmatpush1.bf16.xpose.msra.mxu0 0
        %2223 = vmatprep.subr.bf16.mxu0 0
        %2224 = vmatpush1.bf16.xpose.msra.mxu0 0
        %2225 = vmatprep.subr.bf16.mxu0 0
        %2226 = vmatpush1.bf16.xpose.msra.mxu0 0
        %2227 = vmatprep.subr.bf16.mxu0 0
        %2228 = vmatpush1.bf16.xpose.msra.mxu0 0
        %2229 = vmatprep.subr.bf16.mxu0 0
        %2230 = vmatpush1.bf16.xpose.msra.mxu0 0
        %2231 = vmatprep.subr.bf16.mxu0 0
        %2232 = vmatpush1.bf16.xpose.msra.mxu0 0
        %2233 = vmatprep.subr.bf16.mxu0 0
        %2234 = vmatpush1.bf16.xpose.msra.mxu0 0
        %2235 = vmatprep.subr.bf16.mxu0 0
        %2236 = vmatpush1.bf16.xpose.msra.mxu0 0
        %2237 = vmatprep.subr.bf16.mxu0 0
        %2238 = vmatpush1.bf16.xpose.msra.mxu0 0
        %2239 = vmatprep.subr.bf16.mxu0 0
        %2240 = vmatpush1.bf16.xpose.msra.mxu0 0
        %2241 = vmatprep.subr.bf16.mxu0 0
        %2242 = vmatpush1.bf16.xpose.msra.mxu0 0
        %2243 = vmatprep.mubr.bf16.mxu0 0
        %2244 = vmatmul.mubr.bf16.gmra.mrb[0].mxu0 %v2206
        %v2245 = vpop.f32.mrb[0].mxu0
        %v2246 = vadd.f32 0.0, %v2245
        %v2247 = vpop.f32.mrb[0].mxu0
        %v2248 = vpop.f32.mrb[0].mxu0
        %v2249 = vadd.f32 0.0, %v2248
        %v2250 = vpop.f32.mrb[0].mxu0
        %2251 = vdwg.mxu0
        %v2252 = vsel %vm1130, %v2246, -inf
        %2253 = vmax.xlane.f32.xlu0 %v2252
        %v2254 = vpop.xlane.xlu0 %2253
        %v2255 = vsel %vm1130, %v2249, -inf
        %2256 = vmax.xlane.f32.xlu0 %v2255
        %v2257 = vpop.xlane.xlu0 %2256
        %v2258 = vsub.f32 %v2246, %v2254
        %v2259 = vsub.f32 %v2249, %v2257
        %v2260 = vmul.f32 %v2258, 1.442695
        %v2261 = vpow.pop %v2260
        %v2262 = vmul.f32 %v2259, 1.442695
        %v2263 = vpow.pop %v2262
        %v2264 = vsel %vm1130, %v2261, 0.0
        %2265 = vadd.xlane.f32.xlu0 %v2264
        %v2266 = vpop.xlane.xlu0 %2265
        %v2267 = vsel %vm1130, %v2263, 0.0
        %2268 = vadd.xlane.f32.xlu0 %v2267
        %v2269 = vpop.xlane.xlu0 %2268
        %v2270 = vrcp.pop %v2266
        %v2271 = vrcp.pop %v2269
        %v2272 = vmul.f32 %v2261, %v2270
        %v2273 = vmul.f32 %v2263, %v2271
        %s2274 = scalar_lea.vmem [#allocation6], 96
        %v2275 = vld [vmem:[%s2274] sm:$0xff]
        %v2276 = vld [vmem:[%s2274 + $0x8] sm:$0xff]
        %v2277 = vmul.f32 %v2275, %v2272
        %v2278 = vmul.f32 %v2276, %v2273
        %v2279 = vpack.c.bf16 %v2278, %v2277
        %2280 = vrot.lane.b32.xlu0 %v1081, 64
        %v2281 = vpop.permute.xlu0 %2280
        %v2284 = vsel %vm1130, %v2279, 0
        %2286 = vmatprep.subr.bf16.mxu0 0
        %2287 = vmatpush1.bf16.msra.mxu0 %v2281
        %2288 = vmatprep.subr.bf16.mxu0 0
        %2289 = vmatpush1.bf16.msra.mxu0 0
        %2290 = vmatprep.subr.bf16.mxu0 0
        %2291 = vmatpush1.bf16.msra.mxu0 0
        %2292 = vmatprep.subr.bf16.mxu0 0
        %2293 = vmatpush1.bf16.msra.mxu0 0
        %2294 = vmatprep.subr.bf16.mxu0 0
        %2295 = vmatpush1.bf16.msra.mxu0 0
        %2296 = vmatprep.subr.bf16.mxu0 0
        %2297 = vmatpush1.bf16.msra.mxu0 0
        %2298 = vmatprep.subr.bf16.mxu0 0
        %2299 = vmatpush1.bf16.msra.mxu0 0
        %2300 = vmatprep.subr.bf16.mxu0 0
        %2301 = vmatpush1.bf16.msra.mxu0 0
        %2302 = vmatprep.subr.bf16.mxu0 0
        %2303 = vmatpush1.bf16.msra.mxu0 0
        %2304 = vmatprep.subr.bf16.mxu0 0
        %2305 = vmatpush1.bf16.msra.mxu0 0
        %2306 = vmatprep.subr.bf16.mxu0 0
        %2307 = vmatpush1.bf16.msra.mxu0 0
        %2308 = vmatprep.subr.bf16.mxu0 0
        %2309 = vmatpush1.bf16.msra.mxu0 0
        %2310 = vmatprep.subr.bf16.mxu0 0
        %2311 = vmatpush1.bf16.msra.mxu0 0
        %2312 = vmatprep.subr.bf16.mxu0 0
        %2313 = vmatpush1.bf16.msra.mxu0 0
        %2314 = vmatprep.subr.bf16.mxu0 0
        %2315 = vmatpush1.bf16.msra.mxu0 0
        %2316 = vmatprep.subr.bf16.mxu0 0
        %2317 = vmatpush1.bf16.msra.mxu0 0
        %2318 = vmatprep.mubr.bf16.mxu0 0
        %2319 = vmatmul.mubr.bf16.gmra.mrb[0].mxu0 %v2284
        %v2320 = vpop.f32.mrb[0].mxu0
        %v2321 = vadd.f32 0.0, %v2320
        %v2322 = vpop.f32.mrb[0].mxu0
        %v2323 = vpop.f32.mrb[0].mxu0
        %v2324 = vadd.f32 0.0, %v2323
        %v2325 = vpop.f32.mrb[0].mxu0
        %2326 = vdwg.mxu0
        %v2327 = vpack.c.bf16 %v2324, %v2321
        %v2328 = vld [vmem:[%s606 + $0x20] sm:$0xf]
        %v2329 = vld [vmem:[%s606 + $0x24] sm:$0xf]
        %v2330 = vld [vmem:[%s606 + $0x28] sm:$0xf]
        %v2331 = vld [vmem:[%s606 + $0x2c] sm:$0xf]
        %v2336 = vunpack.c.l.b16 %v2328
        %v2337 = vunpack.c.l.b16 %v2329
        %v2338 = vunpack.c.l.b16 %v2330
        %v2339 = vunpack.c.l.b16 %v2331
        %v2340 = vpack.c.b16 %v2337, %v2336
        %v2341 = vpack.c.b16 %v2339, %v2338
        %v2345 = vsel %vm1082, %v2327, 0
        %2347 = vmatprep.subr.bf16.mxu0 0
        %2348 = vmatpush1.bf16.msra.mxu0 %v2340
        %2349 = vmatprep.subr.bf16.mxu0 0
        %2350 = vmatpush1.bf16.msra.mxu0 %v2341
        %2351 = vmatprep.subr.bf16.mxu0 0
        %2352 = vmatpush1.bf16.msra.mxu0 0
        %2353 = vmatprep.subr.bf16.mxu0 0
        %2354 = vmatpush1.bf16.msra.mxu0 0
        %2355 = vmatprep.subr.bf16.mxu0 0
        %2356 = vmatpush1.bf16.msra.mxu0 0
        %2357 = vmatprep.subr.bf16.mxu0 0
        %2358 = vmatpush1.bf16.msra.mxu0 0
        %2359 = vmatprep.subr.bf16.mxu0 0
        %2360 = vmatpush1.bf16.msra.mxu0 0
        %2361 = vmatprep.subr.bf16.mxu0 0
        %2362 = vmatpush1.bf16.msra.mxu0 0
        %2363 = vmatprep.subr.bf16.mxu0 0
        %2364 = vmatpush1.bf16.msra.mxu0 0
        %2365 = vmatprep.subr.bf16.mxu0 0
        %2366 = vmatpush1.bf16.msra.mxu0 0
        %2367 = vmatprep.subr.bf16.mxu0 0
        %2368 = vmatpush1.bf16.msra.mxu0 0
        %2369 = vmatprep.subr.bf16.mxu0 0
        %2370 = vmatpush1.bf16.msra.mxu0 0
        %2371 = vmatprep.subr.bf16.mxu0 0
        %2372 = vmatpush1.bf16.msra.mxu0 0
        %2373 = vmatprep.subr.bf16.mxu0 0
        %2374 = vmatpush1.bf16.msra.mxu0 0
        %2375 = vmatprep.subr.bf16.mxu0 0
        %2376 = vmatpush1.bf16.msra.mxu0 0
        %2377 = vmatprep.subr.bf16.mxu0 0
        %2378 = vmatpush1.bf16.msra.mxu0 0
        %2379 = vmatprep.mubr.bf16.mxu0 0
        %2380 = vmatmul.mubr.bf16.gmra.mrb[0].mxu0 %v2345
        %v2381 = vpop.f32.mrb[0].mxu0
        %v2382 = vadd.f32 0.0, %v2381
        %v2383 = vpop.f32.mrb[0].mxu0
        %v2384 = vpop.f32.mrb[0].mxu0
        %v2385 = vadd.f32 0.0, %v2384
        %v2386 = vpop.f32.mrb[0].mxu0
        %2387 = vdwg.mxu0
        %v2388 = vadd.f32 %v2195, %v2382
        %v2389 = vadd.f32 %v2198, %v2385
        %2390 = vrot.lane.b32.xlu0 %v1077, 32
        %v2391 = vpop.permute.xlu0 %2390
        %2392 = vrot.lane.b32.xlu0 %v1079, 32
        %v2393 = vpop.permute.xlu0 %2392
        %v2395 = vsel %vm1082, %v2391, 0
        %v2398 = vsel %vm1082, %v2393, 0
        %2400 = vmatprep.subr.bf16.mxu0 0
        %2401 = vmatpush1.bf16.xpose.msra.mxu0 %v2398
        %2402 = vmatprep.subr.bf16.mxu0 0
        %2403 = vmatpush1.bf16.xpose.msra.mxu0 0
        %2404 = vmatprep.subr.bf16.mxu0 0
        %2405 = vmatpush1.bf16.xpose.msra.mxu0 0
        %2406 = vmatprep.subr.bf16.mxu0 0
        %2407 = vmatpush1.bf16.xpose.msra.mxu0 0
        %2408 = vmatprep.subr.bf16.mxu0 0
        %2409 = vmatpush1.bf16.xpose.msra.mxu0 0
        %2410 = vmatprep.subr.bf16.mxu0 0
        %2411 = vmatpush1.bf16.xpose.msra.mxu0 0
        %2412 = vmatprep.subr.bf16.mxu0 0
        %2413 = vmatpush1.bf16.xpose.msra.mxu0 0
        %2414 = vmatprep.subr.bf16.mxu0 0
        %2415 = vmatpush1.bf16.xpose.msra.mxu0 0
        %2416 = vmatprep.subr.bf16.mxu0 0
        %2417 = vmatpush1.bf16.xpose.msra.mxu0 0
        %2418 = vmatprep.subr.bf16.mxu0 0
        %2419 = vmatpush1.bf16.xpose.msra.mxu0 0
        %2420 = vmatprep.subr.bf16.mxu0 0
        %2421 = vmatpush1.bf16.xpose.msra.mxu0 0
        %2422 = vmatprep.subr.bf16.mxu0 0
        %2423 = vmatpush1.bf16.xpose.msra.mxu0 0
        %2424 = vmatprep.subr.bf16.mxu0 0
        %2425 = vmatpush1.bf16.xpose.msra.mxu0 0
        %2426 = vmatprep.subr.bf16.mxu0 0
        %2427 = vmatpush1.bf16.xpose.msra.mxu0 0
        %2428 = vmatprep.subr.bf16.mxu0 0
        %2429 = vmatpush1.bf16.xpose.msra.mxu0 0
        %2430 = vmatprep.subr.bf16.mxu0 0
        %2431 = vmatpush1.bf16.xpose.msra.mxu0 0
        %2432 = vmatprep.mubr.bf16.mxu0 0
        %2433 = vmatmul.mubr.bf16.gmra.mrb[0].mxu0 %v2395
        %v2434 = vpop.f32.mrb[0].mxu0
        %v2435 = vadd.f32 0.0, %v2434
        %v2436 = vpop.f32.mrb[0].mxu0
        %v2437 = vpop.f32.mrb[0].mxu0
        %v2438 = vadd.f32 0.0, %v2437
        %v2439 = vpop.f32.mrb[0].mxu0
        %2440 = vdwg.mxu0
        %v2441 = vsel %vm1130, %v2435, -inf
        %2442 = vmax.xlane.f32.xlu0 %v2441
        %v2443 = vpop.xlane.xlu0 %2442
        %v2444 = vsel %vm1130, %v2438, -inf
        %2445 = vmax.xlane.f32.xlu0 %v2444
        %v2446 = vpop.xlane.xlu0 %2445
        %v2447 = vsub.f32 %v2435, %v2443
        %v2448 = vsub.f32 %v2438, %v2446
        %v2449 = vmul.f32 %v2447, 1.442695
        %v2450 = vpow.pop %v2449
        %v2451 = vmul.f32 %v2448, 1.442695
        %v2452 = vpow.pop %v2451
        %v2453 = vsel %vm1130, %v2450, 0.0
        %2454 = vadd.xlane.f32.xlu0 %v2453
        %v2455 = vpop.xlane.xlu0 %2454
        %v2456 = vsel %vm1130, %v2452, 0.0
        %2457 = vadd.xlane.f32.xlu0 %v2456
        %v2458 = vpop.xlane.xlu0 %2457
        %v2459 = vrcp.pop %v2455
        %v2460 = vrcp.pop %v2458
        %v2461 = vmul.f32 %v2450, %v2459
        %v2462 = vmul.f32 %v2452, %v2460
        %s2463 = scalar_lea.vmem [#allocation6], 112
        %v2464 = vld [vmem:[%s2463] sm:$0xff]
        %v2465 = vld [vmem:[%s2463 + $0x8] sm:$0xff]
        %v2466 = vmul.f32 %v2464, %v2461
        %v2467 = vmul.f32 %v2465, %v2462
        %v2468 = vpack.c.bf16 %v2467, %v2466
        %2469 = vrot.lane.b32.xlu0 %v1081, 32
        %v2470 = vpop.permute.xlu0 %2469
        %v2473 = vsel %vm1130, %v2468, 0
        %2475 = vmatprep.subr.bf16.mxu0 0
        %2476 = vmatpush1.bf16.msra.mxu0 %v2470
        %2477 = vmatprep.subr.bf16.mxu0 0
        %2478 = vmatpush1.bf16.msra.mxu0 0
        %2479 = vmatprep.subr.bf16.mxu0 0
        %2480 = vmatpush1.bf16.msra.mxu0 0
        %2481 = vmatprep.subr.bf16.mxu0 0
        %2482 = vmatpush1.bf16.msra.mxu0 0
        %2483 = vmatprep.subr.bf16.mxu0 0
        %2484 = vmatpush1.bf16.msra.mxu0 0
        %2485 = vmatprep.subr.bf16.mxu0 0
        %2486 = vmatpush1.bf16.msra.mxu0 0
        %2487 = vmatprep.subr.bf16.mxu0 0
        %2488 = vmatpush1.bf16.msra.mxu0 0
        %2489 = vmatprep.subr.bf16.mxu0 0
        %2490 = vmatpush1.bf16.msra.mxu0 0
        %2491 = vmatprep.subr.bf16.mxu0 0
        %2492 = vmatpush1.bf16.msra.mxu0 0
        %2493 = vmatprep.subr.bf16.mxu0 0
        %2494 = vmatpush1.bf16.msra.mxu0 0
        %2495 = vmatprep.subr.bf16.mxu0 0
        %2496 = vmatpush1.bf16.msra.mxu0 0
        %2497 = vmatprep.subr.bf16.mxu0 0
        %2498 = vmatpush1.bf16.msra.mxu0 0
        %2499 = vmatprep.subr.bf16.mxu0 0
        %2500 = vmatpush1.bf16.msra.mxu0 0
        %2501 = vmatprep.subr.bf16.mxu0 0
        %2502 = vmatpush1.bf16.msra.mxu0 0
        %2503 = vmatprep.subr.bf16.mxu0 0
        %2504 = vmatpush1.bf16.msra.mxu0 0
        %2505 = vmatprep.subr.bf16.mxu0 0
        %2506 = vmatpush1.bf16.msra.mxu0 0
        %2507 = vmatprep.mubr.bf16.mxu0 0
        %2508 = vmatmul.mubr.bf16.gmra.mrb[0].mxu0 %v2473
        %v2509 = vpop.f32.mrb[0].mxu0
        %v2510 = vadd.f32 0.0, %v2509
        %v2511 = vpop.f32.mrb[0].mxu0
        %v2512 = vpop.f32.mrb[0].mxu0
        %v2513 = vadd.f32 0.0, %v2512
        %v2514 = vpop.f32.mrb[0].mxu0
        %2515 = vdwg.mxu0
        %v2516 = vpack.c.bf16 %v2513, %v2510
        %v2517 = vld [vmem:[%s606 + $0x30] sm:$0xf]
        %v2518 = vld [vmem:[%s606 + $0x34] sm:$0xf]
        %v2519 = vld [vmem:[%s606 + $0x38] sm:$0xf]
        %v2520 = vld [vmem:[%s606 + $0x3c] sm:$0xf]
        %v2525 = vunpack.c.l.b16 %v2517
        %v2526 = vunpack.c.l.b16 %v2518
        %v2527 = vunpack.c.l.b16 %v2519
        %v2528 = vunpack.c.l.b16 %v2520
        %v2529 = vpack.c.b16 %v2526, %v2525
        %v2530 = vpack.c.b16 %v2528, %v2527
        %v2534 = vsel %vm1082, %v2516, 0
        %2536 = vmatprep.subr.bf16.mxu0 0
        %2537 = vmatpush1.bf16.msra.mxu0 %v2529
        %2538 = vmatprep.subr.bf16.mxu0 0
        %2539 = vmatpush1.bf16.msra.mxu0 %v2530
        %2540 = vmatprep.subr.bf16.mxu0 0
        %2541 = vmatpush1.bf16.msra.mxu0 0
        %2542 = vmatprep.subr.bf16.mxu0 0
        %2543 = vmatpush1.bf16.msra.mxu0 0
        %2544 = vmatprep.subr.bf16.mxu0 0
        %2545 = vmatpush1.bf16.msra.mxu0 0
        %2546 = vmatprep.subr.bf16.mxu0 0
        %2547 = vmatpush1.bf16.msra.mxu0 0
        %2548 = vmatprep.subr.bf16.mxu0 0
        %2549 = vmatpush1.bf16.msra.mxu0 0
        %2550 = vmatprep.subr.bf16.mxu0 0
        %2551 = vmatpush1.bf16.msra.mxu0 0
        %2552 = vmatprep.subr.bf16.mxu0 0
        %2553 = vmatpush1.bf16.msra.mxu0 0
        %2554 = vmatprep.subr.bf16.mxu0 0
        %2555 = vmatpush1.bf16.msra.mxu0 0
        %2556 = vmatprep.subr.bf16.mxu0 0
        %2557 = vmatpush1.bf16.msra.mxu0 0
        %2558 = vmatprep.subr.bf16.mxu0 0
        %2559 = vmatpush1.bf16.msra.mxu0 0
        %2560 = vmatprep.subr.bf16.mxu0 0
        %2561 = vmatpush1.bf16.msra.mxu0 0
        %2562 = vmatprep.subr.bf16.mxu0 0
        %2563 = vmatpush1.bf16.msra.mxu0 0
        %2564 = vmatprep.subr.bf16.mxu0 0
        %2565 = vmatpush1.bf16.msra.mxu0 0
        %2566 = vmatprep.subr.bf16.mxu0 0
        %2567 = vmatpush1.bf16.msra.mxu0 0
        %2568 = vmatprep.mubr.bf16.mxu0 0
        %2569 = vmatmul.mubr.bf16.gmra.mrb[0].mxu0 %v2534
        %v2570 = vpop.f32.mrb[0].mxu0
        %v2571 = vadd.f32 0.0, %v2570
        %v2572 = vpop.f32.mrb[0].mxu0
        %v2573 = vpop.f32.mrb[0].mxu0
        %v2574 = vadd.f32 0.0, %v2573
        %v2575 = vpop.f32.mrb[0].mxu0
        %2576 = vdwg.mxu0
        %v2577 = vadd.f32 %v2388, %v2571
        %v2578 = vadd.f32 %v2389, %v2574
        %v2579 = vadd.f32 %v737, %v1829
        %v2580 = vadd.f32 %v738, %v1830
        %v2581 = vadd.f32 %v739, %v2577
        %v2582 = vadd.f32 %v740, %v2578
        %v2583 = vld [vmem:[%s709] sm:$0x1]
        %v2585 = vlaneseq
        %v2586 = vshrl.u32 %v2585, 7
        %v2587 = vsub.s32 0, %v2586
        %v2588 = vrot.slane %v2583, %v2587
        %v2590 = vadd.f32 %v2579, %v2588
        %v2591 = vadd.f32 %v2580, %v2588
        %v2592 = vadd.f32 %v2581, %v2588
        %v2593 = vadd.f32 %v2582, %v2588
        %v2594 = vld [vmem:[%s712] sm:$0x1]
        %v2595 = vld [vmem:[%s715] sm:$0x1]
        %2596 = vadd.xlane.f32.xlu0 %v2590
        %v2597 = vpop.xlane.xlu0 %2596
        %2598 = vadd.xlane.f32.xlu0 %v2591
        %v2599 = vpop.xlane.xlu0 %2598
        %2600 = vadd.xlane.f32.xlu0 %v2592
        %v2601 = vpop.xlane.xlu0 %2600
        %2602 = vadd.xlane.f32.xlu0 %v2593
        %v2603 = vpop.xlane.xlu0 %2602
        %v2604 = vmul.f32 %v2597, %v751
        %v2605 = vmul.f32 %v2599, %v751
        %v2606 = vmul.f32 %v2601, %v751
        %v2607 = vmul.f32 %v2603, %v751
        %v2608 = vsub.f32 %v2590, %v2604
        %v2609 = vsub.f32 %v2591, %v2605
        %v2610 = vsub.f32 %v2592, %v2606
        %v2611 = vsub.f32 %v2593, %v2607
        %v2612 = vmul.f32 %v2608, %v2608
        %v2613 = vmul.f32 %v2609, %v2609
        %v2614 = vmul.f32 %v2610, %v2610
        %v2615 = vmul.f32 %v2611, %v2611
        %2616 = vadd.xlane.f32.xlu0 %v2612
        %v2617 = vpop.xlane.xlu0 %2616
        %2618 = vadd.xlane.f32.xlu0 %v2613
        %v2619 = vpop.xlane.xlu0 %2618
        %2620 = vadd.xlane.f32.xlu0 %v2614
        %v2621 = vpop.xlane.xlu0 %2620
        %2622 = vadd.xlane.f32.xlu0 %v2615
        %v2623 = vpop.xlane.xlu0 %2622
        %v2624 = vmul.f32 %v2617, %v751
        %v2625 = vmul.f32 %v2619, %v751
        %v2626 = vmul.f32 %v2621, %v751
        %v2627 = vmul.f32 %v2623, %v751
        %v2628 = vadd.f32 %v2624, 1e-05
        %v2629 = vadd.f32 %v2625, 1e-05
        %v2630 = vadd.f32 %v2626, 1e-05
        %v2631 = vadd.f32 %v2627, 1e-05
        %v2632 = vrsqrt.pop %v2628
        %v2633 = vrsqrt.pop %v2629
        %v2634 = vrsqrt.pop %v2630
        %v2635 = vrsqrt.pop %v2631
        %v2636 = vmul.f32 %v2608, %v2632
        %v2637 = vmul.f32 %v2609, %v2633
        %v2638 = vmul.f32 %v2610, %v2634
        %v2639 = vmul.f32 %v2611, %v2635
        %v2641 = vlaneseq
        %v2642 = vshrl.u32 %v2641, 7
        %v2643 = vsub.s32 0, %v2642
        %v2644 = vrot.slane %v2594, %v2643
        %v2646 = vmul.f32 %v2636, %v2644
        %v2647 = vmul.f32 %v2637, %v2644
        %v2648 = vmul.f32 %v2638, %v2644
        %v2649 = vmul.f32 %v2639, %v2644
        %v2651 = vlaneseq
        %v2652 = vshrl.u32 %v2651, 7
        %v2653 = vsub.s32 0, %v2652
        %v2654 = vrot.slane %v2595, %v2653
        %v2656 = vadd.f32 %v2646, %v2654
        %v2657 = vadd.f32 %v2647, %v2654
        %v2658 = vadd.f32 %v2648, %v2654
        %v2659 = vadd.f32 %v2649, %v2654
        %v2660 = vpack.c.bf16 %v2657, %v2656
        %v2661 = vpack.c.bf16 %v2659, %v2658
        %v2662 = vld [vmem:[%s615] sm:$0xff]
        %v2663 = vld [vmem:[%s615 + $0x8] sm:$0xff]
        %v2664 = vld [vmem:[%s615 + $0x10] sm:$0xff]
        %v2665 = vld [vmem:[%s615 + $0x18] sm:$0xff]
        %v2666 = vld [vmem:[%s615 + $0x20] sm:$0xff]
        %v2667 = vld [vmem:[%s615 + $0x28] sm:$0xff]
        %v2668 = vld [vmem:[%s615 + $0x30] sm:$0xff]
        %v2669 = vld [vmem:[%s615 + $0x38] sm:$0xff]
        %v2670 = vld [vmem:[%s615 + $0x40] sm:$0xff]
        %v2671 = vld [vmem:[%s615 + $0x48] sm:$0xff]
        %v2672 = vld [vmem:[%s615 + $0x50] sm:$0xff]
        %v2673 = vld [vmem:[%s615 + $0x58] sm:$0xff]
        %v2674 = vld [vmem:[%s615 + $0x60] sm:$0xff]
        %v2675 = vld [vmem:[%s615 + $0x68] sm:$0xff]
        %v2676 = vld [vmem:[%s615 + $0x70] sm:$0xff]
        %v2677 = vld [vmem:[%s615 + $0x78] sm:$0xff]
        %v2678 = vld [vmem:[%s719] sm:$0x3]
        %v2680 = vlaneseq
        %v2681 = vshrl.u32 %v2680, 7
        %v2682 = vsub.s32 0, %v2681
        %v2683 = vrot.slane %v2678, %v2682
        %v2684 = vlaneseq
        %v2685 = vshrl.u32 %v2684, 7
        %v2686 = vsub.s32 1, %v2685
        %v2687 = vrot.slane %v2678, %v2686
        %v2706 = vunpack.c.l.b16 %v2662
        %v2707 = vunpack.c.h.b16 %v2662
        %v2708 = vunpack.c.l.b16 %v2663
        %v2709 = vunpack.c.h.b16 %v2663
        %v2710 = vunpack.c.l.b16 %v2664
        %v2711 = vunpack.c.h.b16 %v2664
        %v2712 = vunpack.c.l.b16 %v2665
        %v2713 = vunpack.c.h.b16 %v2665
        %v2714 = vunpack.c.l.b16 %v2666
        %v2715 = vunpack.c.h.b16 %v2666
        %v2716 = vunpack.c.l.b16 %v2667
        %v2717 = vunpack.c.h.b16 %v2667
        %v2718 = vunpack.c.l.b16 %v2668
        %v2719 = vunpack.c.h.b16 %v2668
        %v2720 = vunpack.c.l.b16 %v2669
        %v2721 = vunpack.c.h.b16 %v2669
        %v2722 = vunpack.c.l.b16 %v2670
        %v2723 = vunpack.c.h.b16 %v2670
        %v2724 = vunpack.c.l.b16 %v2671
        %v2725 = vunpack.c.h.b16 %v2671
        %v2726 = vunpack.c.l.b16 %v2672
        %v2727 = vunpack.c.h.b16 %v2672
        %v2728 = vunpack.c.l.b16 %v2673
        %v2729 = vunpack.c.h.b16 %v2673
        %v2730 = vunpack.c.l.b16 %v2674
        %v2731 = vunpack.c.h.b16 %v2674
        %v2732 = vunpack.c.l.b16 %v2675
        %v2733 = vunpack.c.h.b16 %v2675
        %v2734 = vunpack.c.l.b16 %v2676
        %v2735 = vunpack.c.h.b16 %v2676
        %v2736 = vunpack.c.l.b16 %v2677
        %v2737 = vunpack.c.h.b16 %v2677
        %v2738 = vpack.c.b16 %v2708, %v2706
        %v2739 = vpack.c.b16 %v2709, %v2707
        %v2740 = vpack.c.b16 %v2712, %v2710
        %v2741 = vpack.c.b16 %v2713, %v2711
        %v2742 = vpack.c.b16 %v2716, %v2714
        %v2743 = vpack.c.b16 %v2717, %v2715
        %v2744 = vpack.c.b16 %v2720, %v2718
        %v2745 = vpack.c.b16 %v2721, %v2719
        %v2746 = vpack.c.b16 %v2724, %v2722
        %v2747 = vpack.c.b16 %v2725, %v2723
        %v2748 = vpack.c.b16 %v2728, %v2726
        %v2749 = vpack.c.b16 %v2729, %v2727
        %v2750 = vpack.c.b16 %v2732, %v2730
        %v2751 = vpack.c.b16 %v2733, %v2731
        %v2752 = vpack.c.b16 %v2736, %v2734
        %v2753 = vpack.c.b16 %v2737, %v2735
        %2770 = vmatprep.subr.bf16.mxu0 %v2739
        %2771 = vmatpush1.bf16.msra.mxu0 %v2738
        %2772 = vmatprep.subr.bf16.mxu0 %v2741
        %2773 = vmatpush1.bf16.msra.mxu0 %v2740
        %2774 = vmatprep.subr.bf16.mxu0 %v2743
        %2775 = vmatpush1.bf16.msra.mxu0 %v2742
        %2776 = vmatprep.subr.bf16.mxu0 %v2745
        %2777 = vmatpush1.bf16.msra.mxu0 %v2744
        %2778 = vmatprep.subr.bf16.mxu0 %v2747
        %2779 = vmatpush1.bf16.msra.mxu0 %v2746
        %2780 = vmatprep.subr.bf16.mxu0 %v2749
        %2781 = vmatpush1.bf16.msra.mxu0 %v2748
        %2782 = vmatprep.subr.bf16.mxu0 %v2751
        %2783 = vmatpush1.bf16.msra.mxu0 %v2750
        %2784 = vmatprep.subr.bf16.mxu0 %v2753
        %2785 = vmatpush1.bf16.msra.mxu0 %v2752
        %2786 = vmatprep.subr.bf16.mxu0 0
        %2787 = vmatpush1.bf16.msra.mxu0 0
        %2788 = vmatprep.subr.bf16.mxu0 0
        %2789 = vmatpush1.bf16.msra.mxu0 0
        %2790 = vmatprep.subr.bf16.mxu0 0
        %2791 = vmatpush1.bf16.msra.mxu0 0
        %2792 = vmatprep.subr.bf16.mxu0 0
        %2793 = vmatpush1.bf16.msra.mxu0 0
        %2794 = vmatprep.subr.bf16.mxu0 0
        %2795 = vmatpush1.bf16.msra.mxu0 0
        %2796 = vmatprep.subr.bf16.mxu0 0
        %2797 = vmatpush1.bf16.msra.mxu0 0
        %2798 = vmatprep.subr.bf16.mxu0 0
        %2799 = vmatpush1.bf16.msra.mxu0 0
        %2800 = vmatprep.subr.bf16.mxu0 0
        %2801 = vmatpush1.bf16.msra.mxu0 0
        %2802 = vmatprep.mubr.bf16.mxu0 0
        %2803 = vmatmul.mubr.bf16.gmra.mrb[0].mxu0 %v2660
        %v2804 = vpop.f32.mrb[0].mxu0
        %v2805 = vadd.f32 %v2683, %v2804
        %v2806 = vpop.f32.mrb[0].mxu0
        %v2807 = vadd.f32 %v2687, %v2806
        %v2808 = vpop.f32.mrb[0].mxu0
        %v2809 = vadd.f32 %v2683, %v2808
        %v2810 = vpop.f32.mrb[0].mxu0
        %v2811 = vadd.f32 %v2687, %v2810
        %2812 = vmatprep.mubr.bf16.mxu0 0
        %2813 = vmatmul.mubr.bf16.gmra.mrb[0].mxu0 %v2661
        %v2814 = vpop.f32.mrb[0].mxu0
        %v2815 = vadd.f32 %v2683, %v2814
        %v2816 = vpop.f32.mrb[0].mxu0
        %v2817 = vadd.f32 %v2687, %v2816
        %v2818 = vpop.f32.mrb[0].mxu0
        %v2819 = vadd.f32 %v2683, %v2818
        %v2820 = vpop.f32.mrb[0].mxu0
        %v2821 = vadd.f32 %v2687, %v2820
        %2822 = vdwg.mxu0
        %v2823 = vmax.f32 %v2805, 0.0
        %v2824 = vmax.f32 %v2807, 0.0
        %v2825 = vmax.f32 %v2809, 0.0
        %v2826 = vmax.f32 %v2811, 0.0
        %v2827 = vmax.f32 %v2815, 0.0
        %v2828 = vmax.f32 %v2817, 0.0
        %v2829 = vmax.f32 %v2819, 0.0
        %v2830 = vmax.f32 %v2821, 0.0
        %v2831 = vpack.c.bf16 %v2825, %v2823
        %v2832 = vpack.c.bf16 %v2826, %v2824
        %v2833 = vpack.c.bf16 %v2829, %v2827
        %v2834 = vpack.c.bf16 %v2830, %v2828
        %v2835 = vld [vmem:[%s624] sm:$0xf]
        %v2836 = vld [vmem:[%s624 + $0x4] sm:$0xf]
        %v2837 = vld [vmem:[%s624 + $0x8] sm:$0xf]
        %v2838 = vld [vmem:[%s624 + $0xc] sm:$0xf]
        %v2839 = vld [vmem:[%s624 + $0x10] sm:$0xf]
        %v2840 = vld [vmem:[%s624 + $0x14] sm:$0xf]
        %v2841 = vld [vmem:[%s624 + $0x18] sm:$0xf]
        %v2842 = vld [vmem:[%s624 + $0x1c] sm:$0xf]
        %v2843 = vld [vmem:[%s624 + $0x20] sm:$0xf]
        %v2844 = vld [vmem:[%s624 + $0x24] sm:$0xf]
        %v2845 = vld [vmem:[%s624 + $0x28] sm:$0xf]
        %v2846 = vld [vmem:[%s624 + $0x2c] sm:$0xf]
        %v2847 = vld [vmem:[%s624 + $0x30] sm:$0xf]
        %v2848 = vld [vmem:[%s624 + $0x34] sm:$0xf]
        %v2849 = vld [vmem:[%s624 + $0x38] sm:$0xf]
        %v2850 = vld [vmem:[%s624 + $0x3c] sm:$0xf]
        %v2851 = vld [vmem:[%s624 + $0x40] sm:$0xf]
        %v2852 = vld [vmem:[%s624 + $0x44] sm:$0xf]
        %v2853 = vld [vmem:[%s624 + $0x48] sm:$0xf]
        %v2854 = vld [vmem:[%s624 + $0x4c] sm:$0xf]
        %v2855 = vld [vmem:[%s624 + $0x50] sm:$0xf]
        %v2856 = vld [vmem:[%s624 + $0x54] sm:$0xf]
        %v2857 = vld [vmem:[%s624 + $0x58] sm:$0xf]
        %v2858 = vld [vmem:[%s624 + $0x5c] sm:$0xf]
        %v2859 = vld [vmem:[%s624 + $0x60] sm:$0xf]
        %v2860 = vld [vmem:[%s624 + $0x64] sm:$0xf]
        %v2861 = vld [vmem:[%s624 + $0x68] sm:$0xf]
        %v2862 = vld [vmem:[%s624 + $0x6c] sm:$0xf]
        %v2863 = vld [vmem:[%s624 + $0x70] sm:$0xf]
        %v2864 = vld [vmem:[%s624 + $0x74] sm:$0xf]
        %v2865 = vld [vmem:[%s624 + $0x78] sm:$0xf]
        %v2866 = vld [vmem:[%s624 + $0x7c] sm:$0xf]
        %v2867 = vld [vmem:[%s722] sm:$0x1]
        %v2869 = vlaneseq
        %v2870 = vshrl.u32 %v2869, 7
        %v2871 = vsub.s32 0, %v2870
        %v2872 = vrot.slane %v2867, %v2871
        %v2906 = vunpack.c.l.b16 %v2835
        %v2907 = vunpack.c.l.b16 %v2836
        %v2908 = vunpack.c.l.b16 %v2837
        %v2909 = vunpack.c.l.b16 %v2838
        %v2910 = vunpack.c.l.b16 %v2839
        %v2911 = vunpack.c.l.b16 %v2840
        %v2912 = vunpack.c.l.b16 %v2841
        %v2913 = vunpack.c.l.b16 %v2842
        %v2914 = vunpack.c.l.b16 %v2843
        %v2915 = vunpack.c.l.b16 %v2844
        %v2916 = vunpack.c.l.b16 %v2845
        %v2917 = vunpack.c.l.b16 %v2846
        %v2918 = vunpack.c.l.b16 %v2847
        %v2919 = vunpack.c.l.b16 %v2848
        %v2920 = vunpack.c.l.b16 %v2849
        %v2921 = vunpack.c.l.b16 %v2850
        %v2922 = vunpack.c.l.b16 %v2851
        %v2923 = vunpack.c.l.b16 %v2852
        %v2924 = vunpack.c.l.b16 %v2853
        %v2925 = vunpack.c.l.b16 %v2854
        %v2926 = vunpack.c.l.b16 %v2855
        %v2927 = vunpack.c.l.b16 %v2856
        %v2928 = vunpack.c.l.b16 %v2857
        %v2929 = vunpack.c.l.b16 %v2858
        %v2930 = vunpack.c.l.b16 %v2859
        %v2931 = vunpack.c.l.b16 %v2860
        %v2932 = vunpack.c.l.b16 %v2861
        %v2933 = vunpack.c.l.b16 %v2862
        %v2934 = vunpack.c.l.b16 %v2863
        %v2935 = vunpack.c.l.b16 %v2864
        %v2936 = vunpack.c.l.b16 %v2865
        %v2937 = vunpack.c.l.b16 %v2866
        %v2938 = vpack.c.b16 %v2907, %v2906
        %v2939 = vpack.c.b16 %v2909, %v2908
        %v2940 = vpack.c.b16 %v2911, %v2910
        %v2941 = vpack.c.b16 %v2913, %v2912
        %v2942 = vpack.c.b16 %v2915, %v2914
        %v2943 = vpack.c.b16 %v2917, %v2916
        %v2944 = vpack.c.b16 %v2919, %v2918
        %v2945 = vpack.c.b16 %v2921, %v2920
        %v2946 = vpack.c.b16 %v2923, %v2922
        %v2947 = vpack.c.b16 %v2925, %v2924
        %v2948 = vpack.c.b16 %v2927, %v2926
        %v2949 = vpack.c.b16 %v2929, %v2928
        %v2950 = vpack.c.b16 %v2931, %v2930
        %v2951 = vpack.c.b16 %v2933, %v2932
        %v2952 = vpack.c.b16 %v2935, %v2934
        %v2953 = vpack.c.b16 %v2937, %v2936
        %2970 = vmatprep.subr.bf16.mxu0 0
        %2971 = vmatpush1.bf16.msra.mxu0 %v2938
        %2972 = vmatprep.subr.bf16.mxu0 0
        %2973 = vmatpush1.bf16.msra.mxu0 %v2939
        %2974 = vmatprep.subr.bf16.mxu0 0
        %2975 = vmatpush1.bf16.msra.mxu0 %v2940
        %2976 = vmatprep.subr.bf16.mxu0 0
        %2977 = vmatpush1.bf16.msra.mxu0 %v2941
        %2978 = vmatprep.subr.bf16.mxu0 0
        %2979 = vmatpush1.bf16.msra.mxu0 %v2942
        %2980 = vmatprep.subr.bf16.mxu0 0
        %2981 = vmatpush1.bf16.msra.mxu0 %v2943
        %2982 = vmatprep.subr.bf16.mxu0 0
        %2983 = vmatpush1.bf16.msra.mxu0 %v2944
        %2984 = vmatprep.subr.bf16.mxu0 0
        %2985 = vmatpush1.bf16.msra.mxu0 %v2945
        %2986 = vmatprep.subr.bf16.mxu0 0
        %2987 = vmatpush1.bf16.msra.mxu0 %v2946
        %2988 = vmatprep.subr.bf16.mxu0 0
        %2989 = vmatpush1.bf16.msra.mxu0 %v2947
        %2990 = vmatprep.subr.bf16.mxu0 0
        %2991 = vmatpush1.bf16.msra.mxu0 %v2948
        %2992 = vmatprep.subr.bf16.mxu0 0
        %2993 = vmatpush1.bf16.msra.mxu0 %v2949
        %2994 = vmatprep.subr.bf16.mxu0 0
        %2995 = vmatpush1.bf16.msra.mxu0 %v2950
        %2996 = vmatprep.subr.bf16.mxu0 0
        %2997 = vmatpush1.bf16.msra.mxu0 %v2951
        %2998 = vmatprep.subr.bf16.mxu0 0
        %2999 = vmatpush1.bf16.msra.mxu0 %v2952
        %3000 = vmatprep.subr.bf16.mxu0 0
        %3001 = vmatpush1.bf16.msra.mxu0 %v2953
        %3002 = vmatprep.mubr.bf16.mxu0 %v2832
        %3003 = vmatmul.mubr.bf16.gmra.mrb[0].mxu0 %v2831
        %v3004 = vpop.f32.mrb[0].mxu0
        %v3005 = vadd.f32 %v2872, %v3004
        %v3006 = vpop.f32.mrb[0].mxu0
        %v3007 = vpop.f32.mrb[0].mxu0
        %v3008 = vadd.f32 %v2872, %v3007
        %v3009 = vpop.f32.mrb[0].mxu0
        %3010 = vmatprep.mubr.bf16.mxu0 %v2834
        %3011 = vmatmul.mubr.bf16.gmra.mrb[0].mxu0 %v2833
        %v3012 = vpop.f32.mrb[0].mxu0
        %v3013 = vadd.f32 %v2872, %v3012
        %v3014 = vpop.f32.mrb[0].mxu0
        %v3015 = vpop.f32.mrb[0].mxu0
        %v3016 = vadd.f32 %v2872, %v3015
        %v3017 = vpop.f32.mrb[0].mxu0
        %3018 = vdwg.mxu0
        %v3019 = vadd.f32 %v2590, %v3005
        %v3020 = vadd.f32 %v2591, %v3008
        %v3021 = vadd.f32 %v2592, %v3013
        %v3022 = vadd.f32 %v2593, %v3016
        %3023 = vst [vmem:[#allocation2] sm:$0xff] %v3019
        %3024 = vst [vmem:[#allocation2 + $0x8] sm:$0xff] %v3020
        %3025 = vst [vmem:[#allocation2 + $0x10] sm:$0xff] %v3021
        %3026 = vst [vmem:[#allocation2 + $0x18] sm:$0xff] %v3022
        %p3027 = scmp.eq.s32.totalorder %s32, 1
        // Predicated region
        $region101: #{tpu_custom_call.1} parent=71 // pred_check
          %p3028 = pneg %p3027
        $region102: #{tpu_custom_call.1} parent=71 // pred_check_branch
          %3030 = sbr.rel (%p3028) target = $region104
        $region103: #{tpu_custom_call.1} parent=71 // pred_region
          %3031 = vst [vmem:[#allocation12] sm:$0xff] %v3019
          %3032 = vst [vmem:[#allocation12 + $0x8] sm:$0xff] %v3020
          %3033 = vst [vmem:[#allocation12 + $0x10] sm:$0xff] %v3021
          %3034 = vst [vmem:[#allocation12 + $0x18] sm:$0xff] %v3022
        $region104: #{tpu_custom_call.1} parent=71 // pred_fallthru
          _
        // Predicated region
        $region105: #{tpu_custom_call.1} parent=71 // pred_check
          %p3035 = pneg %p395
        $region106: #{tpu_custom_call.1} parent=71 // pred_check_branch
          %3037 = sbr.rel (%p3035) target = $region108
        $region107: #{tpu_custom_call.1} parent=71 // pred_region
          %s3038 = smul.u32 2, %s31
          %s3040 = ssub.s32 512, 512
          %3041 = vsyncadd [#allocation5], %s3040
          %s3042 = smul.addr %s3038, 2
          %s3043 = smul.addr %s3042, 128
          %s3044 = scalar_lea.hbm %s13, %s3043
          %s3045 = sshll.u32 [#allocation12], 4
          %s3046 = int_to_ptr.vmem [resolvable:$true] %s3045
          %3051 = dma.vmem_to_hbm [thread:$0]  %s3046, 512, %s3044, [#allocation5], 128, 128, 8
        $region108: #{tpu_custom_call.1} parent=71 // pred_fallthru
          _
        // Predicated region
        $region109: #{tpu_custom_call.1} parent=71 // pred_check
          %p3052 = pneg %p395
        $region110: #{tpu_custom_call.1} parent=71 // pred_check_branch
          %3054 = sbr.rel (%p3052) target = $region112
        $region111: #{tpu_custom_call.1} parent=71 // pred_region
          %3055 = dma.done [#allocation5], 512
        $region112: #{tpu_custom_call.1} parent=71 // pred_fallthru
          _
      $region72: #{tpu_custom_call.1} parent=5 // pred_fallthru
        _
      %p3056 = scmp.le.s32.totalorder 2, %s22
      // Predicated region
      $region113: #{tpu_custom_call.1} parent=5 // pred_check
        %p3057 = pneg %p3056
      $region114: #{tpu_custom_call.1} parent=5 // pred_check_branch
        %3059 = sbr.rel (%p3057) target = $region116
      $region115: #{tpu_custom_call.1} parent=5 // pred_region
        %s3060 = ssub.s32 %s22, 2
      $region116: #{tpu_custom_call.1} parent=5 // pred_fallthru
        _
    $region6: #{tpu_custom_call.1} parent=1 // loop_footer
      %s26 = sadd.s32 1, %s22
    $region7: #{tpu_custom_call.1} parent=1 // loop_footer_branch
      %21 = sbr.rel target = $region3
    $region8: #{tpu_custom_call.1} parent=1 // loop_exit
      _
    %3061 = vsyncpa [#allocation4], 1
    %s3062 = scalar_lea.sflag [#allocation4], 1
    %3063 = vsyncpa %s3062, 1
    %3064 = vsyncpa [#allocation7], 1
    %3065 = vsyncpa [#allocation5], 1
    %s3066 = scalar_lea.sflag [#allocation5], 1
    %3067 = vsyncpa %s3066, 1

</llo_original>
